<compile_context>
chip_gen: v7x
topology: tpu7x:2x2x1
jax: 0.10.0
libtpu: 0.0.40
codegen_flags: <defaults>
</compile_context>

<pallas_src>
import math
from functools import partial

import jax
import jax.numpy as jnp
from jax import lax
from jax.experimental import pallas as pl
from jax.experimental.pallas import tpu as pltpu


def _round_up(x, m):
    return ((x + m - 1) // m) * m


# ---------------------------------------------------------------------------
# Pallas kernels
# ---------------------------------------------------------------------------

def make_modconv_kernel(offsets, pt, win, fuse_rgb, neg_slope=0.2):
    """Modulated 3x3x3 conv as one K=27*Cin matmul + fused epilogue.

    Refs (per (batch, P-tile) grid step):
      x_ref   : (Cin_p, Pin)       padded-flat input, resident across P tiles
      w_ref   : (Cout_p, 27*Cin_p) tap-major conv weights (grid-invariant)
      s_ref   : (Cin_p, 1)         style + 1 (input-side modulation)
      d_ref   : (Cout_p, 1)        precomputed demodulation scale
      nz_ref  : (1, pt)            per-voxel noise value for this tile
      wn_ref  : (Cout_p, 1)        noise Linear(1, Cout) weight
      bn_ref  : (Cout_p, 1)        noise Linear(1, Cout) bias
      [g_ref  : (Cout_p, 1)        grayscale gain  = cg_w * (style_g + 1)]
      [pv_ref : (1, pt)            prev_rgb for this tile]
      o_ref   : (Cout_p, pt)       activated conv output (lane-dense)
      [rgb_ref: (1, pt)            fused grayscale output (lane-dense)]
    """
    def body(x_ref, w_ref, s_ref, d_ref, nz_ref, wn_ref, bn_ref, *rest):
        if fuse_rgb:
            g_ref, pv_ref, o_ref, rgb_ref = rest
        else:
            (o_ref,) = rest

        p = pl.program_id(1)
        base = pl.multiple_of(p * pt, pt)
        # Input-side style modulation, once per overlapping window.
        xwin = x_ref[:, pl.ds(base, win)] * s_ref[...]                 # (Cin_p, win)
        # Fold the 27 taps into a single contraction axis (K = 27*Cin_p).
        xcat = jnp.concatenate([xwin[:, o:o + pt] for o in offsets], axis=0)
        acc = jnp.dot(w_ref[...], xcat,
                      preferred_element_type=jnp.float32)              # (Cout_p, pt)
        # Demodulation (precomputed) + fused noise-linear epilogue + LeakyReLU(0.2).
        acc = acc * d_ref[...] + nz_ref[...] * wn_ref[...] + bn_ref[...]
        acc = jnp.where(acc > 0, acc, neg_slope * acc)
        o_ref[...] = acc

        if fuse_rgb:
            # Fused GrayscaleBlock 1x1x1 modulated conv (demod=False) + prev_rgb.
            rgb_ref[...] = (jnp.sum(acc * g_ref[...], axis=0, keepdims=True)
                            + pv_ref[...])
    return body


def style_linear_kernel(z_ref, w_ref, b_ref, o_ref):
    # z: (B, L), w: (L, Fout), b: (1, Fout) -> o: (B, Fout)
    o_ref[...] = jnp.dot(z_ref[...], w_ref[...],
                         preferred_element_type=jnp.float32) + b_ref[...]


def make_blur_kernel(D, H, W):
    """Separable [1,2,1]^3 blur (normalized) on a (D+2, (H+2)*(W+2)) padded tile."""
    Wp = W + 2
    R = (H + 2) * Wp
    Q = H * Wp

    def body(x_ref, o_ref):
        x = x_ref[...]                                                  # (D+2, L)
        xw = x[:, 0:R] + 2.0 * x[:, 1:R + 1] + x[:, 2:R + 2]            # W axis
        xh = xw[:, 0:Q] + 2.0 * xw[:, Wp:Wp + Q] + xw[:, 2 * Wp:2 * Wp + Q]  # H axis
        xd = xh[0:D] + 2.0 * xh[1:D + 1] + xh[2:D + 2]                  # D axis
        o_ref[...] = xd * (1.0 / 64.0)
    return body


# ---------------------------------------------------------------------------
# Pallas wrappers
# ---------------------------------------------------------------------------

def fused_styles(istyle, params):
    """All three to_style linears as a single MXU matmul: istyle @ Wcat.T + bcat."""
    wcat = jnp.concatenate([params["s1_w"], params["s2_w"], params["sg_w"]], axis=0)
    bcat = jnp.concatenate([params["s1_b"], params["s2_b"], params["sg_b"]], axis=0)
    B, L = istyle.shape
    F = wcat.shape[0]
    return pl.pallas_call(
        style_linear_kernel,
        out_shape=jax.ShapeDtypeStruct((B, F), jnp.float32),
        grid_spec=pltpu.PrefetchScalarGridSpec(
            num_scalar_prefetch=0,
            grid=(1,),
            in_specs=[pl.BlockSpec((B, L), lambda i: (0, 0)),
                      pl.BlockSpec((L, F), lambda i: (0, 0)),
                      pl.BlockSpec((1, F), lambda i: (0, 0))],
            out_specs=pl.BlockSpec((B, F), lambda i: (0, 0))),
        compiler_params=pltpu.CompilerParams(dimension_semantics=("arbitrary",)),
    )(istyle, jnp.transpose(wcat), bcat.reshape(1, F))


def modconv3x3(x, style_p1, weight, noise, wn, bn, *, rgb_gain=None, prev_rgb=None,
               eps=1e-8, pt=512):
    """Conv3DMod(3x3x3, demod) + to_noise linear + LeakyReLU, optionally fused with
    the grayscale 1x1x1 modulated conv (+ prev_rgb).

    x        : (B, Cin, D, H, W)  NCDHW
    style_p1 : (B, Cin)           to_style(istyle) + 1
    weight   : (Cout, Cin, 3,3,3)
    noise    : (B, D, H, W)
    wn, bn   : (Cout,), (Cout,)   Linear(1, Cout) weight / bias
    rgb_gain : (B, Cout) or None  cg_weight * (to_style_rgb(istyle) + 1)
    prev_rgb : (B, D, H, W) or None
    """
    f32 = jnp.float32
    B, Cin, D, H, W = x.shape
    Cout = weight.shape[0]

    Dp, Hp, Wp = D + 2, H + 2, W + 2
    Pp = Dp * Hp * Wp
    maxoff = 2 * (Hp * Wp + Wp + 1)
    pt = min(pt, _round_up(Pp, 128))
    npt = -(-Pp // pt)
    pout = npt * pt
    pin = _round_up(pout + maxoff, 128)
    win = pt + maxoff
    offsets = [kd * Hp * Wp + kh * Wp + kw
               for kd in range(3) for kh in range(3) for kw in range(3)]

    cin_p = _round_up(Cin, 8)
    cout_p = _round_up(Cout, 8)

    # ---- glue (plain JAX, fused by XLA): zero-pad + flatten to padded-voxel rows ----
    xp = jnp.pad(x.astype(f32), ((0, 0), (0, cin_p - Cin), (1, 1), (1, 1), (1, 1)))
    xf = jnp.pad(xp.reshape(B, cin_p, Pp), ((0, 0), (0, 0), (0, pin - Pp)))

    def flat_scalar(v):                        # (B, D, H, W) -> (B, 1, pout)
        vp = jnp.pad(v.astype(f32), ((0, 0), (0, 2), (0, 2), (0, 2)))
        return jnp.pad(vp.reshape(B, Pp), ((0, 0), (0, pout - Pp)))[:, None, :]

    nzf = flat_scalar(noise)
    sref = jnp.zeros((B, cin_p, 1), f32).at[:, :Cin, 0].set(style_p1)

    wpad = jnp.zeros((cout_p, cin_p, 3, 3, 3), f32).at[:Cout, :Cin].set(weight)
    wmat = wpad.transpose(0, 2, 3, 4, 1).reshape(cout_p, 27 * cin_p)

    # Demodulation scale precomputed per (batch, out-channel).
    w2 = jnp.sum(weight.astype(f32) ** 2, axis=(2, 3, 4))               # (Cout, Cin)
    dem = lax.rsqrt(jnp.einsum("oc,bc->bo", w2, style_p1 ** 2) + eps)   # (B, Cout)
    dref = jnp.ones((B, cout_p, 1), f32).at[:, :Cout, 0].set(dem)

    wnref = jnp.zeros((cout_p, 1), f32).at[:Cout, 0].set(jnp.asarray(wn).reshape(Cout))
    bnref = jnp.zeros((cout_p, 1), f32).at[:Cout, 0].set(jnp.asarray(bn).reshape(Cout))

    fuse_rgb = rgb_gain is not None
    kernel = make_modconv_kernel(offsets, pt, win, fuse_rgb)
    sq = pl.Squeezed()

    in_specs = [
        pl.BlockSpec((sq, cin_p, pin), lambda b, p: (b, 0, 0)),     # x: per-batch resident
        pl.BlockSpec((cout_p, 27 * cin_p), lambda b, p: (0, 0)),    # weights: grid-invariant
        pl.BlockSpec((sq, cin_p, 1), lambda b, p: (b, 0, 0)),       # style + 1
        pl.BlockSpec((sq, cout_p, 1), lambda b, p: (b, 0, 0)),      # demod scale
        pl.BlockSpec((sq, 1, pt), lambda b, p: (b, 0, p)),          # noise (lane-dense)
        pl.BlockSpec((cout_p, 1), lambda b, p: (0, 0)),             # noise weight
        pl.BlockSpec((cout_p, 1), lambda b, p: (0, 0)),             # noise bias
    ]
    args = [xf, wmat, sref, dref, nzf, wnref, bnref]
    out_shape = jax.ShapeDtypeStruct((B, cout_p, pout), f32)
    out_specs = pl.BlockSpec((sq, cout_p, pt), lambda b, p: (b, 0, p))

    if fuse_rgb:
        gref = jnp.zeros((B, cout_p, 1), f32).at[:, :Cout, 0].set(rgb_gain)
        prevf = (jnp.zeros((B, 1, pout), f32) if prev_rgb is None
                 else flat_scalar(prev_rgb))
        in_specs += [pl.BlockSpec((sq, cout_p, 1), lambda b, p: (b, 0, 0)),
                     pl.BlockSpec((sq, 1, pt), lambda b, p: (b, 0, p))]
        args += [gref, prevf]
        out_shape = (out_shape, jax.ShapeDtypeStruct((B, 1, pout), f32))
        out_specs = (out_specs, pl.BlockSpec((sq, 1, pt), lambda b, p: (b, 0, p)))

    outs = pl.pallas_call(
        kernel,
        out_shape=out_shape,
        grid_spec=pltpu.PrefetchScalarGridSpec(
            num_scalar_prefetch=0,
            grid=(B, npt),
            in_specs=in_specs,
            out_specs=out_specs),
        compiler_params=pltpu.CompilerParams(
            dimension_semantics=("parallel", "parallel")),
    )(*args)

    def unflat(o, c):                          # (B, c_p, pout) -> (B, c, D, H, W)
        return o[:, :c, :Pp].reshape(B, -1, Dp, Hp, Wp)[:, :, :D, :H, :W]

    if fuse_rgb:
        return unflat(outs[0], Cout), unflat(outs[1], 1)
    return unflat(outs, Cout)


def upsample_trilinear2x(x):
    # TODO(synk): trilinear 2x upsample stays in plain JAX (jax.image.resize matches
    # PyTorch Upsample(align_corners=False) half-pixel sampling); not ported to Pallas.
    B, C, D, H, W = x.shape
    return jax.image.resize(x, (B, C, 2 * D, 2 * H, 2 * W), method="trilinear")


def blur3d(x):
    """kornia filter3d with [1,2,1]^3 kernel, normalized=True, replicate border,
    as a separable VPU shift-add on a lane-dense (D, H*W) layout."""
    B, C, D, H, W = x.shape
    assert C == 1
    Dp, Hp, Wp = D + 2, H + 2, W + 2
    Q = H * Wp
    L = _round_up(Hp * Wp + 2, 8)

    xp = jnp.pad(x[:, 0].astype(jnp.float32),
                 ((0, 0), (1, 1), (1, 1), (1, 1)), mode="edge")   # replicate border
    xf = jnp.pad(xp.reshape(B, Dp, Hp * Wp), ((0, 0), (0, 0), (0, L - Hp * Wp)))

    sq = pl.Squeezed()
    out = pl.pallas_call(
        make_blur_kernel(D, H, W),
        out_shape=jax.ShapeDtypeStruct((B, D, Q), jnp.float32),
        grid_spec=pltpu.PrefetchScalarGridSpec(
            num_scalar_prefetch=0,
            grid=(B,),
            in_specs=[pl.BlockSpec((sq, Dp, L), lambda b: (b, 0, 0))],
            out_specs=pl.BlockSpec((sq, D, Q), lambda b: (b, 0, 0))),
        compiler_params=pltpu.CompilerParams(dimension_semantics=("parallel",)),
    )(xf)
    return out.reshape(B, D, H, Wp)[:, :, :, :W][:, None]


# ---------------------------------------------------------------------------
# GeneratorBlock forward
# ---------------------------------------------------------------------------

def generator_block_forward(params, x, prev_rgb, istyle, inoise):
    """x: (B, Cin, D0, H0, W0) NCDHW; istyle: (B, latent); inoise: (B, Dn, Hn, Wn, 1)."""
    x = upsample_trilinear2x(x)                                     # self.upsample
    B, Cin, D, H, W = x.shape
    filters = params["c1_w"].shape[0]

    # All three to_style linears in one fused Pallas matmul.
    styles = fused_styles(istyle, params)                           # (B, Cin + 2*filters)
    s1 = styles[:, :Cin] + 1.0
    s2 = styles[:, Cin:Cin + filters] + 1.0
    sg = styles[:, Cin + filters:] + 1.0

    noise = inoise[:, :D, :H, :W, 0]                                # (B, D, H, W)

    # conv1: modulated 3x3x3 (demod) + to_noise1 + LeakyReLU
    h1 = modconv3x3(x, s1, params["c1_w"], noise,
                    params["n1_w"].reshape(-1), params["n1_b"])

    # conv2 (same) fused with the GrayscaleBlock 1x1x1 modulated conv (+ prev_rgb).
    rgb_gain = params["cg_w"].reshape(1, filters) * sg              # (B, filters)
    prev = None if prev_rgb is None else prev_rgb[:, 0]
    h2, rgb = modconv3x3(h1, s2, params["c2_w"], noise,
                         params["n2_w"].reshape(-1), params["n2_b"],
                         rgb_gain=rgb_gain, prev_rgb=prev)

    # GrayscaleBlock tail: trilinear x2 upsample + [1,2,1]^3 blur.
    rgb = upsample_trilinear2x(rgb)
    rgb = blur3d(rgb)
    return h2, rgb


# ---------------------------------------------------------------------------
# Deterministic parameter init (matches the module's __init__ shapes)
# ---------------------------------------------------------------------------

def init_params(key, latent_dim, in_ch, filters):
    keys = jax.random.split(key, 8)

    def linear_init(k, fin, fout):
        kw, kb = jax.random.split(k)
        bound = 1.0 / math.sqrt(fin)
        return (jax.random.uniform(kw, (fout, fin), jnp.float32, -bound, bound),
                jax.random.uniform(kb, (fout,), jnp.float32, -bound, bound))

    def conv_init(k, cout, cin, ksz):
        fan_in = cin * ksz ** 3
        std = math.sqrt(2.0 / fan_in)      # kaiming_normal_, fan_in, leaky_relu a=0
        return jax.random.normal(k, (cout, cin, ksz, ksz, ksz), jnp.float32) * std

    s1_w, s1_b = linear_init(keys[0], latent_dim, in_ch)
    n1_w, n1_b = linear_init(keys[1], 1, filters)
    c1_w = conv_init(keys[2], filters, in_ch, 3)
    s2_w, s2_b = linear_init(keys[3], latent_dim, filters)
    n2_w, n2_b = linear_init(keys[4], 1, filters)
    c2_w = conv_init(keys[5], filters, filters, 3)
    sg_w, sg_b = linear_init(keys[6], latent_dim, filters)
    cg_w = conv_init(keys[7], 1, filters, 1)
    return dict(s1_w=s1_w, s1_b=s1_b, n1_w=n1_w, n1_b=n1_b, c1_w=c1_w,
                s2_w=s2_w, s2_b=s2_b, n2_w=n2_w, n2_b=n2_b, c2_w=c2_w,
                sg_w=sg_w, sg_b=sg_b, cg_w=cg_w)


if __name__ == "__main__":
    key = jax.random.PRNGKey(0)
    latent_dim, in_ch, filters = 32, 4, 8
    B, D0 = 2, 4

    pkey, xkey, skey, nkey, rkey = jax.random.split(key, 5)
    params = init_params(pkey, latent_dim, in_ch, filters)

    x = jax.random.normal(xkey, (B, in_ch, D0, D0, D0), jnp.float32)
    istyle = jax.random.normal(skey, (B, latent_dim), jnp.float32)
    inoise = jax.random.uniform(nkey, (B, 16, 16, 16, 1), jnp.float32)
    prev_rgb = jax.random.normal(rkey, (B, 1, 2 * D0, 2 * D0, 2 * D0), jnp.float32)

    fwd = jax.jit(partial(generator_block_forward, params))
    x_out, rgb = fwd(x, prev_rgb, istyle, inoise)
    jax.block_until_ready((x_out, rgb))

    assert x_out.shape == (B, filters, 2 * D0, 2 * D0, 2 * D0), x_out.shape
    assert rgb.shape == (B, 1, 4 * D0, 4 * D0, 4 * D0), rgb.shape
    assert bool(jnp.all(jnp.isfinite(x_out))) and bool(jnp.all(jnp.isfinite(rgb)))
    print("KERNEL_OK")
</pallas_src>

<mosaic_0001>
module attributes {stable_mosaic.version = 11 : i64} {
  func.func @style_linear_kernel(%arg0: i32, %arg1: memref<2x32xf32, #tpu.memory_space<vmem>>, %arg2: memref<32x20xf32, #tpu.memory_space<vmem>>, %arg3: memref<1x20xf32, #tpu.memory_space<vmem>>, %arg4: memref<2x20xf32, #tpu.memory_space<vmem>>) attributes {dimension_semantics = [#tpu.dimension_semantics<arbitrary>], iteration_bounds = array<i64: 1>, scalar_prefetch = 0 : i64, scratch_operands = 0 : i64, tpu.core_type = #tpu.core_type<tc>, window_params = [{pipeline_mode = #tpu.pipeline_mode<synchronous>, transform_indices = @transform_0, window_bounds = array<i64: 2, 32>}, {pipeline_mode = #tpu.pipeline_mode<synchronous>, transform_indices = @transform_1, window_bounds = array<i64: 32, 20>}, {pipeline_mode = #tpu.pipeline_mode<synchronous>, transform_indices = @transform_2, window_bounds = array<i64: 1, 20>}, {pipeline_mode = #tpu.pipeline_mode<synchronous>, transform_indices = @transform_3, window_bounds = array<i64: 2, 20>}]} {
    %c0 = arith.constant 0 : index
    %c0_0 = arith.constant 0 : index
    %0 = vector.load %arg1[%c0, %c0_0] : memref<2x32xf32, #tpu.memory_space<vmem>>, vector<2x32xf32>
    %c0_1 = arith.constant 0 : index
    %c0_2 = arith.constant 0 : index
    %1 = vector.load %arg2[%c0_1, %c0_2] : memref<32x20xf32, #tpu.memory_space<vmem>>, vector<32x20xf32>
    %cst = arith.constant dense<0.000000e+00> : vector<2x20xf32>
    %2 = tpu.matmul %0, %1, %cst {dimension_numbers = #tpu.dot_dimension_numbers<[1], [0], [0], [1], [0, 0, 1, 1], [], []>} : vector<2x32xf32>, vector<32x20xf32>, vector<2x20xf32> -> vector<2x20xf32>
    %c0_3 = arith.constant 0 : index
    %c0_4 = arith.constant 0 : index
    %3 = vector.load %arg3[%c0_3, %c0_4] : memref<1x20xf32, #tpu.memory_space<vmem>>, vector<1x20xf32>
    %4 = vector.broadcast %3 : vector<1x20xf32> to vector<2x20xf32>
    %5 = arith.addf %2, %4 : vector<2x20xf32>
    %c0_5 = arith.constant 0 : index
    %c0_6 = arith.constant 0 : index
    %6 = vector.load %arg4[%c0_5, %c0_6] : memref<2x20xf32, #tpu.memory_space<vmem>>, vector<2x20xf32>
    tpu.vector_store %arg4[%c0_5, %c0_6], %5 {strides = array<i32>} : memref<2x20xf32, #tpu.memory_space<vmem>>, vector<2x20xf32>,
    return
  }
  func.func @transform_0(%arg0: i32) -> (i32, i32) {
    %c0_i32 = arith.constant 0 : i32
    %c0_i32_0 = arith.constant 0 : i32
    %c0_i32_1 = arith.constant 0 : i32
    return %c0_i32, %c0_i32_0 : i32, i32
  }
  func.func @transform_1(%arg0: i32) -> (i32, i32) {
    %c0_i32 = arith.constant 0 : i32
    %c0_i32_0 = arith.constant 0 : i32
    %c0_i32_1 = arith.constant 0 : i32
    return %c0_i32, %c0_i32_0 : i32, i32
  }
  func.func @transform_2(%arg0: i32) -> (i32, i32) {
    %c0_i32 = arith.constant 0 : i32
    %c0_i32_0 = arith.constant 0 : i32
    %c0_i32_1 = arith.constant 0 : i32
    return %c0_i32, %c0_i32_0 : i32, i32
  }
  func.func @transform_3(%arg0: i32) -> (i32, i32) {
    %c0_i32 = arith.constant 0 : i32
    %c0_i32_0 = arith.constant 0 : i32
    %c0_i32_1 = arith.constant 0 : i32
    return %c0_i32, %c0_i32_0 : i32, i32
  }
}

module attributes {stable_mosaic.version = 11 : i64} {
  func.func @body(%arg0: i32, %arg1: i32, %arg2: memref<1x8x1280xf32, #tpu.memory_space<vmem>>, %arg3: memref<8x216xf32, #tpu.memory_space<vmem>>, %arg4: memref<1x8x1xf32, #tpu.memory_space<vmem>>, %arg5: memref<1x8x1xf32, #tpu.memory_space<vmem>>, %arg6: memref<1x1x512xf32, #tpu.memory_space<vmem>>, %arg7: memref<8x1xf32, #tpu.memory_space<vmem>>, %arg8: memref<8x1xf32, #tpu.memory_space<vmem>>, %arg9: memref<1x8x512xf32, #tpu.memory_space<vmem>>) attributes {dimension_semantics = [#tpu.dimension_semantics<parallel>, #tpu.dimension_semantics<parallel>], iteration_bounds = array<i64: 2, 2>, scalar_prefetch = 0 : i64, scratch_operands = 0 : i64, tpu.core_type = #tpu.core_type<tc>, window_params = [{transform_indices = @transform_0, window_bounds = array<i64: 1, 8, 1280>}, {pipeline_mode = #tpu.pipeline_mode<synchronous>, transform_indices = @transform_1, window_bounds = array<i64: 8, 216>}, {transform_indices = @transform_2, window_bounds = array<i64: 1, 8, 1>}, {transform_indices = @transform_3, window_bounds = array<i64: 1, 8, 1>}, {transform_indices = @transform_4, window_bounds = array<i64: 1, 1, 512>}, {pipeline_mode = #tpu.pipeline_mode<synchronous>, transform_indices = @transform_5, window_bounds = array<i64: 8, 1>}, {pipeline_mode = #tpu.pipeline_mode<synchronous>, transform_indices = @transform_6, window_bounds = array<i64: 8, 1>}, {transform_indices = @transform_7, window_bounds = array<i64: 1, 8, 512>}]} {
    %c512_i32 = arith.constant 512 : i32
    %0 = arith.muli %arg1, %c512_i32 : i32
    %1 = tpu.assume_multiple %0, 512 : i32
    %c0 = arith.constant 0 : index
    %c0_0 = arith.constant 0 : index
    %2 = arith.index_cast %1 : i32 to index
    %3 = vector.load %arg2[%c0, %c0_0, %2] : memref<1x8x1280xf32, #tpu.memory_space<vmem>>, vector<1x8x734xf32>
    %4 = vector.shape_cast %3 : vector<1x8x734xf32> to vector<8x734xf32>
    %c0_1 = arith.constant 0 : index
    %c0_2 = arith.constant 0 : index
    %c0_3 = arith.constant 0 : index
    %5 = vector.load %arg4[%c0_1, %c0_2, %c0_3] : memref<1x8x1xf32, #tpu.memory_space<vmem>>, vector<1x8x1xf32>
    %6 = vector.shape_cast %5 : vector<1x8x1xf32> to vector<8x1xf32>
    %7 = vector.broadcast %6 : vector<8x1xf32> to vector<8x734xf32>
    %8 = arith.mulf %4, %7 : vector<8x734xf32>
    %9 = vector.extract_strided_slice %8 {offsets = [0, 0], sizes = [8, 512], strides = [1, 1]} : vector<8x734xf32> to vector<8x512xf32>
    %10 = vector.extract_strided_slice %8 {offsets = [0, 1], sizes = [8, 512], strides = [1, 1]} : vector<8x734xf32> to vector<8x512xf32>
    %11 = vector.extract_strided_slice %8 {offsets = [0, 2], sizes = [8, 512], strides = [1, 1]} : vector<8x734xf32> to vector<8x512xf32>
    %12 = vector.extract_strided_slice %8 {offsets = [0, 10], sizes = [8, 512], strides = [1, 1]} : vector<8x734xf32> to vector<8x512xf32>
    %13 = vector.extract_strided_slice %8 {offsets = [0, 11], sizes = [8, 512], strides = [1, 1]} : vector<8x734xf32> to vector<8x512xf32>
    %14 = vector.extract_strided_slice %8 {offsets = [0, 12], sizes = [8, 512], strides = [1, 1]} : vector<8x734xf32> to vector<8x512xf32>
    %15 = vector.extract_strided_slice %8 {offsets = [0, 20], sizes = [8, 512], strides = [1, 1]} : vector<8x734xf32> to vector<8x512xf32>
    %16 = vector.extract_strided_slice %8 {offsets = [0, 21], sizes = [8, 512], strides = [1, 1]} : vector<8x734xf32> to vector<8x512xf32>
    %17 = vector.extract_strided_slice %8 {offsets = [0, 22], sizes = [8, 512], strides = [1, 1]} : vector<8x734xf32> to vector<8x512xf32>
    %18 = vector.extract_strided_slice %8 {offsets = [0, 100], sizes = [8, 512], strides = [1, 1]} : vector<8x734xf32> to vector<8x512xf32>
    %19 = vector.extract_strided_slice %8 {offsets = [0, 101], sizes = [8, 512], strides = [1, 1]} : vector<8x734xf32> to vector<8x512xf32>
    %20 = vector.extract_strided_slice %8 {offsets = [0, 102], sizes = [8, 512], strides = [1, 1]} : vector<8x734xf32> to vector<8x512xf32>
    %21 = vector.extract_strided_slice %8 {offsets = [0, 110], sizes = [8, 512], strides = [1, 1]} : vector<8x734xf32> to vector<8x512xf32>
    %22 = vector.extract_strided_slice %8 {offsets = [0, 111], sizes = [8, 512], strides = [1, 1]} : vector<8x734xf32> to vector<8x512xf32>
    %23 = vector.extract_strided_slice %8 {offsets = [0, 112], sizes = [8, 512], strides = [1, 1]} : vector<8x734xf32> to vector<8x512xf32>
    %24 = vector.extract_strided_slice %8 {offsets = [0, 120], sizes = [8, 512], strides = [1, 1]} : vector<8x734xf32> to vector<8x512xf32>
    %25 = vector.extract_strided_slice %8 {offsets = [0, 121], sizes = [8, 512], strides = [1, 1]} : vector<8x734xf32> to vector<8x512xf32>
    %26 = vector.extract_strided_slice %8 {offsets = [0, 122], sizes = [8, 512], strides = [1, 1]} : vector<8x734xf32> to vector<8x512xf32>
    %27 = vector.extract_strided_slice %8 {offsets = [0, 200], sizes = [8, 512], strides = [1, 1]} : vector<8x734xf32> to vector<8x512xf32>
    %28 = vector.extract_strided_slice %8 {offsets = [0, 201], sizes = [8, 512], strides = [1, 1]} : vector<8x734xf32> to vector<8x512xf32>
    %29 = vector.extract_strided_slice %8 {offsets = [0, 202], sizes = [8, 512], strides = [1, 1]} : vector<8x734xf32> to vector<8x512xf32>
    %30 = vector.extract_strided_slice %8 {offsets = [0, 210], sizes = [8, 512], strides = [1, 1]} : vector<8x734xf32> to vector<8x512xf32>
    %31 = vector.extract_strided_slice %8 {offsets = [0, 211], sizes = [8, 512], strides = [1, 1]} : vector<8x734xf32> to vector<8x512xf32>
    %32 = vector.extract_strided_slice %8 {offsets = [0, 212], sizes = [8, 512], strides = [1, 1]} : vector<8x734xf32> to vector<8x512xf32>
    %33 = vector.extract_strided_slice %8 {offsets = [0, 220], sizes = [8, 512], strides = [1, 1]} : vector<8x734xf32> to vector<8x512xf32>
    %34 = vector.extract_strided_slice %8 {offsets = [0, 221], sizes = [8, 512], strides = [1, 1]} : vector<8x734xf32> to vector<8x512xf32>
    %35 = vector.extract_strided_slice %8 {offsets = [0, 222], sizes = [8, 512], strides = [1, 1]} : vector<8x734xf32> to vector<8x512xf32>
    %36 = tpu.concatenate %9, %10, %11, %12, %13, %14, %15, %16, %17, %18, %19, %20, %21, %22, %23, %24 in 0 : vector<8x512xf32>, vector<8x512xf32>, vector<8x512xf32>, vector<8x512xf32>, vector<8x512xf32>, vector<8x512xf32>, vector<8x512xf32>, vector<8x512xf32>, vector<8x512xf32>, vector<8x512xf32>, vector<8x512xf32>, vector<8x512xf32>, vector<8x512xf32>, vector<8x512xf32>, vector<8x512xf32>, vector<8x512xf32> -> vector<128x512xf32>
    %37 = tpu.concatenate %25, %26, %27, %28, %29, %30, %31, %32, %33, %34, %35 in 0 : vector<8x512xf32>, vector<8x512xf32>, vector<8x512xf32>, vector<8x512xf32>, vector<8x512xf32>, vector<8x512xf32>, vector<8x512xf32>, vector<8x512xf32>, vector<8x512xf32>, vector<8x512xf32>, vector<8x512xf32> -> vector<88x512xf32>
    %38 = tpu.concatenate %36, %37 in 0 : vector<128x512xf32>, vector<88x512xf32> -> vector<216x512xf32>
    %c0_4 = arith.constant 0 : index
    %c0_5 = arith.constant 0 : index
    %39 = vector.load %arg3[%c0_4, %c0_5] : memref<8x216xf32, #tpu.memory_space<vmem>>, vector<8x216xf32>
    %cst = arith.constant dense<0.000000e+00> : vector<8x512xf32>
    %40 = tpu.matmul %39, %38, %cst {dimension_numbers = #tpu.dot_dimension_numbers<[1], [0], [0], [1], [0, 0, 1, 1], [], []>} : vector<8x216xf32>, vector<216x512xf32>, vector<8x512xf32> -> vector<8x512xf32>
    %c0_6 = arith.constant 0 : index
    %c0_7 = arith.constant 0 : index
    %c0_8 = arith.constant 0 : index
    %41 = vector.load %arg5[%c0_6, %c0_7, %c0_8] : memref<1x8x1xf32, #tpu.memory_space<vmem>>, vector<1x8x1xf32>
    %42 = vector.shape_cast %41 : vector<1x8x1xf32> to vector<8x1xf32>
    %43 = vector.broadcast %42 : vector<8x1xf32> to vector<8x512xf32>
    %44 = arith.mulf %40, %43 : vector<8x512xf32>
    %c0_9 = arith.constant 0 : index
    %c0_10 = arith.constant 0 : index
    %c0_11 = arith.constant 0 : index
    %45 = vector.load %arg6[%c0_9, %c0_10, %c0_11] : memref<1x1x512xf32, #tpu.memory_space<vmem>>, vector<1x1x512xf32>
    %46 = vector.shape_cast %45 : vector<1x1x512xf32> to vector<1x512xf32>
    %c0_12 = arith.constant 0 : index
    %c0_13 = arith.constant 0 : index
    %47 = vector.load %arg7[%c0_12, %c0_13] : memref<8x1xf32, #tpu.memory_space<vmem>>, vector<8x1xf32>
    %48 = vector.broadcast %46 : vector<1x512xf32> to vector<8x512xf32>
    %49 = vector.broadcast %47 : vector<8x1xf32> to vector<8x512xf32>
    %50 = arith.mulf %48, %49 : vector<8x512xf32>
    %51 = arith.addf %44, %50 : vector<8x512xf32>
    %c0_14 = arith.constant 0 : index
    %c0_15 = arith.constant 0 : index
    %52 = vector.load %arg8[%c0_14, %c0_15] : memref<8x1xf32, #tpu.memory_space<vmem>>, vector<8x1xf32>
    %53 = vector.broadcast %52 : vector<8x1xf32> to vector<8x512xf32>
    %54 = arith.addf %51, %53 : vector<8x512xf32>
    %cst_16 = arith.constant 0.000000e+00 : f32
    %55 = vector.broadcast %cst_16 : f32 to vector<8x512xf32>
    %56 = arith.cmpf ogt, %54, %55 : vector<8x512xf32>
    %cst_17 = arith.constant 2.000000e-01 : f32
    %57 = vector.broadcast %cst_17 : f32 to vector<8x512xf32>
    %58 = arith.mulf %57, %54 : vector<8x512xf32>
    %59 = arith.select %56, %54, %58 : vector<8x512xi1>, vector<8x512xf32>
    %c0_18 = arith.constant 0 : index
    %c0_19 = arith.constant 0 : index
    %c0_20 = arith.constant 0 : index
    %60 = vector.load %arg9[%c0_18, %c0_19, %c0_20] : memref<1x8x512xf32, #tpu.memory_space<vmem>>, vector<1x8x512xf32>
    %61 = vector.shape_cast %60 : vector<1x8x512xf32> to vector<8x512xf32>
    %62 = vector.shape_cast %59 : vector<8x512xf32> to vector<1x8x512xf32>
    tpu.vector_store %arg9[%c0_18, %c0_19, %c0_20], %62 {strides = array<i32>} : memref<1x8x512xf32, #tpu.memory_space<vmem>>, vector<1x8x512xf32>,
    return
  }
  func.func @transform_0(%arg0: i32, %arg1: i32) -> (i32, i32, i32) {
    %c0_i32 = arith.constant 0 : i32
    %c0_i32_0 = arith.constant 0 : i32
    %c0_i32_1 = arith.constant 0 : i32
    return %arg0, %c0_i32, %c0_i32_0 : i32, i32, i32
  }
  func.func @transform_1(%arg0: i32, %arg1: i32) -> (i32, i32) {
    %c0_i32 = arith.constant 0 : i32
    %c0_i32_0 = arith.constant 0 : i32
    %c0_i32_1 = arith.constant 0 : i32
    return %c0_i32, %c0_i32_0 : i32, i32
  }
  func.func @transform_2(%arg0: i32, %arg1: i32) -> (i32, i32, i32) {
    %c0_i32 = arith.constant 0 : i32
    %c0_i32_0 = arith.constant 0 : i32
    %c0_i32_1 = arith.constant 0 : i32
    return %arg0, %c0_i32, %c0_i32_0 : i32, i32, i32
  }
  func.func @transform_3(%arg0: i32, %arg1: i32) -> (i32, i32, i32) {
    %c0_i32 = arith.constant 0 : i32
    %c0_i32_0 = arith.constant 0 : i32
    %c0_i32_1 = arith.constant 0 : i32
    return %arg0, %c0_i32, %c0_i32_0 : i32, i32, i32
  }
  func.func @transform_4(%arg0: i32, %arg1: i32) -> (i32, i32, i32) {
    %c0_i32 = arith.constant 0 : i32
    %c0_i32_0 = arith.constant 0 : i32
    return %arg0, %c0_i32, %arg1 : i32, i32, i32
  }
  func.func @transform_5(%arg0: i32, %arg1: i32) -> (i32, i32) {
    %c0_i32 = arith.constant 0 : i32
    %c0_i32_0 = arith.constant 0 : i32
    %c0_i32_1 = arith.constant 0 : i32
    return %c0_i32, %c0_i32_0 : i32, i32
  }
  func.func @transform_6(%arg0: i32, %arg1: i32) -> (i32, i32) {
    %c0_i32 = arith.constant 0 : i32
    %c0_i32_0 = arith.constant 0 : i32
    %c0_i32_1 = arith.constant 0 : i32
    return %c0_i32, %c0_i32_0 : i32, i32
  }
  func.func @transform_7(%arg0: i32, %arg1: i32) -> (i32, i32, i32) {
    %c0_i32 = arith.constant 0 : i32
    %c0_i32_0 = arith.constant 0 : i32
    return %arg0, %c0_i32, %arg1 : i32, i32, i32
  }
}

module attributes {stable_mosaic.version = 11 : i64} {
  func.func @body(%arg0: i32, %arg1: i32, %arg2: memref<1x8x1280xf32, #tpu.memory_space<vmem>>, %arg3: memref<8x216xf32, #tpu.memory_space<vmem>>, %arg4: memref<1x8x1xf32, #tpu.memory_space<vmem>>, %arg5: memref<1x8x1xf32, #tpu.memory_space<vmem>>, %arg6: memref<1x1x512xf32, #tpu.memory_space<vmem>>, %arg7: memref<8x1xf32, #tpu.memory_space<vmem>>, %arg8: memref<8x1xf32, #tpu.memory_space<vmem>>, %arg9: memref<1x8x1xf32, #tpu.memory_space<vmem>>, %arg10: memref<1x1x512xf32, #tpu.memory_space<vmem>>, %arg11: memref<1x8x512xf32, #tpu.memory_space<vmem>>, %arg12: memref<1x1x512xf32, #tpu.memory_space<vmem>>) attributes {dimension_semantics = [#tpu.dimension_semantics<parallel>, #tpu.dimension_semantics<parallel>], iteration_bounds = array<i64: 2, 2>, scalar_prefetch = 0 : i64, scratch_operands = 0 : i64, tpu.core_type = #tpu.core_type<tc>, window_params = [{transform_indices = @transform_0, window_bounds = array<i64: 1, 8, 1280>}, {pipeline_mode = #tpu.pipeline_mode<synchronous>, transform_indices = @transform_1, window_bounds = array<i64: 8, 216>}, {transform_indices = @transform_2, window_bounds = array<i64: 1, 8, 1>}, {transform_indices = @transform_3, window_bounds = array<i64: 1, 8, 1>}, {transform_indices = @transform_4, window_bounds = array<i64: 1, 1, 512>}, {pipeline_mode = #tpu.pipeline_mode<synchronous>, transform_indices = @transform_5, window_bounds = array<i64: 8, 1>}, {pipeline_mode = #tpu.pipeline_mode<synchronous>, transform_indices = @transform_6, window_bounds = array<i64: 8, 1>}, {transform_indices = @transform_7, window_bounds = array<i64: 1, 8, 1>}, {transform_indices = @transform_8, window_bounds = array<i64: 1, 1, 512>}, {transform_indices = @transform_9, window_bounds = array<i64: 1, 8, 512>}, {transform_indices = @transform_10, window_bounds = array<i64: 1, 1, 512>}]} {
    %c512_i32 = arith.constant 512 : i32
    %0 = arith.muli %arg1, %c512_i32 : i32
    %1 = tpu.assume_multiple %0, 512 : i32
    %c0 = arith.constant 0 : index
    %c0_0 = arith.constant 0 : index
    %2 = arith.index_cast %1 : i32 to index
    %3 = vector.load %arg2[%c0, %c0_0, %2] : memref<1x8x1280xf32, #tpu.memory_space<vmem>>, vector<1x8x734xf32>
    %4 = vector.shape_cast %3 : vector<1x8x734xf32> to vector<8x734xf32>
    %c0_1 = arith.constant 0 : index
    %c0_2 = arith.constant 0 : index
    %c0_3 = arith.constant 0 : index
    %5 = vector.load %arg4[%c0_1, %c0_2, %c0_3] : memref<1x8x1xf32, #tpu.memory_space<vmem>>, vector<1x8x1xf32>
    %6 = vector.shape_cast %5 : vector<1x8x1xf32> to vector<8x1xf32>
    %7 = vector.broadcast %6 : vector<8x1xf32> to vector<8x734xf32>
    %8 = arith.mulf %4, %7 : vector<8x734xf32>
    %9 = vector.extract_strided_slice %8 {offsets = [0, 0], sizes = [8, 512], strides = [1, 1]} : vector<8x734xf32> to vector<8x512xf32>
    %10 = vector.extract_strided_slice %8 {offsets = [0, 1], sizes = [8, 512], strides = [1, 1]} : vector<8x734xf32> to vector<8x512xf32>
    %11 = vector.extract_strided_slice %8 {offsets = [0, 2], sizes = [8, 512], strides = [1, 1]} : vector<8x734xf32> to vector<8x512xf32>
    %12 = vector.extract_strided_slice %8 {offsets = [0, 10], sizes = [8, 512], strides = [1, 1]} : vector<8x734xf32> to vector<8x512xf32>
    %13 = vector.extract_strided_slice %8 {offsets = [0, 11], sizes = [8, 512], strides = [1, 1]} : vector<8x734xf32> to vector<8x512xf32>
    %14 = vector.extract_strided_slice %8 {offsets = [0, 12], sizes = [8, 512], strides = [1, 1]} : vector<8x734xf32> to vector<8x512xf32>
    %15 = vector.extract_strided_slice %8 {offsets = [0, 20], sizes = [8, 512], strides = [1, 1]} : vector<8x734xf32> to vector<8x512xf32>
    %16 = vector.extract_strided_slice %8 {offsets = [0, 21], sizes = [8, 512], strides = [1, 1]} : vector<8x734xf32> to vector<8x512xf32>
    %17 = vector.extract_strided_slice %8 {offsets = [0, 22], sizes = [8, 512], strides = [1, 1]} : vector<8x734xf32> to vector<8x512xf32>
    %18 = vector.extract_strided_slice %8 {offsets = [0, 100], sizes = [8, 512], strides = [1, 1]} : vector<8x734xf32> to vector<8x512xf32>
    %19 = vector.extract_strided_slice %8 {offsets = [0, 101], sizes = [8, 512], strides = [1, 1]} : vector<8x734xf32> to vector<8x512xf32>
    %20 = vector.extract_strided_slice %8 {offsets = [0, 102], sizes = [8, 512], strides = [1, 1]} : vector<8x734xf32> to vector<8x512xf32>
    %21 = vector.extract_strided_slice %8 {offsets = [0, 110], sizes = [8, 512], strides = [1, 1]} : vector<8x734xf32> to vector<8x512xf32>
    %22 = vector.extract_strided_slice %8 {offsets = [0, 111], sizes = [8, 512], strides = [1, 1]} : vector<8x734xf32> to vector<8x512xf32>
    %23 = vector.extract_strided_slice %8 {offsets = [0, 112], sizes = [8, 512], strides = [1, 1]} : vector<8x734xf32> to vector<8x512xf32>
    %24 = vector.extract_strided_slice %8 {offsets = [0, 120], sizes = [8, 512], strides = [1, 1]} : vector<8x734xf32> to vector<8x512xf32>
    %25 = vector.extract_strided_slice %8 {offsets = [0, 121], sizes = [8, 512], strides = [1, 1]} : vector<8x734xf32> to vector<8x512xf32>
    %26 = vector.extract_strided_slice %8 {offsets = [0, 122], sizes = [8, 512], strides = [1, 1]} : vector<8x734xf32> to vector<8x512xf32>
    %27 = vector.extract_strided_slice %8 {offsets = [0, 200], sizes = [8, 512], strides = [1, 1]} : vector<8x734xf32> to vector<8x512xf32>
    %28 = vector.extract_strided_slice %8 {offsets = [0, 201], sizes = [8, 512], strides = [1, 1]} : vector<8x734xf32> to vector<8x512xf32>
    %29 = vector.extract_strided_slice %8 {offsets = [0, 202], sizes = [8, 512], strides = [1, 1]} : vector<8x734xf32> to vector<8x512xf32>
    %30 = vector.extract_strided_slice %8 {offsets = [0, 210], sizes = [8, 512], strides = [1, 1]} : vector<8x734xf32> to vector<8x512xf32>
    %31 = vector.extract_strided_slice %8 {offsets = [0, 211], sizes = [8, 512], strides = [1, 1]} : vector<8x734xf32> to vector<8x512xf32>
    %32 = vector.extract_strided_slice %8 {offsets = [0, 212], sizes = [8, 512], strides = [1, 1]} : vector<8x734xf32> to vector<8x512xf32>
    %33 = vector.extract_strided_slice %8 {offsets = [0, 220], sizes = [8, 512], strides = [1, 1]} : vector<8x734xf32> to vector<8x512xf32>
    %34 = vector.extract_strided_slice %8 {offsets = [0, 221], sizes = [8, 512], strides = [1, 1]} : vector<8x734xf32> to vector<8x512xf32>
    %35 = vector.extract_strided_slice %8 {offsets = [0, 222], sizes = [8, 512], strides = [1, 1]} : vector<8x734xf32> to vector<8x512xf32>
    %36 = tpu.concatenate %9, %10, %11, %12, %13, %14, %15, %16, %17, %18, %19, %20, %21, %22, %23, %24 in 0 : vector<8x512xf32>, vector<8x512xf32>, vector<8x512xf32>, vector<8x512xf32>, vector<8x512xf32>, vector<8x512xf32>, vector<8x512xf32>, vector<8x512xf32>, vector<8x512xf32>, vector<8x512xf32>, vector<8x512xf32>, vector<8x512xf32>, vector<8x512xf32>, vector<8x512xf32>, vector<8x512xf32>, vector<8x512xf32> -> vector<128x512xf32>
    %37 = tpu.concatenate %25, %26, %27, %28, %29, %30, %31, %32, %33, %34, %35 in 0 : vector<8x512xf32>, vector<8x512xf32>, vector<8x512xf32>, vector<8x512xf32>, vector<8x512xf32>, vector<8x512xf32>, vector<8x512xf32>, vector<8x512xf32>, vector<8x512xf32>, vector<8x512xf32>, vector<8x512xf32> -> vector<88x512xf32>
    %38 = tpu.concatenate %36, %37 in 0 : vector<128x512xf32>, vector<88x512xf32> -> vector<216x512xf32>
    %c0_4 = arith.constant 0 : index
    %c0_5 = arith.constant 0 : index
    %39 = vector.load %arg3[%c0_4, %c0_5] : memref<8x216xf32, #tpu.memory_space<vmem>>, vector<8x216xf32>
    %cst = arith.constant dense<0.000000e+00> : vector<8x512xf32>
    %40 = tpu.matmul %39, %38, %cst {dimension_numbers = #tpu.dot_dimension_numbers<[1], [0], [0], [1], [0, 0, 1, 1], [], []>} : vector<8x216xf32>, vector<216x512xf32>, vector<8x512xf32> -> vector<8x512xf32>
    %c0_6 = arith.constant 0 : index
    %c0_7 = arith.constant 0 : index
    %c0_8 = arith.constant 0 : index
    %41 = vector.load %arg5[%c0_6, %c0_7, %c0_8] : memref<1x8x1xf32, #tpu.memory_space<vmem>>, vector<1x8x1xf32>
    %42 = vector.shape_cast %41 : vector<1x8x1xf32> to vector<8x1xf32>
    %43 = vector.broadcast %42 : vector<8x1xf32> to vector<8x512xf32>
    %44 = arith.mulf %40, %43 : vector<8x512xf32>
    %c0_9 = arith.constant 0 : index
    %c0_10 = arith.constant 0 : index
    %c0_11 = arith.constant 0 : index
    %45 = vector.load %arg6[%c0_9, %c0_10, %c0_11] : memref<1x1x512xf32, #tpu.memory_space<vmem>>, vector<1x1x512xf32>
    %46 = vector.shape_cast %45 : vector<1x1x512xf32> to vector<1x512xf32>
    %c0_12 = arith.constant 0 : index
    %c0_13 = arith.constant 0 : index
    %47 = vector.load %arg7[%c0_12, %c0_13] : memref<8x1xf32, #tpu.memory_space<vmem>>, vector<8x1xf32>
    %48 = vector.broadcast %46 : vector<1x512xf32> to vector<8x512xf32>
    %49 = vector.broadcast %47 : vector<8x1xf32> to vector<8x512xf32>
    %50 = arith.mulf %48, %49 : vector<8x512xf32>
    %51 = arith.addf %44, %50 : vector<8x512xf32>
    %c0_14 = arith.constant 0 : index
    %c0_15 = arith.constant 0 : index
    %52 = vector.load %arg8[%c0_14, %c0_15] : memref<8x1xf32, #tpu.memory_space<vmem>>, vector<8x1xf32>
    %53 = vector.broadcast %52 : vector<8x1xf32> to vector<8x512xf32>
    %54 = arith.addf %51, %53 : vector<8x512xf32>
    %cst_16 = arith.constant 0.000000e+00 : f32
    %55 = vector.broadcast %cst_16 : f32 to vector<8x512xf32>
    %56 = arith.cmpf ogt, %54, %55 : vector<8x512xf32>
    %cst_17 = arith.constant 2.000000e-01 : f32
    %57 = vector.broadcast %cst_17 : f32 to vector<8x512xf32>
    %58 = arith.mulf %57, %54 : vector<8x512xf32>
    %59 = arith.select %56, %54, %58 : vector<8x512xi1>, vector<8x512xf32>
    %c0_18 = arith.constant 0 : index
    %c0_19 = arith.constant 0 : index
    %c0_20 = arith.constant 0 : index
    %60 = vector.load %arg11[%c0_18, %c0_19, %c0_20] : memref<1x8x512xf32, #tpu.memory_space<vmem>>, vector<1x8x512xf32>
    %61 = vector.shape_cast %60 : vector<1x8x512xf32> to vector<8x512xf32>
    %62 = vector.shape_cast %59 : vector<8x512xf32> to vector<1x8x512xf32>
    tpu.vector_store %arg11[%c0_18, %c0_19, %c0_20], %62 {strides = array<i32>} : memref<1x8x512xf32, #tpu.memory_space<vmem>>, vector<1x8x512xf32>,
    %c0_21 = arith.constant 0 : index
    %c0_22 = arith.constant 0 : index
    %c0_23 = arith.constant 0 : index
    %63 = vector.load %arg9[%c0_21, %c0_22, %c0_23] : memref<1x8x1xf32, #tpu.memory_space<vmem>>, vector<1x8x1xf32>
    %64 = vector.shape_cast %63 : vector<1x8x1xf32> to vector<8x1xf32>
    %65 = vector.broadcast %64 : vector<8x1xf32> to vector<8x512xf32>
    %66 = arith.mulf %59, %65 : vector<8x512xf32>
    %cst_24 = arith.constant dense<0.000000e+00> : vector<512xf32>
    %67 = vector.multi_reduction <add>, %66, %cst_24 [0] : vector<8x512xf32> to vector<512xf32>
    %68 = vector.shape_cast %67 : vector<512xf32> to vector<1x512xf32>
    %c0_25 = arith.constant 0 : index
    %c0_26 = arith.constant 0 : index
    %c0_27 = arith.constant 0 : index
    %69 = vector.load %arg10[%c0_25, %c0_26, %c0_27] : memref<1x1x512xf32, #tpu.memory_space<vmem>>, vector<1x1x512xf32>
    %70 = vector.shape_cast %69 : vector<1x1x512xf32> to vector<1x512xf32>
    %71 = arith.addf %68, %70 : vector<1x512xf32>
    %c0_28 = arith.constant 0 : index
    %c0_29 = arith.constant 0 : index
    %c0_30 = arith.constant 0 : index
    %72 = vector.load %arg12[%c0_28, %c0_29, %c0_30] : memref<1x1x512xf32, #tpu.memory_space<vmem>>, vector<1x1x512xf32>
    %73 = vector.shape_cast %72 : vector<1x1x512xf32> to vector<1x512xf32>
    %74 = vector.shape_cast %71 : vector<1x512xf32> to vector<1x1x512xf32>
    tpu.vector_store %arg12[%c0_28, %c0_29, %c0_30], %74 {strides = array<i32>} : memref<1x1x512xf32, #tpu.memory_space<vmem>>, vector<1x1x512xf32>,
    return
  }
  func.func @transform_0(%arg0: i32, %arg1: i32) -> (i32, i32, i32) {
    %c0_i32 = arith.constant 0 : i32
    %c0_i32_0 = arith.constant 0 : i32
    %c0_i32_1 = arith.constant 0 : i32
    return %arg0, %c0_i32, %c0_i32_0 : i32, i32, i32
  }
  func.func @transform_1(%arg0: i32, %arg1: i32) -> (i32, i32) {
    %c0_i32 = arith.constant 0 : i32
    %c0_i32_0 = arith.constant 0 : i32
    %c0_i32_1 = arith.constant 0 : i32
    return %c0_i32, %c0_i32_0 : i32, i32
  }
  func.func @transform_2(%arg0: i32, %arg1: i32) -> (i32, i32, i32) {
    %c0_i32 = arith.constant 0 : i32
    %c0_i32_0 = arith.constant 0 : i32
    %c0_i32_1 = arith.constant 0 : i32
    return %arg0, %c0_i32, %c0_i32_0 : i32, i32, i32
  }
  func.func @transform_3(%arg0: i32, %arg1: i32) -> (i32, i32, i32) {
    %c0_i32 = arith.constant 0 : i32
    %c0_i32_0 = arith.constant 0 : i32
    %c0_i32_1 = arith.constant 0 : i32
    return %arg0, %c0_i32, %c0_i32_0 : i32, i32, i32
  }
  func.func @transform_4(%arg0: i32, %arg1: i32) -> (i32, i32, i32) {
    %c0_i32 = arith.constant 0 : i32
    %c0_i32_0 = arith.constant 0 : i32
    return %arg0, %c0_i32, %arg1 : i32, i32, i32
  }
  func.func @transform_5(%arg0: i32, %arg1: i32) -> (i32, i32) {
    %c0_i32 = arith.constant 0 : i32
    %c0_i32_0 = arith.constant 0 : i32
    %c0_i32_1 = arith.constant 0 : i32
    return %c0_i32, %c0_i32_0 : i32, i32
  }
  func.func @transform_6(%arg0: i32, %arg1: i32) -> (i32, i32) {
    %c0_i32 = arith.constant 0 : i32
    %c0_i32_0 = arith.constant 0 : i32
    %c0_i32_1 = arith.constant 0 : i32
    return %c0_i32, %c0_i32_0 : i32, i32
  }
  func.func @transform_7(%arg0: i32, %arg1: i32) -> (i32, i32, i32) {
    %c0_i32 = arith.constant 0 : i32
    %c0_i32_0 = arith.constant 0 : i32
    %c0_i32_1 = arith.constant 0 : i32
    return %arg0, %c0_i32, %c0_i32_0 : i32, i32, i32
  }
  func.func @transform_8(%arg0: i32, %arg1: i32) -> (i32, i32, i32) {
    %c0_i32 = arith.constant 0 : i32
    %c0_i32_0 = arith.constant 0 : i32
    return %arg0, %c0_i32, %arg1 : i32, i32, i32
  }
  func.func @transform_9(%arg0: i32, %arg1: i32) -> (i32, i32, i32) {
    %c0_i32 = arith.constant 0 : i32
    %c0_i32_0 = arith.constant 0 : i32
    return %arg0, %c0_i32, %arg1 : i32, i32, i32
  }
  func.func @transform_10(%arg0: i32, %arg1: i32) -> (i32, i32, i32) {
    %c0_i32 = arith.constant 0 : i32
    %c0_i32_0 = arith.constant 0 : i32
    return %arg0, %c0_i32, %arg1 : i32, i32, i32
  }
}

module attributes {stable_mosaic.version = 11 : i64} {
  func.func @body(%arg0: i32, %arg1: memref<1x18x328xf32, #tpu.memory_space<vmem>>, %arg2: memref<1x16x288xf32, #tpu.memory_space<vmem>>) attributes {dimension_semantics = [#tpu.dimension_semantics<parallel>], iteration_bounds = array<i64: 2>, scalar_prefetch = 0 : i64, scratch_operands = 0 : i64, tpu.core_type = #tpu.core_type<tc>, window_params = [{transform_indices = @transform_0, window_bounds = array<i64: 1, 18, 328>}, {transform_indices = @transform_1, window_bounds = array<i64: 1, 16, 288>}]} {
    %c0 = arith.constant 0 : index
    %c0_0 = arith.constant 0 : index
    %c0_1 = arith.constant 0 : index
    %0 = vector.load %arg1[%c0, %c0_0, %c0_1] : memref<1x18x328xf32, #tpu.memory_space<vmem>>, vector<1x18x328xf32>
    %1 = vector.shape_cast %0 : vector<1x18x328xf32> to vector<18x328xf32>
    %2 = vector.extract_strided_slice %1 {offsets = [0, 0], sizes = [18, 324], strides = [1, 1]} : vector<18x328xf32> to vector<18x324xf32>
    %3 = vector.extract_strided_slice %1 {offsets = [0, 1], sizes = [18, 324], strides = [1, 1]} : vector<18x328xf32> to vector<18x324xf32>
    %cst = arith.constant 2.000000e+00 : f32
    %4 = vector.broadcast %cst : f32 to vector<18x324xf32>
    %5 = arith.mulf %4, %3 : vector<18x324xf32>
    %6 = arith.addf %2, %5 : vector<18x324xf32>
    %7 = vector.extract_strided_slice %1 {offsets = [0, 2], sizes = [18, 324], strides = [1, 1]} : vector<18x328xf32> to vector<18x324xf32>
    %8 = arith.addf %6, %7 : vector<18x324xf32>
    %9 = vector.extract_strided_slice %8 {offsets = [0, 0], sizes = [18, 288], strides = [1, 1]} : vector<18x324xf32> to vector<18x288xf32>
    %10 = vector.extract_strided_slice %8 {offsets = [0, 18], sizes = [18, 288], strides = [1, 1]} : vector<18x324xf32> to vector<18x288xf32>
    %cst_2 = arith.constant 2.000000e+00 : f32
    %11 = vector.broadcast %cst_2 : f32 to vector<18x288xf32>
    %12 = arith.mulf %11, %10 : vector<18x288xf32>
    %13 = arith.addf %9, %12 : vector<18x288xf32>
    %14 = vector.extract_strided_slice %8 {offsets = [0, 36], sizes = [18, 288], strides = [1, 1]} : vector<18x324xf32> to vector<18x288xf32>
    %15 = arith.addf %13, %14 : vector<18x288xf32>
    %16 = vector.extract_strided_slice %15 {offsets = [0, 0], sizes = [16, 288], strides = [1, 1]} : vector<18x288xf32> to vector<16x288xf32>
    %17 = vector.extract_strided_slice %15 {offsets = [1, 0], sizes = [16, 288], strides = [1, 1]} : vector<18x288xf32> to vector<16x288xf32>
    %cst_3 = arith.constant 2.000000e+00 : f32
    %18 = vector.broadcast %cst_3 : f32 to vector<16x288xf32>
    %19 = arith.mulf %18, %17 : vector<16x288xf32>
    %20 = arith.addf %16, %19 : vector<16x288xf32>
    %21 = vector.extract_strided_slice %15 {offsets = [2, 0], sizes = [16, 288], strides = [1, 1]} : vector<18x288xf32> to vector<16x288xf32>
    %22 = arith.addf %20, %21 : vector<16x288xf32>
    %cst_4 = arith.constant 1.562500e-02 : f32
    %23 = vector.broadcast %cst_4 : f32 to vector<16x288xf32>
    %24 = arith.mulf %22, %23 : vector<16x288xf32>
    %c0_5 = arith.constant 0 : index
    %c0_6 = arith.constant 0 : index
    %c0_7 = arith.constant 0 : index
    %25 = vector.load %arg2[%c0_5, %c0_6, %c0_7] : memref<1x16x288xf32, #tpu.memory_space<vmem>>, vector<1x16x288xf32>
    %26 = vector.shape_cast %25 : vector<1x16x288xf32> to vector<16x288xf32>
    %27 = vector.shape_cast %24 : vector<16x288xf32> to vector<1x16x288xf32>
    tpu.vector_store %arg2[%c0_5, %c0_6, %c0_7], %27 {strides = array<i32>} : memref<1x16x288xf32, #tpu.memory_space<vmem>>, vector<1x16x288xf32>,
    return
  }
  func.func @transform_0(%arg0: i32) -> (i32, i32, i32) {
    %c0_i32 = arith.constant 0 : i32
    %c0_i32_0 = arith.constant 0 : i32
    %c0_i32_1 = arith.constant 0 : i32
    return %arg0, %c0_i32, %c0_i32_0 : i32, i32, i32
  }
  func.func @transform_1(%arg0: i32) -> (i32, i32, i32) {
    %c0_i32 = arith.constant 0 : i32
    %c0_i32_0 = arith.constant 0 : i32
    %c0_i32_1 = arith.constant 0 : i32
    return %arg0, %c0_i32, %c0_i32_0 : i32, i32, i32
  }
}

</mosaic_0001>

<llo_original>
// kernel: generator_block_forward.4
$region0: #{generator_block_forward.4}
  #allocation0 [shape = 'u32[]', space=smem, size = 0x4, offset = 0x4, fixed_abs, tag = 'smem constant byte address 0x4 - core index']
  #allocation1 [shape = 'u32[144,128]{1,0:T(1,128)}', space=vmem, size = 0x12000, scoped, tag = 'internal scratch']
  %s0 = inlined_call_operand.hbm [shape: f32[2,32], index: 0, kind: input, shape index: {}]
  %s1 = inlined_call_operand.hbm [shape: f32[32,20], index: 1, kind: input, shape index: {}]
  %s2 = inlined_call_operand.hbm [shape: f32[1,20], index: 2, kind: input, shape index: {}]
  %s3 = inlined_call_operand.vmem [shape: f32[2,20], index: 3, kind: output, shape index: {}]
  %s4 = sld [smem:[#allocation0]]
  $region34: #{generator_block_forward.4} parent=0
    _
  %s6 = ssub.s32 1, %s4
  %s7 = scalar_select 0, %s6, %s4
  $region1: #{generator_block_forward.4} parent=0
    #allocation2 [shape = 'u8[1024]{0}', space=vmem, size = 0x400, scoped, tag = 'input window, operand 0, single buffered']
    #allocation3 [shape = 's32[1]{0}', space=sflag, size = 0x4, scoped, tag = 'scoped memory for generator_block_forward.4']
    #allocation4 [shape = 'u8[16384]{0}', space=vmem, size = 0x4000, scoped, tag = 'input window, operand 1, single buffered']
    #allocation5 [shape = 's32[1]{0}', space=sflag, size = 0x4, scoped, tag = 'scoped memory for generator_block_forward.4']
    #allocation6 [shape = 'u8[512]{0}', space=vmem, size = 0x400, scoped, tag = 'input window, operand 2, single buffered']
    %8 = vsyncpa [#allocation3], 0
    %9 = vsyncpa [#allocation5], 0
    // Predicated region
    $region2: #{generator_block_forward.4} parent=1 // pred_check
      _
    $region3: #{generator_block_forward.4} parent=1 // pred_check_branch
      %11 = sbr.rel (0) target = $region5
    $region4: #{generator_block_forward.4} parent=1 // pred_region
      %s13 = ssub.s32 32, 32
      %14 = vsyncadd [#allocation3], %s13
      %s16 = sshll.u32 [#allocation2], 4
      %s17 = int_to_ptr.vmem [resolvable:$true] %s16
      %19 = dma.hbm_to_vmem [thread:$0]  %s0, 32, %s17, [#allocation3]
    $region5: #{generator_block_forward.4} parent=1 // pred_fallthru
      _
    // Predicated region
    $region6: #{generator_block_forward.4} parent=1 // pred_check
      _
    $region7: #{generator_block_forward.4} parent=1 // pred_check_branch
      %21 = sbr.rel (0) target = $region9
    $region8: #{generator_block_forward.4} parent=1 // pred_region
      %s23 = ssub.s32 512, 512
      %24 = vsyncadd [#allocation5], %s23
      %s25 = sshll.u32 [#allocation4], 4
      %s26 = int_to_ptr.vmem [resolvable:$true] %s25
      %31 = dma.hbm_to_vmem [thread:$0]  %s1, 512, %s26, [#allocation5], 128, 128, 8
    $region9: #{generator_block_forward.4} parent=1 // pred_fallthru
      _
    // Predicated region
    $region10: #{generator_block_forward.4} parent=1 // pred_check
      _
    $region11: #{generator_block_forward.4} parent=1 // pred_check_branch
      %33 = sbr.rel (0) target = $region13
    $region12: #{generator_block_forward.4} parent=1 // pred_region
      %s35 = ssub.s32 16, 16
      %36 = vsyncadd [#allocation5], %s35
      %s38 = sshll.u32 [#allocation6], 4
      %s39 = int_to_ptr.vmem [resolvable:$true] %s38
      %41 = dma.hbm_to_vmem [thread:$0]  %s2, 16, %s39, [#allocation5]
    $region13: #{generator_block_forward.4} parent=1 // pred_fallthru
      _
    // Predicated region
    $region14: #{generator_block_forward.4} parent=1 // pred_check
      _
    $region15: #{generator_block_forward.4} parent=1 // pred_check_branch
      %43 = sbr.rel (0) target = $region17
    $region16: #{generator_block_forward.4} parent=1 // pred_region
      %44 = dma.done [#allocation3], 32
    $region17: #{generator_block_forward.4} parent=1 // pred_fallthru
      _
    // Predicated region
    $region18: #{generator_block_forward.4} parent=1 // pred_check
      _
    $region19: #{generator_block_forward.4} parent=1 // pred_check_branch
      %46 = sbr.rel (0) target = $region21
    $region20: #{generator_block_forward.4} parent=1 // pred_region
      %47 = dma.done [#allocation5], 512
    $region21: #{generator_block_forward.4} parent=1 // pred_fallthru
      _
    // Predicated region
    $region22: #{generator_block_forward.4} parent=1 // pred_check
      _
    $region23: #{generator_block_forward.4} parent=1 // pred_check_branch
      %49 = sbr.rel (0) target = $region25
    $region24: #{generator_block_forward.4} parent=1 // pred_region
      %50 = dma.done [#allocation5], 16
    $region25: #{generator_block_forward.4} parent=1 // pred_fallthru
      _
    %v51 = vld [vmem:[#allocation2] sm:$0x3]
    %v52 = vld [vmem:[#allocation4] sm:$0xff]
    %v53 = vld [vmem:[#allocation4 + $0x8] sm:$0xff]
    %v54 = vld [vmem:[#allocation4 + $0x10] sm:$0xff]
    %v55 = vld [vmem:[#allocation4 + $0x18] sm:$0xff]
    %v56 = vld [vmem:[#allocation6] sm:$0x1]
    %v58 = vlaneseq
    %v59 = vshrl.u32 %v58, 7
    %v60 = vsub.s32 0, %v59
    %v61 = vrot.slane %v56, %v60
    %vm63 = vcmask 261120
    %v65 = vsel %vm63, %v51, 0
    %67 = vmatprep.subr.mxu0 0.0
    %68 = vmatpush1.msra.mxu0 %v52
    %69 = vmatprep.subr.mxu0 0.0
    %70 = vmatpush1.msra.mxu0 %v53
    %71 = vmatprep.subr.mxu0 0.0
    %72 = vmatpush1.msra.mxu0 %v54
    %73 = vmatprep.subr.mxu0 0.0
    %74 = vmatpush1.msra.mxu0 %v55
    %75 = vmatprep.subr.mxu0 0.0
    %76 = vmatpush1.msra.mxu0 0.0
    %77 = vmatprep.subr.mxu0 0.0
    %78 = vmatpush1.msra.mxu0 0.0
    %79 = vmatprep.subr.mxu0 0.0
    %80 = vmatpush1.msra.mxu0 0.0
    %81 = vmatprep.subr.mxu0 0.0
    %82 = vmatpush1.msra.mxu0 0.0
    %83 = vmatprep.subr.mxu0 0.0
    %84 = vmatpush1.msra.mxu0 0.0
    %85 = vmatprep.subr.mxu0 0.0
    %86 = vmatpush1.msra.mxu0 0.0
    %87 = vmatprep.subr.mxu0 0.0
    %88 = vmatpush1.msra.mxu0 0.0
    %89 = vmatprep.subr.mxu0 0.0
    %90 = vmatpush1.msra.mxu0 0.0
    %91 = vmatprep.subr.mxu0 0.0
    %92 = vmatpush1.msra.mxu0 0.0
    %93 = vmatprep.subr.mxu0 0.0
    %94 = vmatpush1.msra.mxu0 0.0
    %95 = vmatprep.subr.mxu0 0.0
    %96 = vmatpush1.msra.mxu0 0.0
    %97 = vmatprep.subr.mxu0 0.0
    %98 = vmatpush1.msra.mxu0 0.0
    %99 = vmatprep.subr.mxu0 0.0
    %100 = vmatpush1.msra.mxu0 0.0
    %101 = vmatprep.subr.mxu0 0.0
    %102 = vmatpush1.msra.mxu0 0.0
    %103 = vmatprep.subr.mxu0 0.0
    %104 = vmatpush1.msra.mxu0 0.0
    %105 = vmatprep.subr.mxu0 0.0
    %106 = vmatpush1.msra.mxu0 0.0
    %107 = vmatprep.subr.mxu0 0.0
    %108 = vmatpush1.msra.mxu0 0.0
    %109 = vmatprep.subr.mxu0 0.0
    %110 = vmatpush1.msra.mxu0 0.0
    %111 = vmatprep.subr.mxu0 0.0
    %112 = vmatpush1.msra.mxu0 0.0
    %113 = vmatprep.subr.mxu0 0.0
    %114 = vmatpush1.msra.mxu0 0.0
    %115 = vmatprep.subr.mxu0 0.0
    %116 = vmatpush1.msra.mxu0 0.0
    %117 = vmatprep.subr.mxu0 0.0
    %118 = vmatpush1.msra.mxu0 0.0
    %119 = vmatprep.subr.mxu0 0.0
    %120 = vmatpush1.msra.mxu0 0.0
    %121 = vmatprep.subr.mxu0 0.0
    %122 = vmatpush1.msra.mxu0 0.0
    %123 = vmatprep.subr.mxu0 0.0
    %124 = vmatpush1.msra.mxu0 0.0
    %125 = vmatprep.subr.mxu0 0.0
    %126 = vmatpush1.msra.mxu0 0.0
    %127 = vmatprep.subr.mxu0 0.0
    %128 = vmatpush1.msra.mxu0 0.0
    %129 = vmatprep.subr.mxu0 0.0
    %130 = vmatpush1.msra.mxu0 0.0
    %131 = vmatprep.mubr.f32.mxu0 0.0
    %132 = vmatmul.mubr.f32.gmra.mrb[0].mxu0 %v65
    %v133 = vpop.f32.mrb[0].mxu0
    %v134 = vadd.f32 %v61, %v133
    %v135 = vpop.f32.mrb[0].mxu0
    %136 = vdwg.mxu0
    %vm137 = vcmask 156672
    %138 = vst.msk [vmem:[%s3] sm:$0x3] %vm137, %v134
    // Predicated region
    $region26: #{generator_block_forward.4} parent=1 // pred_check
      _
    $region27: #{generator_block_forward.4} parent=1 // pred_check_branch
      %140 = sbr.rel (0) target = $region29
    $region28: #{generator_block_forward.4} parent=1 // pred_region
      _
    $region29: #{generator_block_forward.4} parent=1 // pred_fallthru
      _
    // Predicated region
    $region30: #{generator_block_forward.4} parent=1 // pred_check
      _
    $region31: #{generator_block_forward.4} parent=1 // pred_check_branch
      %142 = sbr.rel (0) target = $region33
    $region32: #{generator_block_forward.4} parent=1 // pred_region
      _
    $region33: #{generator_block_forward.4} parent=1 // pred_fallthru
      _
    %143 = vsyncpa [#allocation3], 1
    %144 = vsyncpa [#allocation5], 1

// kernel: generator_block_forward.5
$region0: #{generator_block_forward.5}
  #allocation0 [shape = 'u32[]', space=smem, size = 0x4, offset = 0x4, fixed_abs, tag = 'smem constant byte address 0x4 - core index']
  #allocation1 [shape = 'u32[144,128]{1,0:T(1,128)}', space=vmem, size = 0x12000, scoped, tag = 'internal scratch']
  %s0 = inlined_call_operand.vmem [shape: f32[2,8,1280], index: 0, kind: input, shape index: {}]
  %s1 = inlined_call_operand.vmem [shape: f32[8,216], index: 1, kind: input, shape index: {}]
  %s2 = inlined_call_operand.vmem [shape: f32[2,8,1], index: 2, kind: input, shape index: {}]
  %s3 = inlined_call_operand.vmem [shape: f32[2,8,1], index: 3, kind: input, shape index: {}]
  %s4 = inlined_call_operand.vmem [shape: f32[2,1,1024], index: 4, kind: input, shape index: {}]
  %s5 = inlined_call_operand.vmem [shape: f32[8,1], index: 5, kind: input, shape index: {}]
  %s6 = inlined_call_operand.vmem [shape: f32[8,1], index: 6, kind: input, shape index: {}]
  %s7 = inlined_call_operand.vmem [shape: f32[2,8,1024], index: 7, kind: output, shape index: {}]
  %s8 = sld [smem:[#allocation0]]
  $region61: #{generator_block_forward.5} parent=0
    _
  %s10 = ssub.s32 1, %s8
  %s11 = scalar_select 0, %s10, %s8
  loop: start=0, step=1, limit=6
  $region2: #{generator_block_forward.5} parent=0 // loop_pre_header
    _
  $region3: #{generator_block_forward.5} parent=0 // loop_header
    %s13 = sphi 0, %s17
    %p14 = scmp.ge.s32.totalorder %s13, 6
    %s20 = sphi 0, %s32
    %s21 = sphi 0, %s28
    %s22 = sphi 0, %s20
    %s23 = sphi 0, %s21
    %s24 = sphi 0, %s22
    %s25 = sphi 0, %s23
    %s35 = sphi 0, %s37
    %s38 = sphi 0, %s35
    %s39 = sphi 0, %s38
    %s55 = sphi 0, %s39
    %s59 = sphi 0, %s59
    %s61 = sphi 0, %s59
    %s62 = sphi 0, %s61
    %s76 = sphi 0, %s62
    %s82 = sphi 0, %s84
    %s85 = sphi 0, %s82
    %s86 = sphi 0, %s85
    %s102 = sphi 0, %s86
    %s108 = sphi 0, %s110
    %s111 = sphi 0, %s108
    %s112 = sphi 0, %s111
    %s128 = sphi 0, %s112
    %s136 = sphi 0, %s138
    %s139 = sphi 0, %s136
    %s140 = sphi 0, %s139
    %s156 = sphi 0, %s140
    %s160 = sphi 0, %s160
    %s162 = sphi 0, %s160
    %s163 = sphi 0, %s162
    %s177 = sphi 0, %s163
    %s181 = sphi 0, %s181
    %s183 = sphi 0, %s181
    %s184 = sphi 0, %s183
    %s198 = sphi 0, %s184
    %s206 = sphi 0, %s208
    %s209 = sphi 0, %s206
    %s210 = sphi 0, %s209
    %s226 = sphi 0, %s210
  $region4: #{generator_block_forward.5} parent=0 // loop_header_branch
    %16 = sbr.rel (%p14) target = $region8
  $region5: #{generator_block_forward.5} parent=0 // loop_body
    %s18 = ssub.s32 %s13, 1
    %s19 = ssub.s32 %s13, 2
    %s26 = sadd.s32 1, %s21
    %p27 = scmp.ge.s32.totalorder %s26, 2
    %s28 = scalar_select %p27, 0, %s26
    %s29 = sadd.s32 1, %s20
    %s30 = scalar_select %p27, %s29, %s20
    %p31 = scmp.ge.s32.totalorder %s30, 2
    %s32 = scalar_select %p31, 0, %s30
    %s33 = ssub.s32 %s20, %s32
    %p34 = scmp.eq.s32.totalorder %s33, 0
    %s36 = sadd.s32 %s35, 1
    %s37 = scalar_select %p34, %s35, %s36
    %p40 = pneg %p34
    %p41 = scmp.eq.s32.totalorder %s13, 3
    %p42 = por %p40, %p41
    %p43 = scmp.ne.s32.totalorder %s35, %s38
    %p44 = scmp.eq.s32.totalorder %s13, 0
    %p45 = por %p43, %p44
    %p46 = scmp.ne.s32.totalorder %s35, %s38
    %p47 = scmp.eq.s32.totalorder %s18, 3
    %p48 = por %p46, %p47
    %p49 = scmp.ne.s32.totalorder %s38, %s39
    %p50 = scmp.eq.s32.totalorder %s18, 0
    %p51 = por %p49, %p50
    %p52 = scmp.ne.s32.totalorder %s38, %s39
    %p53 = scmp.eq.s32.totalorder %s19, 3
    %p54 = por %p52, %p53
    %p56 = scmp.ne.s32.totalorder %s39, %s55
    %p57 = scmp.eq.s32.totalorder %s19, 0
    %p58 = por %p56, %p57
    %s60 = sadd.s32 %s59, 1
    %p63 = scmp.eq.s32.totalorder %s13, 3
    %p64 = scmp.ne.s32.totalorder %s59, %s61
    %p65 = scmp.eq.s32.totalorder %s13, 0
    %p66 = por %p64, %p65
    %p67 = scmp.ne.s32.totalorder %s59, %s61
    %p68 = scmp.eq.s32.totalorder %s18, 3
    %p69 = por %p67, %p68
    %p70 = scmp.ne.s32.totalorder %s61, %s62
    %p71 = scmp.eq.s32.totalorder %s18, 0
    %p72 = por %p70, %p71
    %p73 = scmp.ne.s32.totalorder %s61, %s62
    %p74 = scmp.eq.s32.totalorder %s19, 3
    %p75 = por %p73, %p74
    %p77 = scmp.ne.s32.totalorder %s62, %s76
    %p78 = scmp.eq.s32.totalorder %s19, 0
    %p79 = por %p77, %p78
    %s80 = ssub.s32 %s20, %s32
    %p81 = scmp.eq.s32.totalorder %s80, 0
    %s83 = sadd.s32 %s82, 1
    %s84 = scalar_select %p81, %s82, %s83
    %p87 = pneg %p81
    %p88 = scmp.eq.s32.totalorder %s13, 3
    %p89 = por %p87, %p88
    %p90 = scmp.ne.s32.totalorder %s82, %s85
    %p91 = scmp.eq.s32.totalorder %s13, 0
    %p92 = por %p90, %p91
    %p93 = scmp.ne.s32.totalorder %s82, %s85
    %p94 = scmp.eq.s32.totalorder %s18, 3
    %p95 = por %p93, %p94
    %p96 = scmp.ne.s32.totalorder %s85, %s86
    %p97 = scmp.eq.s32.totalorder %s18, 0
    %p98 = por %p96, %p97
    %p99 = scmp.ne.s32.totalorder %s85, %s86
    %p100 = scmp.eq.s32.totalorder %s19, 3
    %p101 = por %p99, %p100
    %p103 = scmp.ne.s32.totalorder %s86, %s102
    %p104 = scmp.eq.s32.totalorder %s19, 0
    %p105 = por %p103, %p104
    %s106 = ssub.s32 %s20, %s32
    %p107 = scmp.eq.s32.totalorder %s106, 0
    %s109 = sadd.s32 %s108, 1
    %s110 = scalar_select %p107, %s108, %s109
    %p113 = pneg %p107
    %p114 = scmp.eq.s32.totalorder %s13, 3
    %p115 = por %p113, %p114
    %p116 = scmp.ne.s32.totalorder %s108, %s111
    %p117 = scmp.eq.s32.totalorder %s13, 0
    %p118 = por %p116, %p117
    %p119 = scmp.ne.s32.totalorder %s108, %s111
    %p120 = scmp.eq.s32.totalorder %s18, 3
    %p121 = por %p119, %p120
    %p122 = scmp.ne.s32.totalorder %s111, %s112
    %p123 = scmp.eq.s32.totalorder %s18, 0
    %p124 = por %p122, %p123
    %p125 = scmp.ne.s32.totalorder %s111, %s112
    %p126 = scmp.eq.s32.totalorder %s19, 3
    %p127 = por %p125, %p126
    %p129 = scmp.ne.s32.totalorder %s112, %s128
    %p130 = scmp.eq.s32.totalorder %s19, 0
    %p131 = por %p129, %p130
    %s132 = ssub.s32 %s20, %s32
    %s133 = ssub.s32 %s21, %s28
    %s134 = sor.u32 %s132, %s133
    %p135 = scmp.eq.s32.totalorder %s134, 0
    %s137 = sadd.s32 %s136, 1
    %s138 = scalar_select %p135, %s136, %s137
    %p141 = pneg %p135
    %p142 = scmp.eq.s32.totalorder %s13, 3
    %p143 = por %p141, %p142
    %p144 = scmp.ne.s32.totalorder %s136, %s139
    %p145 = scmp.eq.s32.totalorder %s13, 0
    %p146 = por %p144, %p145
    %p147 = scmp.ne.s32.totalorder %s136, %s139
    %p148 = scmp.eq.s32.totalorder %s18, 3
    %p149 = por %p147, %p148
    %p150 = scmp.ne.s32.totalorder %s139, %s140
    %p151 = scmp.eq.s32.totalorder %s18, 0
    %p152 = por %p150, %p151
    %p153 = scmp.ne.s32.totalorder %s139, %s140
    %p154 = scmp.eq.s32.totalorder %s19, 3
    %p155 = por %p153, %p154
    %p157 = scmp.ne.s32.totalorder %s140, %s156
    %p158 = scmp.eq.s32.totalorder %s19, 0
    %p159 = por %p157, %p158
    %s161 = sadd.s32 %s160, 1
    %p164 = scmp.eq.s32.totalorder %s13, 3
    %p165 = scmp.ne.s32.totalorder %s160, %s162
    %p166 = scmp.eq.s32.totalorder %s13, 0
    %p167 = por %p165, %p166
    %p168 = scmp.ne.s32.totalorder %s160, %s162
    %p169 = scmp.eq.s32.totalorder %s18, 3
    %p170 = por %p168, %p169
    %p171 = scmp.ne.s32.totalorder %s162, %s163
    %p172 = scmp.eq.s32.totalorder %s18, 0
    %p173 = por %p171, %p172
    %p174 = scmp.ne.s32.totalorder %s162, %s163
    %p175 = scmp.eq.s32.totalorder %s19, 3
    %p176 = por %p174, %p175
    %p178 = scmp.ne.s32.totalorder %s163, %s177
    %p179 = scmp.eq.s32.totalorder %s19, 0
    %p180 = por %p178, %p179
    %s182 = sadd.s32 %s181, 1
    %p185 = scmp.eq.s32.totalorder %s13, 3
    %p186 = scmp.ne.s32.totalorder %s181, %s183
    %p187 = scmp.eq.s32.totalorder %s13, 0
    %p188 = por %p186, %p187
    %p189 = scmp.ne.s32.totalorder %s181, %s183
    %p190 = scmp.eq.s32.totalorder %s18, 3
    %p191 = por %p189, %p190
    %p192 = scmp.ne.s32.totalorder %s183, %s184
    %p193 = scmp.eq.s32.totalorder %s18, 0
    %p194 = por %p192, %p193
    %p195 = scmp.ne.s32.totalorder %s183, %s184
    %p196 = scmp.eq.s32.totalorder %s19, 3
    %p197 = por %p195, %p196
    %p199 = scmp.ne.s32.totalorder %s184, %s198
    %p200 = scmp.eq.s32.totalorder %s19, 0
    %p201 = por %p199, %p200
    %s202 = ssub.s32 %s20, %s32
    %s203 = ssub.s32 %s21, %s28
    %s204 = sor.u32 %s202, %s203
    %p205 = scmp.eq.s32.totalorder %s204, 0
    %s207 = sadd.s32 %s206, 1
    %s208 = scalar_select %p205, %s206, %s207
    %p211 = pneg %p205
    %p212 = scmp.eq.s32.totalorder %s13, 3
    %p213 = por %p211, %p212
    %p214 = scmp.ne.s32.totalorder %s206, %s209
    %p215 = scmp.eq.s32.totalorder %s13, 0
    %p216 = por %p214, %p215
    %p217 = scmp.ne.s32.totalorder %s206, %s209
    %p218 = scmp.eq.s32.totalorder %s18, 3
    %p219 = por %p217, %p218
    %p220 = scmp.ne.s32.totalorder %s209, %s210
    %p221 = scmp.eq.s32.totalorder %s18, 0
    %p222 = por %p220, %p221
    %p223 = scmp.ne.s32.totalorder %s209, %s210
    %p224 = scmp.eq.s32.totalorder %s19, 3
    %p225 = por %p223, %p224
    %p227 = scmp.ne.s32.totalorder %s210, %s226
    %p228 = scmp.eq.s32.totalorder %s19, 0
    %p229 = por %p227, %p228
    %p230 = scmp.le.s32.totalorder 1, %s13
    %p231 = scmp.lt.s32.totalorder %s13, 5
    %p232 = pnand %p230, %p231
    %p233 = pneg %p232
    // Predicated region
    $region9: #{generator_block_forward.5} parent=5 // pred_check
      _
    $region10: #{generator_block_forward.5} parent=5 // pred_check_branch
      %235 = sbr.rel (%p232) target = $region12
    $region11: #{generator_block_forward.5} parent=5 // pred_region
      %s236 = ssub.s32 %s13, 1
      // Predicated region
      $region13: #{generator_block_forward.5} parent=11 // pred_check
        %p237 = pneg %p72
      $region14: #{generator_block_forward.5} parent=11 // pred_check_branch
        %239 = sbr.rel (%p237) target = $region16
      $region15: #{generator_block_forward.5} parent=11 // pred_region
        _
      $region16: #{generator_block_forward.5} parent=11 // pred_fallthru
        _
      // Predicated region
      $region17: #{generator_block_forward.5} parent=11 // pred_check
        %p240 = pneg %p173
      $region18: #{generator_block_forward.5} parent=11 // pred_check_branch
        %242 = sbr.rel (%p240) target = $region20
      $region19: #{generator_block_forward.5} parent=11 // pred_region
        _
      $region20: #{generator_block_forward.5} parent=11 // pred_fallthru
        _
      // Predicated region
      $region21: #{generator_block_forward.5} parent=11 // pred_check
        %p243 = pneg %p194
      $region22: #{generator_block_forward.5} parent=11 // pred_check_branch
        %245 = sbr.rel (%p243) target = $region24
      $region23: #{generator_block_forward.5} parent=11 // pred_region
        _
      $region24: #{generator_block_forward.5} parent=11 // pred_fallthru
        _
    $region12: #{generator_block_forward.5} parent=5 // pred_fallthru
      _
    %p246 = scmp.lt.s32.totalorder %s13, 4
    // Predicated region
    $region25: #{generator_block_forward.5} parent=5 // pred_check
      %p247 = pneg %p246
    $region26: #{generator_block_forward.5} parent=5 // pred_check_branch
      %249 = sbr.rel (%p247) target = $region28
    $region27: #{generator_block_forward.5} parent=5 // pred_region
      // Predicated region
      $region29: #{generator_block_forward.5} parent=27 // pred_check
        %p250 = pneg %p45
      $region30: #{generator_block_forward.5} parent=27 // pred_check_branch
        %252 = sbr.rel (%p250) target = $region32
      $region31: #{generator_block_forward.5} parent=27 // pred_region
        %p253 = scmp.lt.s32.totalorder %s20, 1
        %s254 = scalar_select %p253, %s20, 1
        %s255 = smul.addr %s254, 10
        %s256 = smul.addr %s255, 8
        %s257 = scalar_lea.vmem %s0, %s256
      $region32: #{generator_block_forward.5} parent=27 // pred_fallthru
        _
      // Predicated region
      $region33: #{generator_block_forward.5} parent=27 // pred_check
        %p258 = pneg %p92
      $region34: #{generator_block_forward.5} parent=27 // pred_check_branch
        %260 = sbr.rel (%p258) target = $region36
      $region35: #{generator_block_forward.5} parent=27 // pred_region
        %p261 = scmp.lt.s32.totalorder %s20, 1
        %s262 = scalar_select %p261, %s20, 1
        %s263 = smul.addr %s262, 8
        %s264 = scalar_lea.vmem %s2, %s263
      $region36: #{generator_block_forward.5} parent=27 // pred_fallthru
        _
      // Predicated region
      $region37: #{generator_block_forward.5} parent=27 // pred_check
        %p265 = pneg %p118
      $region38: #{generator_block_forward.5} parent=27 // pred_check_branch
        %267 = sbr.rel (%p265) target = $region40
      $region39: #{generator_block_forward.5} parent=27 // pred_region
        %p268 = scmp.lt.s32.totalorder %s20, 1
        %s269 = scalar_select %p268, %s20, 1
        %s270 = smul.addr %s269, 8
        %s271 = scalar_lea.vmem %s3, %s270
      $region40: #{generator_block_forward.5} parent=27 // pred_fallthru
        _
      // Predicated region
      $region41: #{generator_block_forward.5} parent=27 // pred_check
        %p272 = pneg %p146
      $region42: #{generator_block_forward.5} parent=27 // pred_check_branch
        %274 = sbr.rel (%p272) target = $region44
      $region43: #{generator_block_forward.5} parent=27 // pred_region
        %s275 = smul.u32 4, %s21
        %p276 = scmp.lt.s32.totalorder %s20, 1
        %s277 = scalar_select %p276, %s20, 1
        %p278 = scmp.lt.s32.totalorder %s275, 7
        %s279 = scalar_select %p278, %s275, 7
        %s280 = smul.addr %s277, 8
        %s281 = sadd.s32 %s279, %s280
        %s282 = scalar_lea.vmem %s4, %s281
        %s283 = smul.u32 4, %s21
      $region44: #{generator_block_forward.5} parent=27 // pred_fallthru
        _
    $region28: #{generator_block_forward.5} parent=5 // pred_fallthru
      _
    %p284 = scmp.le.s32.totalorder 1, %s13
    %p285 = scmp.lt.s32.totalorder %s13, 5
    %p286 = pnand %p284, %p285
    %p287 = pneg %p286
    // Predicated region
    $region45: #{generator_block_forward.5} parent=5 // pred_check
      _
    $region46: #{generator_block_forward.5} parent=5 // pred_check_branch
      %289 = sbr.rel (%p286) target = $region48
    $region47: #{generator_block_forward.5} parent=5 // pred_region
      %s290 = ssub.s32 %s13, 1
      %p291 = scmp.lt.s32.totalorder %s22, 1
      %s292 = scalar_select %p291, %s22, 1
      %s293 = smul.addr %s292, 10
      %s294 = smul.addr %s293, 8
      %s295 = scalar_lea.vmem %s0, %s294
      %p296 = pneg %p51
      %p297 = pneg %p48
      %p298 = pneg %p72
      %p299 = pneg %p69
      %p300 = scmp.lt.s32.totalorder %s22, 1
      %s301 = scalar_select %p300, %s22, 1
      %s302 = smul.addr %s301, 8
      %s303 = scalar_lea.vmem %s2, %s302
      %p304 = pneg %p98
      %p305 = pneg %p95
      %p306 = scmp.lt.s32.totalorder %s22, 1
      %s307 = scalar_select %p306, %s22, 1
      %s308 = smul.addr %s307, 8
      %s309 = scalar_lea.vmem %s3, %s308
      %p310 = pneg %p124
      %p311 = pneg %p121
      %s312 = smul.u32 4, %s23
      %p313 = scmp.lt.s32.totalorder %s22, 1
      %s314 = scalar_select %p313, %s22, 1
      %p315 = scmp.lt.s32.totalorder %s312, 7
      %s316 = scalar_select %p315, %s312, 7
      %s317 = smul.addr %s314, 8
      %s318 = sadd.s32 %s316, %s317
      %s319 = scalar_lea.vmem %s4, %s318
      %p320 = pneg %p152
      %p321 = pneg %p149
      %p322 = pneg %p173
      %p323 = pneg %p170
      %p324 = pneg %p194
      %p325 = pneg %p191
      %p326 = pneg %p222
      %p327 = pneg %p219
      %s328 = smul.u32 4, %s23
      %p329 = scmp.lt.s32.totalorder %s22, 1
      %s330 = scalar_select %p329, %s22, 1
      %p331 = scmp.lt.s32.totalorder %s328, 7
      %s332 = scalar_select %p331, %s328, 7
      %s333 = smul.addr %s330, 8
      %s334 = sadd.s32 %s332, %s333
      %s335 = smul.addr %s334, 8
      %s336 = scalar_lea.vmem %s7, %s335
      %p337 = scmp.lt.s32.totalorder %s22, 1
      %s338 = scalar_select %p337, %s22, 1
      %s339 = smul.addr %s338, 10
      %s340 = smul.addr %s339, 8
      %s341 = scalar_lea.vmem %s0, %s340
      %p342 = scmp.lt.s32.totalorder %s22, 1
      %s343 = scalar_select %p342, %s22, 1
      %s344 = smul.addr %s343, 8
      %s345 = scalar_lea.vmem %s2, %s344
      %p346 = scmp.lt.s32.totalorder %s22, 1
      %s347 = scalar_select %p346, %s22, 1
      %s348 = smul.addr %s347, 8
      %s349 = scalar_lea.vmem %s3, %s348
      %s350 = smul.u32 4, %s23
      %p351 = scmp.lt.s32.totalorder %s22, 1
      %s352 = scalar_select %p351, %s22, 1
      %p353 = scmp.lt.s32.totalorder %s350, 7
      %s354 = scalar_select %p353, %s350, 7
      %s355 = smul.addr %s352, 8
      %s356 = sadd.s32 %s354, %s355
      %s357 = scalar_lea.vmem %s4, %s356
      %s358 = smul.u32 4, %s23
      %s359 = smul.u32 4, %s23
      %p360 = scmp.lt.s32.totalorder %s22, 1
      %s361 = scalar_select %p360, %s22, 1
      %p362 = scmp.lt.s32.totalorder %s359, 7
      %s363 = scalar_select %p362, %s359, 7
      %s364 = smul.addr %s361, 8
      %s365 = sadd.s32 %s363, %s364
      %s366 = smul.addr %s365, 8
      %s367 = scalar_lea.vmem %s7, %s366
      %s368 = smul.u32 4, %s23
      %s369 = smul.u32 %s23, 512
      %s370 = sshra.s32 %s369, 7
      %s371 = sand.u32 %s369, 127
      %s372 = smul.addr %s370, 8
      %s373 = scalar_lea.vmem %s341, %s372
      %v374 = vld [vmem:[%s373] sm:$0xff]
      %v375 = vld [vmem:[%s373 + $0x8] sm:$0xff]
      %v376 = vld [vmem:[%s373 + $0x10] sm:$0xff]
      %v377 = vld [vmem:[%s373 + $0x18] sm:$0xff]
      %v378 = vld [vmem:[%s373 + $0x20] sm:$0xff]
      %v379 = vld [vmem:[%s373 + $0x28] sm:$0xff]
      %v380 = vld [vmem:[%s345] sm:$0xff]
      %382 = vset.pattern.permute.xlu0 0
      %383 = vperm.xlu0 %382, %v380
      %v384 = vpop.permute.xlu0 %383
      %v386 = vmul.f32 %v374, %v384
      %v387 = vmul.f32 %v375, %v384
      %v388 = vmul.f32 %v376, %v384
      %v389 = vmul.f32 %v377, %v384
      %v390 = vmul.f32 %v378, %v384
      %v391 = vmul.f32 %v379, %v384
      %397 = vrot.lane.b32.xlu0 %v386, 127
      %v398 = vpop.permute.xlu0 %397
      %399 = vrot.lane.b32.xlu0 %v387, 127
      %v400 = vpop.permute.xlu0 %399
      %401 = vrot.lane.b32.xlu0 %v388, 127
      %v402 = vpop.permute.xlu0 %401
      %403 = vrot.lane.b32.xlu0 %v389, 127
      %v404 = vpop.permute.xlu0 %403
      %405 = vrot.lane.b32.xlu0 %v390, 127
      %v406 = vpop.permute.xlu0 %405
      %vm407 = vcmask 1039360
      %v408 = vsel %vm407, %v398, %v400
      %v409 = vsel %vm407, %v400, %v402
      %v410 = vsel %vm407, %v402, %v404
      %v411 = vsel %vm407, %v404, %v406
      %416 = vrot.lane.b32.xlu0 %v386, 126
      %v417 = vpop.permute.xlu0 %416
      %418 = vrot.lane.b32.xlu0 %v387, 126
      %v419 = vpop.permute.xlu0 %418
      %420 = vrot.lane.b32.xlu0 %v388, 126
      %v421 = vpop.permute.xlu0 %420
      %422 = vrot.lane.b32.xlu0 %v389, 126
      %v423 = vpop.permute.xlu0 %422
      %424 = vrot.lane.b32.xlu0 %v390, 126
      %v425 = vpop.permute.xlu0 %424
      %vm426 = vcmask 1031168
      %v427 = vsel %vm426, %v417, %v419
      %v428 = vsel %vm426, %v419, %v421
      %v429 = vsel %vm426, %v421, %v423
      %v430 = vsel %vm426, %v423, %v425
      %435 = vrot.lane.b32.xlu0 %v386, 118
      %v436 = vpop.permute.xlu0 %435
      %437 = vrot.lane.b32.xlu0 %v387, 118
      %v438 = vpop.permute.xlu0 %437
      %439 = vrot.lane.b32.xlu0 %v388, 118
      %v440 = vpop.permute.xlu0 %439
      %441 = vrot.lane.b32.xlu0 %v389, 118
      %v442 = vpop.permute.xlu0 %441
      %443 = vrot.lane.b32.xlu0 %v390, 118
      %v444 = vpop.permute.xlu0 %443
      %vm445 = vcmask 965632
      %v446 = vsel %vm445, %v436, %v438
      %v447 = vsel %vm445, %v438, %v440
      %v448 = vsel %vm445, %v440, %v442
      %v449 = vsel %vm445, %v442, %v444
      %454 = vrot.lane.b32.xlu0 %v386, 117
      %v455 = vpop.permute.xlu0 %454
      %456 = vrot.lane.b32.xlu0 %v387, 117
      %v457 = vpop.permute.xlu0 %456
      %458 = vrot.lane.b32.xlu0 %v388, 117
      %v459 = vpop.permute.xlu0 %458
      %460 = vrot.lane.b32.xlu0 %v389, 117
      %v461 = vpop.permute.xlu0 %460
      %462 = vrot.lane.b32.xlu0 %v390, 117
      %v463 = vpop.permute.xlu0 %462
      %vm464 = vcmask 957440
      %v465 = vsel %vm464, %v455, %v457
      %v466 = vsel %vm464, %v457, %v459
      %v467 = vsel %vm464, %v459, %v461
      %v468 = vsel %vm464, %v461, %v463
      %473 = vrot.lane.b32.xlu0 %v386, 116
      %v474 = vpop.permute.xlu0 %473
      %475 = vrot.lane.b32.xlu0 %v387, 116
      %v476 = vpop.permute.xlu0 %475
      %477 = vrot.lane.b32.xlu0 %v388, 116
      %v478 = vpop.permute.xlu0 %477
      %479 = vrot.lane.b32.xlu0 %v389, 116
      %v480 = vpop.permute.xlu0 %479
      %481 = vrot.lane.b32.xlu0 %v390, 116
      %v482 = vpop.permute.xlu0 %481
      %vm483 = vcmask 949248
      %v484 = vsel %vm483, %v474, %v476
      %v485 = vsel %vm483, %v476, %v478
      %v486 = vsel %vm483, %v478, %v480
      %v487 = vsel %vm483, %v480, %v482
      %492 = vrot.lane.b32.xlu0 %v386, 108
      %v493 = vpop.permute.xlu0 %492
      %494 = vrot.lane.b32.xlu0 %v387, 108
      %v495 = vpop.permute.xlu0 %494
      %496 = vrot.lane.b32.xlu0 %v388, 108
      %v497 = vpop.permute.xlu0 %496
      %498 = vrot.lane.b32.xlu0 %v389, 108
      %v499 = vpop.permute.xlu0 %498
      %500 = vrot.lane.b32.xlu0 %v390, 108
      %v501 = vpop.permute.xlu0 %500
      %vm502 = vcmask 883712
      %v503 = vsel %vm502, %v493, %v495
      %v504 = vsel %vm502, %v495, %v497
      %v505 = vsel %vm502, %v497, %v499
      %v506 = vsel %vm502, %v499, %v501
      %511 = vrot.lane.b32.xlu0 %v386, 107
      %v512 = vpop.permute.xlu0 %511
      %513 = vrot.lane.b32.xlu0 %v387, 107
      %v514 = vpop.permute.xlu0 %513
      %515 = vrot.lane.b32.xlu0 %v388, 107
      %v516 = vpop.permute.xlu0 %515
      %517 = vrot.lane.b32.xlu0 %v389, 107
      %v518 = vpop.permute.xlu0 %517
      %519 = vrot.lane.b32.xlu0 %v390, 107
      %v520 = vpop.permute.xlu0 %519
      %vm521 = vcmask 875520
      %v522 = vsel %vm521, %v512, %v514
      %v523 = vsel %vm521, %v514, %v516
      %v524 = vsel %vm521, %v516, %v518
      %v525 = vsel %vm521, %v518, %v520
      %530 = vrot.lane.b32.xlu0 %v386, 106
      %v531 = vpop.permute.xlu0 %530
      %532 = vrot.lane.b32.xlu0 %v387, 106
      %v533 = vpop.permute.xlu0 %532
      %534 = vrot.lane.b32.xlu0 %v388, 106
      %v535 = vpop.permute.xlu0 %534
      %536 = vrot.lane.b32.xlu0 %v389, 106
      %v537 = vpop.permute.xlu0 %536
      %538 = vrot.lane.b32.xlu0 %v390, 106
      %v539 = vpop.permute.xlu0 %538
      %vm540 = vcmask 867328
      %v541 = vsel %vm540, %v531, %v533
      %v542 = vsel %vm540, %v533, %v535
      %v543 = vsel %vm540, %v535, %v537
      %v544 = vsel %vm540, %v537, %v539
      %549 = vrot.lane.b32.xlu0 %v386, 28
      %v550 = vpop.permute.xlu0 %549
      %551 = vrot.lane.b32.xlu0 %v387, 28
      %v552 = vpop.permute.xlu0 %551
      %553 = vrot.lane.b32.xlu0 %v388, 28
      %v554 = vpop.permute.xlu0 %553
      %555 = vrot.lane.b32.xlu0 %v389, 28
      %v556 = vpop.permute.xlu0 %555
      %557 = vrot.lane.b32.xlu0 %v390, 28
      %v558 = vpop.permute.xlu0 %557
      %vm559 = vcmask 228352
      %v560 = vsel %vm559, %v550, %v552
      %v561 = vsel %vm559, %v552, %v554
      %v562 = vsel %vm559, %v554, %v556
      %v563 = vsel %vm559, %v556, %v558
      %568 = vrot.lane.b32.xlu0 %v386, 27
      %v569 = vpop.permute.xlu0 %568
      %570 = vrot.lane.b32.xlu0 %v387, 27
      %v571 = vpop.permute.xlu0 %570
      %572 = vrot.lane.b32.xlu0 %v388, 27
      %v573 = vpop.permute.xlu0 %572
      %574 = vrot.lane.b32.xlu0 %v389, 27
      %v575 = vpop.permute.xlu0 %574
      %576 = vrot.lane.b32.xlu0 %v390, 27
      %v577 = vpop.permute.xlu0 %576
      %vm578 = vcmask 220160
      %v579 = vsel %vm578, %v569, %v571
      %v580 = vsel %vm578, %v571, %v573
      %v581 = vsel %vm578, %v573, %v575
      %v582 = vsel %vm578, %v575, %v577
      %587 = vrot.lane.b32.xlu0 %v386, 26
      %v588 = vpop.permute.xlu0 %587
      %589 = vrot.lane.b32.xlu0 %v387, 26
      %v590 = vpop.permute.xlu0 %589
      %591 = vrot.lane.b32.xlu0 %v388, 26
      %v592 = vpop.permute.xlu0 %591
      %593 = vrot.lane.b32.xlu0 %v389, 26
      %v594 = vpop.permute.xlu0 %593
      %595 = vrot.lane.b32.xlu0 %v390, 26
      %v596 = vpop.permute.xlu0 %595
      %vm597 = vcmask 211968
      %v598 = vsel %vm597, %v588, %v590
      %v599 = vsel %vm597, %v590, %v592
      %v600 = vsel %vm597, %v592, %v594
      %v601 = vsel %vm597, %v594, %v596
      %606 = vrot.lane.b32.xlu0 %v386, 18
      %v607 = vpop.permute.xlu0 %606
      %608 = vrot.lane.b32.xlu0 %v387, 18
      %v609 = vpop.permute.xlu0 %608
      %610 = vrot.lane.b32.xlu0 %v388, 18
      %v611 = vpop.permute.xlu0 %610
      %612 = vrot.lane.b32.xlu0 %v389, 18
      %v613 = vpop.permute.xlu0 %612
      %614 = vrot.lane.b32.xlu0 %v390, 18
      %v615 = vpop.permute.xlu0 %614
      %vm616 = vcmask 146432
      %v617 = vsel %vm616, %v607, %v609
      %v618 = vsel %vm616, %v609, %v611
      %v619 = vsel %vm616, %v611, %v613
      %v620 = vsel %vm616, %v613, %v615
      %625 = vrot.lane.b32.xlu0 %v386, 17
      %v626 = vpop.permute.xlu0 %625
      %627 = vrot.lane.b32.xlu0 %v387, 17
      %v628 = vpop.permute.xlu0 %627
      %629 = vrot.lane.b32.xlu0 %v388, 17
      %v630 = vpop.permute.xlu0 %629
      %631 = vrot.lane.b32.xlu0 %v389, 17
      %v632 = vpop.permute.xlu0 %631
      %633 = vrot.lane.b32.xlu0 %v390, 17
      %v634 = vpop.permute.xlu0 %633
      %vm635 = vcmask 138240
      %v636 = vsel %vm635, %v626, %v628
      %v637 = vsel %vm635, %v628, %v630
      %v638 = vsel %vm635, %v630, %v632
      %v639 = vsel %vm635, %v632, %v634
      %644 = vrot.lane.b32.xlu0 %v386, 16
      %v645 = vpop.permute.xlu0 %644
      %646 = vrot.lane.b32.xlu0 %v387, 16
      %v647 = vpop.permute.xlu0 %646
      %648 = vrot.lane.b32.xlu0 %v388, 16
      %v649 = vpop.permute.xlu0 %648
      %650 = vrot.lane.b32.xlu0 %v389, 16
      %v651 = vpop.permute.xlu0 %650
      %652 = vrot.lane.b32.xlu0 %v390, 16
      %v653 = vpop.permute.xlu0 %652
      %vm654 = vcmask 130048
      %v655 = vsel %vm654, %v645, %v647
      %v656 = vsel %vm654, %v647, %v649
      %v657 = vsel %vm654, %v649, %v651
      %v658 = vsel %vm654, %v651, %v653
      %663 = vrot.lane.b32.xlu0 %v386, 8
      %v664 = vpop.permute.xlu0 %663
      %665 = vrot.lane.b32.xlu0 %v387, 8
      %v666 = vpop.permute.xlu0 %665
      %667 = vrot.lane.b32.xlu0 %v388, 8
      %v668 = vpop.permute.xlu0 %667
      %669 = vrot.lane.b32.xlu0 %v389, 8
      %v670 = vpop.permute.xlu0 %669
      %671 = vrot.lane.b32.xlu0 %v390, 8
      %v672 = vpop.permute.xlu0 %671
      %vm673 = vcmask 64512
      %v674 = vsel %vm673, %v664, %v666
      %v675 = vsel %vm673, %v666, %v668
      %v676 = vsel %vm673, %v668, %v670
      %v677 = vsel %vm673, %v670, %v672
      %683 = vrot.lane.b32.xlu0 %v387, 49
      %v684 = vpop.permute.xlu0 %683
      %685 = vrot.lane.b32.xlu0 %v388, 49
      %v686 = vpop.permute.xlu0 %685
      %687 = vrot.lane.b32.xlu0 %v389, 49
      %v688 = vpop.permute.xlu0 %687
      %689 = vrot.lane.b32.xlu0 %v390, 49
      %v690 = vpop.permute.xlu0 %689
      %691 = vrot.lane.b32.xlu0 %v391, 49
      %v692 = vpop.permute.xlu0 %691
      %vm693 = vcmask 400384
      %v694 = vsel %vm693, %v684, %v686
      %v695 = vsel %vm693, %v686, %v688
      %v696 = vsel %vm693, %v688, %v690
      %v697 = vsel %vm693, %v690, %v692
      %698 = vrot.lane.b32.xlu0 %v387, 48
      %v699 = vpop.permute.xlu0 %698
      %700 = vrot.lane.b32.xlu0 %v388, 48
      %v701 = vpop.permute.xlu0 %700
      %702 = vrot.lane.b32.xlu0 %v389, 48
      %v703 = vpop.permute.xlu0 %702
      %704 = vrot.lane.b32.xlu0 %v390, 48
      %v705 = vpop.permute.xlu0 %704
      %706 = vrot.lane.b32.xlu0 %v391, 48
      %v707 = vpop.permute.xlu0 %706
      %vm708 = vcmask 392192
      %v709 = vsel %vm708, %v699, %v701
      %v710 = vsel %vm708, %v701, %v703
      %v711 = vsel %vm708, %v703, %v705
      %v712 = vsel %vm708, %v705, %v707
      %713 = vrot.lane.b32.xlu0 %v387, 47
      %v714 = vpop.permute.xlu0 %713
      %715 = vrot.lane.b32.xlu0 %v388, 47
      %v716 = vpop.permute.xlu0 %715
      %717 = vrot.lane.b32.xlu0 %v389, 47
      %v718 = vpop.permute.xlu0 %717
      %719 = vrot.lane.b32.xlu0 %v390, 47
      %v720 = vpop.permute.xlu0 %719
      %721 = vrot.lane.b32.xlu0 %v391, 47
      %v722 = vpop.permute.xlu0 %721
      %vm723 = vcmask 384000
      %v724 = vsel %vm723, %v714, %v716
      %v725 = vsel %vm723, %v716, %v718
      %v726 = vsel %vm723, %v718, %v720
      %v727 = vsel %vm723, %v720, %v722
      %728 = vrot.lane.b32.xlu0 %v387, 39
      %v729 = vpop.permute.xlu0 %728
      %730 = vrot.lane.b32.xlu0 %v388, 39
      %v731 = vpop.permute.xlu0 %730
      %732 = vrot.lane.b32.xlu0 %v389, 39
      %v733 = vpop.permute.xlu0 %732
      %734 = vrot.lane.b32.xlu0 %v390, 39
      %v735 = vpop.permute.xlu0 %734
      %736 = vrot.lane.b32.xlu0 %v391, 39
      %v737 = vpop.permute.xlu0 %736
      %vm738 = vcmask 318464
      %v739 = vsel %vm738, %v729, %v731
      %v740 = vsel %vm738, %v731, %v733
      %v741 = vsel %vm738, %v733, %v735
      %v742 = vsel %vm738, %v735, %v737
      %743 = vrot.lane.b32.xlu0 %v387, 38
      %v744 = vpop.permute.xlu0 %743
      %745 = vrot.lane.b32.xlu0 %v388, 38
      %v746 = vpop.permute.xlu0 %745
      %747 = vrot.lane.b32.xlu0 %v389, 38
      %v748 = vpop.permute.xlu0 %747
      %749 = vrot.lane.b32.xlu0 %v390, 38
      %v750 = vpop.permute.xlu0 %749
      %751 = vrot.lane.b32.xlu0 %v391, 38
      %v752 = vpop.permute.xlu0 %751
      %vm753 = vcmask 310272
      %v754 = vsel %vm753, %v744, %v746
      %v755 = vsel %vm753, %v746, %v748
      %v756 = vsel %vm753, %v748, %v750
      %v757 = vsel %vm753, %v750, %v752
      %758 = vrot.lane.b32.xlu0 %v387, 37
      %v759 = vpop.permute.xlu0 %758
      %760 = vrot.lane.b32.xlu0 %v388, 37
      %v761 = vpop.permute.xlu0 %760
      %762 = vrot.lane.b32.xlu0 %v389, 37
      %v763 = vpop.permute.xlu0 %762
      %764 = vrot.lane.b32.xlu0 %v390, 37
      %v765 = vpop.permute.xlu0 %764
      %766 = vrot.lane.b32.xlu0 %v391, 37
      %v767 = vpop.permute.xlu0 %766
      %vm768 = vcmask 302080
      %v769 = vsel %vm768, %v759, %v761
      %v770 = vsel %vm768, %v761, %v763
      %v771 = vsel %vm768, %v763, %v765
      %v772 = vsel %vm768, %v765, %v767
      %773 = vrot.lane.b32.xlu0 %v387, 29
      %v774 = vpop.permute.xlu0 %773
      %775 = vrot.lane.b32.xlu0 %v388, 29
      %v776 = vpop.permute.xlu0 %775
      %777 = vrot.lane.b32.xlu0 %v389, 29
      %v778 = vpop.permute.xlu0 %777
      %779 = vrot.lane.b32.xlu0 %v390, 29
      %v780 = vpop.permute.xlu0 %779
      %781 = vrot.lane.b32.xlu0 %v391, 29
      %v782 = vpop.permute.xlu0 %781
      %vm783 = vcmask 236544
      %v784 = vsel %vm783, %v774, %v776
      %v785 = vsel %vm783, %v776, %v778
      %v786 = vsel %vm783, %v778, %v780
      %v787 = vsel %vm783, %v780, %v782
      %788 = vrot.lane.b32.xlu0 %v391, 28
      %v789 = vpop.permute.xlu0 %788
      %v790 = vsel %vm559, %v558, %v789
      %791 = vrot.lane.b32.xlu0 %v391, 27
      %v792 = vpop.permute.xlu0 %791
      %v793 = vsel %vm578, %v577, %v792
      %794 = vrot.lane.b32.xlu0 %v386, 7
      %v795 = vpop.permute.xlu0 %794
      %796 = vrot.lane.b32.xlu0 %v387, 7
      %v797 = vpop.permute.xlu0 %796
      %798 = vrot.lane.b32.xlu0 %v388, 7
      %v799 = vpop.permute.xlu0 %798
      %800 = vrot.lane.b32.xlu0 %v389, 7
      %v801 = vpop.permute.xlu0 %800
      %802 = vrot.lane.b32.xlu0 %v390, 7
      %v803 = vpop.permute.xlu0 %802
      %804 = vrot.lane.b32.xlu0 %v408, 7
      %v805 = vpop.permute.xlu0 %804
      %806 = vrot.lane.b32.xlu0 %v409, 7
      %v807 = vpop.permute.xlu0 %806
      %808 = vrot.lane.b32.xlu0 %v410, 7
      %v809 = vpop.permute.xlu0 %808
      %810 = vrot.lane.b32.xlu0 %v411, 7
      %v811 = vpop.permute.xlu0 %810
      %812 = vrot.lane.b32.xlu0 %v406, 7
      %v813 = vpop.permute.xlu0 %812
      %814 = vrot.lane.b32.xlu0 %v684, 7
      %v815 = vpop.permute.xlu0 %814
      %816 = vrot.lane.b32.xlu0 %v694, 7
      %v817 = vpop.permute.xlu0 %816
      %818 = vrot.lane.b32.xlu0 %v695, 7
      %v819 = vpop.permute.xlu0 %818
      %820 = vrot.lane.b32.xlu0 %v696, 7
      %v821 = vpop.permute.xlu0 %820
      %822 = vrot.lane.b32.xlu0 %v697, 7
      %v823 = vpop.permute.xlu0 %822
      %824 = vrot.lane.b32.xlu0 %v699, 7
      %v825 = vpop.permute.xlu0 %824
      %826 = vrot.lane.b32.xlu0 %v709, 7
      %v827 = vpop.permute.xlu0 %826
      %828 = vrot.lane.b32.xlu0 %v710, 7
      %v829 = vpop.permute.xlu0 %828
      %830 = vrot.lane.b32.xlu0 %v711, 7
      %v831 = vpop.permute.xlu0 %830
      %832 = vrot.lane.b32.xlu0 %v712, 7
      %v833 = vpop.permute.xlu0 %832
      %834 = vrot.lane.b32.xlu0 %v714, 7
      %v835 = vpop.permute.xlu0 %834
      %836 = vrot.lane.b32.xlu0 %v724, 7
      %v837 = vpop.permute.xlu0 %836
      %838 = vrot.lane.b32.xlu0 %v725, 7
      %v839 = vpop.permute.xlu0 %838
      %840 = vrot.lane.b32.xlu0 %v726, 7
      %v841 = vpop.permute.xlu0 %840
      %842 = vrot.lane.b32.xlu0 %v727, 7
      %v843 = vpop.permute.xlu0 %842
      %844 = vrot.lane.b32.xlu0 %v729, 7
      %v845 = vpop.permute.xlu0 %844
      %846 = vrot.lane.b32.xlu0 %v739, 7
      %v847 = vpop.permute.xlu0 %846
      %848 = vrot.lane.b32.xlu0 %v740, 7
      %v849 = vpop.permute.xlu0 %848
      %850 = vrot.lane.b32.xlu0 %v741, 7
      %v851 = vpop.permute.xlu0 %850
      %852 = vrot.lane.b32.xlu0 %v742, 7
      %v853 = vpop.permute.xlu0 %852
      %854 = vrot.lane.b32.xlu0 %v744, 7
      %v855 = vpop.permute.xlu0 %854
      %856 = vrot.lane.b32.xlu0 %v754, 7
      %v857 = vpop.permute.xlu0 %856
      %858 = vrot.lane.b32.xlu0 %v755, 7
      %v859 = vpop.permute.xlu0 %858
      %860 = vrot.lane.b32.xlu0 %v756, 7
      %v861 = vpop.permute.xlu0 %860
      %862 = vrot.lane.b32.xlu0 %v757, 7
      %v863 = vpop.permute.xlu0 %862
      %864 = vrot.lane.b32.xlu0 %v759, 7
      %v865 = vpop.permute.xlu0 %864
      %866 = vrot.lane.b32.xlu0 %v769, 7
      %v867 = vpop.permute.xlu0 %866
      %868 = vrot.lane.b32.xlu0 %v770, 7
      %v869 = vpop.permute.xlu0 %868
      %870 = vrot.lane.b32.xlu0 %v771, 7
      %v871 = vpop.permute.xlu0 %870
      %872 = vrot.lane.b32.xlu0 %v772, 7
      %v873 = vpop.permute.xlu0 %872
      %874 = vrot.lane.b32.xlu0 %v774, 7
      %v875 = vpop.permute.xlu0 %874
      %876 = vrot.lane.b32.xlu0 %v784, 7
      %v877 = vpop.permute.xlu0 %876
      %878 = vrot.lane.b32.xlu0 %v785, 7
      %v879 = vpop.permute.xlu0 %878
      %880 = vrot.lane.b32.xlu0 %v786, 7
      %v881 = vpop.permute.xlu0 %880
      %882 = vrot.lane.b32.xlu0 %v787, 7
      %v883 = vpop.permute.xlu0 %882
      %884 = vrot.lane.b32.xlu0 %v552, 7
      %v885 = vpop.permute.xlu0 %884
      %886 = vrot.lane.b32.xlu0 %v561, 7
      %v887 = vpop.permute.xlu0 %886
      %888 = vrot.lane.b32.xlu0 %v562, 7
      %v889 = vpop.permute.xlu0 %888
      %890 = vrot.lane.b32.xlu0 %v563, 7
      %v891 = vpop.permute.xlu0 %890
      %892 = vrot.lane.b32.xlu0 %v790, 7
      %v893 = vpop.permute.xlu0 %892
      %894 = vrot.lane.b32.xlu0 %v571, 7
      %v895 = vpop.permute.xlu0 %894
      %896 = vrot.lane.b32.xlu0 %v580, 7
      %v897 = vpop.permute.xlu0 %896
      %898 = vrot.lane.b32.xlu0 %v581, 7
      %v899 = vpop.permute.xlu0 %898
      %900 = vrot.lane.b32.xlu0 %v582, 7
      %v901 = vpop.permute.xlu0 %900
      %902 = vrot.lane.b32.xlu0 %v793, 7
      %v903 = vpop.permute.xlu0 %902
      %vm904 = vcmask 56320
      %v905 = vsel %vm904, %v795, %v797
      %v906 = vsel %vm904, %v797, %v799
      %v907 = vsel %vm904, %v799, %v801
      %v908 = vsel %vm904, %v801, %v803
      %v909 = vsel %vm904, %v805, %v807
      %v910 = vsel %vm904, %v807, %v809
      %v911 = vsel %vm904, %v809, %v811
      %v912 = vsel %vm904, %v811, %v813
      %v913 = vsel %vm904, %v815, %v817
      %v914 = vsel %vm904, %v817, %v819
      %v915 = vsel %vm904, %v819, %v821
      %v916 = vsel %vm904, %v821, %v823
      %v917 = vsel %vm904, %v825, %v827
      %v918 = vsel %vm904, %v827, %v829
      %v919 = vsel %vm904, %v829, %v831
      %v920 = vsel %vm904, %v831, %v833
      %v921 = vsel %vm904, %v835, %v837
      %v922 = vsel %vm904, %v837, %v839
      %v923 = vsel %vm904, %v839, %v841
      %v924 = vsel %vm904, %v841, %v843
      %v925 = vsel %vm904, %v845, %v847
      %v926 = vsel %vm904, %v847, %v849
      %v927 = vsel %vm904, %v849, %v851
      %v928 = vsel %vm904, %v851, %v853
      %v929 = vsel %vm904, %v855, %v857
      %v930 = vsel %vm904, %v857, %v859
      %v931 = vsel %vm904, %v859, %v861
      %v932 = vsel %vm904, %v861, %v863
      %v933 = vsel %vm904, %v865, %v867
      %v934 = vsel %vm904, %v867, %v869
      %v935 = vsel %vm904, %v869, %v871
      %v936 = vsel %vm904, %v871, %v873
      %v937 = vsel %vm904, %v875, %v877
      %v938 = vsel %vm904, %v877, %v879
      %v939 = vsel %vm904, %v879, %v881
      %v940 = vsel %vm904, %v881, %v883
      %v941 = vsel %vm904, %v885, %v887
      %v942 = vsel %vm904, %v887, %v889
      %v943 = vsel %vm904, %v889, %v891
      %v944 = vsel %vm904, %v891, %v893
      %v945 = vsel %vm904, %v895, %v897
      %v946 = vsel %vm904, %v897, %v899
      %v947 = vsel %vm904, %v899, %v901
      %v948 = vsel %vm904, %v901, %v903
      %v993 = vld [vmem:[%s1] sm:$0xff]
      %v994 = vld [vmem:[%s1 + $0x8] sm:$0xff]
      %vm995 = vcmask 719872
      %v997 = vsel %vm995, %v994, 0
      %999 = vmatprep.subr.mxu0 %v387
      %1000 = vmatpush1.msra.mxu0 %v386
      %1001 = vmatprep.subr.mxu0 %v409
      %1002 = vmatpush1.msra.mxu0 %v408
      %1003 = vmatprep.subr.mxu0 %v428
      %1004 = vmatpush1.msra.mxu0 %v427
      %1005 = vmatprep.subr.mxu0 %v447
      %1006 = vmatpush1.msra.mxu0 %v446
      %1007 = vmatprep.subr.mxu0 %v466
      %1008 = vmatpush1.msra.mxu0 %v465
      %1009 = vmatprep.subr.mxu0 %v485
      %1010 = vmatpush1.msra.mxu0 %v484
      %1011 = vmatprep.subr.mxu0 %v504
      %1012 = vmatpush1.msra.mxu0 %v503
      %1013 = vmatprep.subr.mxu0 %v523
      %1014 = vmatpush1.msra.mxu0 %v522
      %1015 = vmatprep.subr.mxu0 %v542
      %1016 = vmatpush1.msra.mxu0 %v541
      %1017 = vmatprep.subr.mxu0 %v561
      %1018 = vmatpush1.msra.mxu0 %v560
      %1019 = vmatprep.subr.mxu0 %v580
      %1020 = vmatpush1.msra.mxu0 %v579
      %1021 = vmatprep.subr.mxu0 %v599
      %1022 = vmatpush1.msra.mxu0 %v598
      %1023 = vmatprep.subr.mxu0 %v618
      %1024 = vmatpush1.msra.mxu0 %v617
      %1025 = vmatprep.subr.mxu0 %v637
      %1026 = vmatpush1.msra.mxu0 %v636
      %1027 = vmatprep.subr.mxu0 %v656
      %1028 = vmatpush1.msra.mxu0 %v655
      %1029 = vmatprep.subr.mxu0 %v675
      %1030 = vmatpush1.msra.mxu0 %v674
      %1031 = vmatprep.subr.mxu0 %v906
      %1032 = vmatpush1.msra.mxu0 %v905
      %1033 = vmatprep.subr.mxu0 %v910
      %1034 = vmatpush1.msra.mxu0 %v909
      %1035 = vmatprep.subr.mxu0 %v914
      %1036 = vmatpush1.msra.mxu0 %v913
      %1037 = vmatprep.subr.mxu0 %v918
      %1038 = vmatpush1.msra.mxu0 %v917
      %1039 = vmatprep.subr.mxu0 %v922
      %1040 = vmatpush1.msra.mxu0 %v921
      %1041 = vmatprep.subr.mxu0 %v926
      %1042 = vmatpush1.msra.mxu0 %v925
      %1043 = vmatprep.subr.mxu0 %v930
      %1044 = vmatpush1.msra.mxu0 %v929
      %1045 = vmatprep.subr.mxu0 %v934
      %1046 = vmatpush1.msra.mxu0 %v933
      %1047 = vmatprep.subr.mxu0 %v938
      %1048 = vmatpush1.msra.mxu0 %v937
      %1049 = vmatprep.subr.mxu0 %v942
      %1050 = vmatpush1.msra.mxu0 %v941
      %1051 = vmatprep.subr.mxu0 %v946
      %1052 = vmatpush1.msra.mxu0 %v945
      %1053 = vmatprep.subr.mxu0 0.0
      %1054 = vmatpush1.msra.mxu0 0.0
      %1055 = vmatprep.subr.mxu0 0.0
      %1056 = vmatpush1.msra.mxu0 0.0
      %1057 = vmatprep.subr.mxu0 0.0
      %1058 = vmatpush1.msra.mxu0 0.0
      %1059 = vmatprep.subr.mxu0 0.0
      %1060 = vmatpush1.msra.mxu0 0.0
      %1061 = vmatprep.subr.mxu0 0.0
      %1062 = vmatpush1.msra.mxu0 0.0
      %1063 = vmatprep.mubr.f32.mxu0 %v997
      %1064 = vmatmul.mubr.f32.gmra.mrb[0].mxu0 %v993
      %v1065 = vpop.f32.mrb[0].mxu0
      %v1066 = vadd.f32 0.0, %v1065
      %v1067 = vpop.f32.mrb[0].mxu0
      %v1068 = vadd.f32 0.0, %v1067
      %1069 = vdwg.mxu0
      %1070 = vmatprep.subr.mxu0 %v389
      %1071 = vmatpush1.msra.mxu0 %v388
      %1072 = vmatprep.subr.mxu0 %v411
      %1073 = vmatpush1.msra.mxu0 %v410
      %1074 = vmatprep.subr.mxu0 %v430
      %1075 = vmatpush1.msra.mxu0 %v429
      %1076 = vmatprep.subr.mxu0 %v449
      %1077 = vmatpush1.msra.mxu0 %v448
      %1078 = vmatprep.subr.mxu0 %v468
      %1079 = vmatpush1.msra.mxu0 %v467
      %1080 = vmatprep.subr.mxu0 %v487
      %1081 = vmatpush1.msra.mxu0 %v486
      %1082 = vmatprep.subr.mxu0 %v506
      %1083 = vmatpush1.msra.mxu0 %v505
      %1084 = vmatprep.subr.mxu0 %v525
      %1085 = vmatpush1.msra.mxu0 %v524
      %1086 = vmatprep.subr.mxu0 %v544
      %1087 = vmatpush1.msra.mxu0 %v543
      %1088 = vmatprep.subr.mxu0 %v563
      %1089 = vmatpush1.msra.mxu0 %v562
      %1090 = vmatprep.subr.mxu0 %v582
      %1091 = vmatpush1.msra.mxu0 %v581
      %1092 = vmatprep.subr.mxu0 %v601
      %1093 = vmatpush1.msra.mxu0 %v600
      %1094 = vmatprep.subr.mxu0 %v620
      %1095 = vmatpush1.msra.mxu0 %v619
      %1096 = vmatprep.subr.mxu0 %v639
      %1097 = vmatpush1.msra.mxu0 %v638
      %1098 = vmatprep.subr.mxu0 %v658
      %1099 = vmatpush1.msra.mxu0 %v657
      %1100 = vmatprep.subr.mxu0 %v677
      %1101 = vmatpush1.msra.mxu0 %v676
      %1102 = vmatprep.subr.mxu0 %v908
      %1103 = vmatpush1.msra.mxu0 %v907
      %1104 = vmatprep.subr.mxu0 %v912
      %1105 = vmatpush1.msra.mxu0 %v911
      %1106 = vmatprep.subr.mxu0 %v916
      %1107 = vmatpush1.msra.mxu0 %v915
      %1108 = vmatprep.subr.mxu0 %v920
      %1109 = vmatpush1.msra.mxu0 %v919
      %1110 = vmatprep.subr.mxu0 %v924
      %1111 = vmatpush1.msra.mxu0 %v923
      %1112 = vmatprep.subr.mxu0 %v928
      %1113 = vmatpush1.msra.mxu0 %v927
      %1114 = vmatprep.subr.mxu0 %v932
      %1115 = vmatpush1.msra.mxu0 %v931
      %1116 = vmatprep.subr.mxu0 %v936
      %1117 = vmatpush1.msra.mxu0 %v935
      %1118 = vmatprep.subr.mxu0 %v940
      %1119 = vmatpush1.msra.mxu0 %v939
      %1120 = vmatprep.subr.mxu0 %v944
      %1121 = vmatpush1.msra.mxu0 %v943
      %1122 = vmatprep.subr.mxu0 %v948
      %1123 = vmatpush1.msra.mxu0 %v947
      %1124 = vmatprep.subr.mxu0 0.0
      %1125 = vmatpush1.msra.mxu0 0.0
      %1126 = vmatprep.subr.mxu0 0.0
      %1127 = vmatpush1.msra.mxu0 0.0
      %1128 = vmatprep.subr.mxu0 0.0
      %1129 = vmatpush1.msra.mxu0 0.0
      %1130 = vmatprep.subr.mxu0 0.0
      %1131 = vmatpush1.msra.mxu0 0.0
      %1132 = vmatprep.subr.mxu0 0.0
      %1133 = vmatpush1.msra.mxu0 0.0
      %1134 = vmatprep.mubr.f32.mxu0 %v997
      %1135 = vmatmul.mubr.f32.gmra.mrb[0].mxu0 %v993
      %v1136 = vpop.f32.mrb[0].mxu0
      %v1137 = vadd.f32 0.0, %v1136
      %v1138 = vpop.f32.mrb[0].mxu0
      %v1139 = vadd.f32 0.0, %v1138
      %1140 = vdwg.mxu0
      %v1141 = vld [vmem:[%s349] sm:$0xff]
      %1143 = vset.pattern.permute.xlu0 0
      %1144 = vperm.xlu0 %1143, %v1141
      %v1145 = vpop.permute.xlu0 %1144
      %v1147 = vmul.f32 %v1066, %v1145
      %v1148 = vmul.f32 %v1068, %v1145
      %v1149 = vmul.f32 %v1137, %v1145
      %v1150 = vmul.f32 %v1139, %v1145
      %v1151 = vld [vmem:[%s357] sm:$0xf]
      %v1152 = vld [vmem:[%s5] sm:$0xff]
      %v1154 = vlaneseq
      %v1155 = vshrl.u32 %v1154, 7
      %v1156 = vsub.s32 0, %v1155
      %v1157 = vrot.slane %v1151, %v1156
      %v1158 = vlaneseq
      %v1159 = vshrl.u32 %v1158, 7
      %v1160 = vsub.s32 1, %v1159
      %v1161 = vrot.slane %v1151, %v1160
      %v1162 = vlaneseq
      %v1163 = vshrl.u32 %v1162, 7
      %v1164 = vsub.s32 2, %v1163
      %v1165 = vrot.slane %v1151, %v1164
      %v1166 = vlaneseq
      %v1167 = vshrl.u32 %v1166, 7
      %v1168 = vsub.s32 3, %v1167
      %v1169 = vrot.slane %v1151, %v1168
      %1175 = vset.pattern.permute.xlu0 0
      %1176 = vperm.xlu0 %1175, %v1152
      %v1177 = vpop.permute.xlu0 %1176
      %v1179 = vmul.f32 %v1157, %v1177
      %v1180 = vmul.f32 %v1161, %v1177
      %v1181 = vmul.f32 %v1165, %v1177
      %v1182 = vmul.f32 %v1169, %v1177
      %v1183 = vadd.f32 %v1147, %v1179
      %v1184 = vadd.f32 %v1148, %v1180
      %v1185 = vadd.f32 %v1149, %v1181
      %v1186 = vadd.f32 %v1150, %v1182
      %v1187 = vld [vmem:[%s6] sm:$0xff]
      %1189 = vset.pattern.permute.xlu0 0
      %1190 = vperm.xlu0 %1189, %v1187
      %v1191 = vpop.permute.xlu0 %1190
      %v1193 = vadd.f32 %v1183, %v1191
      %v1194 = vadd.f32 %v1184, %v1191
      %v1195 = vadd.f32 %v1185, %v1191
      %v1196 = vadd.f32 %v1186, %v1191
      %vm1197 = vcmp.gt.f32.partialorder %v1193, 0.0
      %vm1198 = vcmp.gt.f32.partialorder %v1194, 0.0
      %vm1199 = vcmp.gt.f32.partialorder %v1195, 0.0
      %vm1200 = vcmp.gt.f32.partialorder %v1196, 0.0
      %v1201 = vmul.f32 %v1193, 0.2
      %v1202 = vmul.f32 %v1194, 0.2
      %v1203 = vmul.f32 %v1195, 0.2
      %v1204 = vmul.f32 %v1196, 0.2
      %v1205 = vsel %vm1197, %v1193, %v1201
      %v1206 = vsel %vm1198, %v1194, %v1202
      %v1207 = vsel %vm1199, %v1195, %v1203
      %v1208 = vsel %vm1200, %v1196, %v1204
      %1209 = vst [vmem:[%s367] sm:$0xff] %v1205
      %1210 = vst [vmem:[%s367 + $0x8] sm:$0xff] %v1206
      %1211 = vst [vmem:[%s367 + $0x10] sm:$0xff] %v1207
      %1212 = vst [vmem:[%s367 + $0x18] sm:$0xff] %v1208
      %s1213 = smul.u32 4, %s23
      %p1214 = scmp.lt.s32.totalorder %s22, 1
      %s1215 = scalar_select %p1214, %s22, 1
      %p1216 = scmp.lt.s32.totalorder %s1213, 7
      %s1217 = scalar_select %p1216, %s1213, 7
      %s1218 = smul.addr %s1215, 8
      %s1219 = sadd.s32 %s1217, %s1218
      %s1220 = smul.addr %s1219, 8
      %s1221 = scalar_lea.vmem %s7, %s1220
      // Predicated region
      $region49: #{generator_block_forward.5} parent=47 // pred_check
        %p1222 = pneg %p219
      $region50: #{generator_block_forward.5} parent=47 // pred_check_branch
        %1224 = sbr.rel (%p1222) target = $region52
      $region51: #{generator_block_forward.5} parent=47 // pred_region
        %s1225 = smul.u32 4, %s23
      $region52: #{generator_block_forward.5} parent=47 // pred_fallthru
        _
    $region48: #{generator_block_forward.5} parent=5 // pred_fallthru
      _
    %p1226 = scmp.le.s32.totalorder 2, %s13
    // Predicated region
    $region53: #{generator_block_forward.5} parent=5 // pred_check
      %p1227 = pneg %p1226
    $region54: #{generator_block_forward.5} parent=5 // pred_check_branch
      %1229 = sbr.rel (%p1227) target = $region56
    $region55: #{generator_block_forward.5} parent=5 // pred_region
      %s1230 = ssub.s32 %s13, 2
      // Predicated region
      $region57: #{generator_block_forward.5} parent=55 // pred_check
        %p1231 = pneg %p225
      $region58: #{generator_block_forward.5} parent=55 // pred_check_branch
        %1233 = sbr.rel (%p1231) target = $region60
      $region59: #{generator_block_forward.5} parent=55 // pred_region
        %s1234 = smul.u32 4, %s25
        %p1235 = scmp.lt.s32.totalorder %s24, 1
        %s1236 = scalar_select %p1235, %s24, 1
        %p1237 = scmp.lt.s32.totalorder %s1234, 7
        %s1238 = scalar_select %p1237, %s1234, 7
        %s1239 = smul.addr %s1236, 8
        %s1240 = sadd.s32 %s1238, %s1239
        %s1241 = smul.addr %s1240, 8
        %s1242 = scalar_lea.vmem %s7, %s1241
      $region60: #{generator_block_forward.5} parent=55 // pred_fallthru
        _
    $region56: #{generator_block_forward.5} parent=5 // pred_fallthru
      _
  $region6: #{generator_block_forward.5} parent=0 // loop_footer
    %s17 = sadd.s32 1, %s13
  $region7: #{generator_block_forward.5} parent=0 // loop_footer_branch
    %12 = sbr.rel target = $region3
  $region8: #{generator_block_forward.5} parent=0 // loop_exit
    _

// kernel: generator_block_forward.6
$region0: #{generator_block_forward.6}
  #allocation0 [shape = 'u32[]', space=smem, size = 0x4, offset = 0x4, fixed_abs, tag = 'smem constant byte address 0x4 - core index']
  #allocation1 [shape = 'u32[144,128]{1,0:T(1,128)}', space=vmem, size = 0x12000, scoped, tag = 'internal scratch']
  %s0 = inlined_call_operand.vmem [shape: f32[2,8,1280], index: 0, kind: input, shape index: {}]
  %s1 = inlined_call_operand.vmem [shape: f32[8,216], index: 1, kind: input, shape index: {}]
  %s2 = inlined_call_operand.vmem [shape: f32[2,8,1], index: 2, kind: input, shape index: {}]
  %s3 = inlined_call_operand.vmem [shape: f32[2,8,1], index: 3, kind: input, shape index: {}]
  %s4 = inlined_call_operand.vmem [shape: f32[2,1,1024], index: 4, kind: input, shape index: {}]
  %s5 = inlined_call_operand.vmem [shape: f32[8,1], index: 5, kind: input, shape index: {}]
  %s6 = inlined_call_operand.vmem [shape: f32[8,1], index: 6, kind: input, shape index: {}]
  %s7 = inlined_call_operand.vmem [shape: f32[2,8,1], index: 7, kind: input, shape index: {}]
  %s8 = inlined_call_operand.vmem [shape: f32[2,1,1024], index: 8, kind: input, shape index: {}]
  %s9 = inlined_call_operand.vmem [shape: f32[2,8,1024], index: 9, kind: output, shape index: {0}]
  %s10 = inlined_call_operand.vmem [shape: f32[2,1,1024], index: 10, kind: output, shape index: {1}]
  %11 = xla_tuple %s9, %s10
  %s12 = sld [smem:[#allocation0]]
  $region77: #{generator_block_forward.6} parent=0
    _
  %s14 = ssub.s32 1, %s12
  %s15 = scalar_select 0, %s14, %s12
  loop: start=0, step=1, limit=6
  $region2: #{generator_block_forward.6} parent=0 // loop_pre_header
    _
  $region3: #{generator_block_forward.6} parent=0 // loop_header
    %s17 = sphi 0, %s21
    %p18 = scmp.ge.s32.totalorder %s17, 6
    %s24 = sphi 0, %s36
    %s25 = sphi 0, %s32
    %s26 = sphi 0, %s24
    %s27 = sphi 0, %s25
    %s28 = sphi 0, %s26
    %s29 = sphi 0, %s27
    %s39 = sphi 0, %s41
    %s42 = sphi 0, %s39
    %s43 = sphi 0, %s42
    %s59 = sphi 0, %s43
    %s63 = sphi 0, %s63
    %s65 = sphi 0, %s63
    %s66 = sphi 0, %s65
    %s80 = sphi 0, %s66
    %s86 = sphi 0, %s88
    %s89 = sphi 0, %s86
    %s90 = sphi 0, %s89
    %s106 = sphi 0, %s90
    %s112 = sphi 0, %s114
    %s115 = sphi 0, %s112
    %s116 = sphi 0, %s115
    %s132 = sphi 0, %s116
    %s140 = sphi 0, %s142
    %s143 = sphi 0, %s140
    %s144 = sphi 0, %s143
    %s160 = sphi 0, %s144
    %s164 = sphi 0, %s164
    %s166 = sphi 0, %s164
    %s167 = sphi 0, %s166
    %s181 = sphi 0, %s167
    %s185 = sphi 0, %s185
    %s187 = sphi 0, %s185
    %s188 = sphi 0, %s187
    %s202 = sphi 0, %s188
    %s208 = sphi 0, %s210
    %s211 = sphi 0, %s208
    %s212 = sphi 0, %s211
    %s228 = sphi 0, %s212
    %s236 = sphi 0, %s238
    %s239 = sphi 0, %s236
    %s240 = sphi 0, %s239
    %s256 = sphi 0, %s240
    %s264 = sphi 0, %s266
    %s267 = sphi 0, %s264
    %s268 = sphi 0, %s267
    %s284 = sphi 0, %s268
    %s292 = sphi 0, %s294
    %s295 = sphi 0, %s292
    %s296 = sphi 0, %s295
    %s312 = sphi 0, %s296
  $region4: #{generator_block_forward.6} parent=0 // loop_header_branch
    %20 = sbr.rel (%p18) target = $region8
  $region5: #{generator_block_forward.6} parent=0 // loop_body
    %s22 = ssub.s32 %s17, 1
    %s23 = ssub.s32 %s17, 2
    %s30 = sadd.s32 1, %s25
    %p31 = scmp.ge.s32.totalorder %s30, 2
    %s32 = scalar_select %p31, 0, %s30
    %s33 = sadd.s32 1, %s24
    %s34 = scalar_select %p31, %s33, %s24
    %p35 = scmp.ge.s32.totalorder %s34, 2
    %s36 = scalar_select %p35, 0, %s34
    %s37 = ssub.s32 %s24, %s36
    %p38 = scmp.eq.s32.totalorder %s37, 0
    %s40 = sadd.s32 %s39, 1
    %s41 = scalar_select %p38, %s39, %s40
    %p44 = pneg %p38
    %p45 = scmp.eq.s32.totalorder %s17, 3
    %p46 = por %p44, %p45
    %p47 = scmp.ne.s32.totalorder %s39, %s42
    %p48 = scmp.eq.s32.totalorder %s17, 0
    %p49 = por %p47, %p48
    %p50 = scmp.ne.s32.totalorder %s39, %s42
    %p51 = scmp.eq.s32.totalorder %s22, 3
    %p52 = por %p50, %p51
    %p53 = scmp.ne.s32.totalorder %s42, %s43
    %p54 = scmp.eq.s32.totalorder %s22, 0
    %p55 = por %p53, %p54
    %p56 = scmp.ne.s32.totalorder %s42, %s43
    %p57 = scmp.eq.s32.totalorder %s23, 3
    %p58 = por %p56, %p57
    %p60 = scmp.ne.s32.totalorder %s43, %s59
    %p61 = scmp.eq.s32.totalorder %s23, 0
    %p62 = por %p60, %p61
    %s64 = sadd.s32 %s63, 1
    %p67 = scmp.eq.s32.totalorder %s17, 3
    %p68 = scmp.ne.s32.totalorder %s63, %s65
    %p69 = scmp.eq.s32.totalorder %s17, 0
    %p70 = por %p68, %p69
    %p71 = scmp.ne.s32.totalorder %s63, %s65
    %p72 = scmp.eq.s32.totalorder %s22, 3
    %p73 = por %p71, %p72
    %p74 = scmp.ne.s32.totalorder %s65, %s66
    %p75 = scmp.eq.s32.totalorder %s22, 0
    %p76 = por %p74, %p75
    %p77 = scmp.ne.s32.totalorder %s65, %s66
    %p78 = scmp.eq.s32.totalorder %s23, 3
    %p79 = por %p77, %p78
    %p81 = scmp.ne.s32.totalorder %s66, %s80
    %p82 = scmp.eq.s32.totalorder %s23, 0
    %p83 = por %p81, %p82
    %s84 = ssub.s32 %s24, %s36
    %p85 = scmp.eq.s32.totalorder %s84, 0
    %s87 = sadd.s32 %s86, 1
    %s88 = scalar_select %p85, %s86, %s87
    %p91 = pneg %p85
    %p92 = scmp.eq.s32.totalorder %s17, 3
    %p93 = por %p91, %p92
    %p94 = scmp.ne.s32.totalorder %s86, %s89
    %p95 = scmp.eq.s32.totalorder %s17, 0
    %p96 = por %p94, %p95
    %p97 = scmp.ne.s32.totalorder %s86, %s89
    %p98 = scmp.eq.s32.totalorder %s22, 3
    %p99 = por %p97, %p98
    %p100 = scmp.ne.s32.totalorder %s89, %s90
    %p101 = scmp.eq.s32.totalorder %s22, 0
    %p102 = por %p100, %p101
    %p103 = scmp.ne.s32.totalorder %s89, %s90
    %p104 = scmp.eq.s32.totalorder %s23, 3
    %p105 = por %p103, %p104
    %p107 = scmp.ne.s32.totalorder %s90, %s106
    %p108 = scmp.eq.s32.totalorder %s23, 0
    %p109 = por %p107, %p108
    %s110 = ssub.s32 %s24, %s36
    %p111 = scmp.eq.s32.totalorder %s110, 0
    %s113 = sadd.s32 %s112, 1
    %s114 = scalar_select %p111, %s112, %s113
    %p117 = pneg %p111
    %p118 = scmp.eq.s32.totalorder %s17, 3
    %p119 = por %p117, %p118
    %p120 = scmp.ne.s32.totalorder %s112, %s115
    %p121 = scmp.eq.s32.totalorder %s17, 0
    %p122 = por %p120, %p121
    %p123 = scmp.ne.s32.totalorder %s112, %s115
    %p124 = scmp.eq.s32.totalorder %s22, 3
    %p125 = por %p123, %p124
    %p126 = scmp.ne.s32.totalorder %s115, %s116
    %p127 = scmp.eq.s32.totalorder %s22, 0
    %p128 = por %p126, %p127
    %p129 = scmp.ne.s32.totalorder %s115, %s116
    %p130 = scmp.eq.s32.totalorder %s23, 3
    %p131 = por %p129, %p130
    %p133 = scmp.ne.s32.totalorder %s116, %s132
    %p134 = scmp.eq.s32.totalorder %s23, 0
    %p135 = por %p133, %p134
    %s136 = ssub.s32 %s24, %s36
    %s137 = ssub.s32 %s25, %s32
    %s138 = sor.u32 %s136, %s137
    %p139 = scmp.eq.s32.totalorder %s138, 0
    %s141 = sadd.s32 %s140, 1
    %s142 = scalar_select %p139, %s140, %s141
    %p145 = pneg %p139
    %p146 = scmp.eq.s32.totalorder %s17, 3
    %p147 = por %p145, %p146
    %p148 = scmp.ne.s32.totalorder %s140, %s143
    %p149 = scmp.eq.s32.totalorder %s17, 0
    %p150 = por %p148, %p149
    %p151 = scmp.ne.s32.totalorder %s140, %s143
    %p152 = scmp.eq.s32.totalorder %s22, 3
    %p153 = por %p151, %p152
    %p154 = scmp.ne.s32.totalorder %s143, %s144
    %p155 = scmp.eq.s32.totalorder %s22, 0
    %p156 = por %p154, %p155
    %p157 = scmp.ne.s32.totalorder %s143, %s144
    %p158 = scmp.eq.s32.totalorder %s23, 3
    %p159 = por %p157, %p158
    %p161 = scmp.ne.s32.totalorder %s144, %s160
    %p162 = scmp.eq.s32.totalorder %s23, 0
    %p163 = por %p161, %p162
    %s165 = sadd.s32 %s164, 1
    %p168 = scmp.eq.s32.totalorder %s17, 3
    %p169 = scmp.ne.s32.totalorder %s164, %s166
    %p170 = scmp.eq.s32.totalorder %s17, 0
    %p171 = por %p169, %p170
    %p172 = scmp.ne.s32.totalorder %s164, %s166
    %p173 = scmp.eq.s32.totalorder %s22, 3
    %p174 = por %p172, %p173
    %p175 = scmp.ne.s32.totalorder %s166, %s167
    %p176 = scmp.eq.s32.totalorder %s22, 0
    %p177 = por %p175, %p176
    %p178 = scmp.ne.s32.totalorder %s166, %s167
    %p179 = scmp.eq.s32.totalorder %s23, 3
    %p180 = por %p178, %p179
    %p182 = scmp.ne.s32.totalorder %s167, %s181
    %p183 = scmp.eq.s32.totalorder %s23, 0
    %p184 = por %p182, %p183
    %s186 = sadd.s32 %s185, 1
    %p189 = scmp.eq.s32.totalorder %s17, 3
    %p190 = scmp.ne.s32.totalorder %s185, %s187
    %p191 = scmp.eq.s32.totalorder %s17, 0
    %p192 = por %p190, %p191
    %p193 = scmp.ne.s32.totalorder %s185, %s187
    %p194 = scmp.eq.s32.totalorder %s22, 3
    %p195 = por %p193, %p194
    %p196 = scmp.ne.s32.totalorder %s187, %s188
    %p197 = scmp.eq.s32.totalorder %s22, 0
    %p198 = por %p196, %p197
    %p199 = scmp.ne.s32.totalorder %s187, %s188
    %p200 = scmp.eq.s32.totalorder %s23, 3
    %p201 = por %p199, %p200
    %p203 = scmp.ne.s32.totalorder %s188, %s202
    %p204 = scmp.eq.s32.totalorder %s23, 0
    %p205 = por %p203, %p204
    %s206 = ssub.s32 %s24, %s36
    %p207 = scmp.eq.s32.totalorder %s206, 0
    %s209 = sadd.s32 %s208, 1
    %s210 = scalar_select %p207, %s208, %s209
    %p213 = pneg %p207
    %p214 = scmp.eq.s32.totalorder %s17, 3
    %p215 = por %p213, %p214
    %p216 = scmp.ne.s32.totalorder %s208, %s211
    %p217 = scmp.eq.s32.totalorder %s17, 0
    %p218 = por %p216, %p217
    %p219 = scmp.ne.s32.totalorder %s208, %s211
    %p220 = scmp.eq.s32.totalorder %s22, 3
    %p221 = por %p219, %p220
    %p222 = scmp.ne.s32.totalorder %s211, %s212
    %p223 = scmp.eq.s32.totalorder %s22, 0
    %p224 = por %p222, %p223
    %p225 = scmp.ne.s32.totalorder %s211, %s212
    %p226 = scmp.eq.s32.totalorder %s23, 3
    %p227 = por %p225, %p226
    %p229 = scmp.ne.s32.totalorder %s212, %s228
    %p230 = scmp.eq.s32.totalorder %s23, 0
    %p231 = por %p229, %p230
    %s232 = ssub.s32 %s24, %s36
    %s233 = ssub.s32 %s25, %s32
    %s234 = sor.u32 %s232, %s233
    %p235 = scmp.eq.s32.totalorder %s234, 0
    %s237 = sadd.s32 %s236, 1
    %s238 = scalar_select %p235, %s236, %s237
    %p241 = pneg %p235
    %p242 = scmp.eq.s32.totalorder %s17, 3
    %p243 = por %p241, %p242
    %p244 = scmp.ne.s32.totalorder %s236, %s239
    %p245 = scmp.eq.s32.totalorder %s17, 0
    %p246 = por %p244, %p245
    %p247 = scmp.ne.s32.totalorder %s236, %s239
    %p248 = scmp.eq.s32.totalorder %s22, 3
    %p249 = por %p247, %p248
    %p250 = scmp.ne.s32.totalorder %s239, %s240
    %p251 = scmp.eq.s32.totalorder %s22, 0
    %p252 = por %p250, %p251
    %p253 = scmp.ne.s32.totalorder %s239, %s240
    %p254 = scmp.eq.s32.totalorder %s23, 3
    %p255 = por %p253, %p254
    %p257 = scmp.ne.s32.totalorder %s240, %s256
    %p258 = scmp.eq.s32.totalorder %s23, 0
    %p259 = por %p257, %p258
    %s260 = ssub.s32 %s24, %s36
    %s261 = ssub.s32 %s25, %s32
    %s262 = sor.u32 %s260, %s261
    %p263 = scmp.eq.s32.totalorder %s262, 0
    %s265 = sadd.s32 %s264, 1
    %s266 = scalar_select %p263, %s264, %s265
    %p269 = pneg %p263
    %p270 = scmp.eq.s32.totalorder %s17, 3
    %p271 = por %p269, %p270
    %p272 = scmp.ne.s32.totalorder %s264, %s267
    %p273 = scmp.eq.s32.totalorder %s17, 0
    %p274 = por %p272, %p273
    %p275 = scmp.ne.s32.totalorder %s264, %s267
    %p276 = scmp.eq.s32.totalorder %s22, 3
    %p277 = por %p275, %p276
    %p278 = scmp.ne.s32.totalorder %s267, %s268
    %p279 = scmp.eq.s32.totalorder %s22, 0
    %p280 = por %p278, %p279
    %p281 = scmp.ne.s32.totalorder %s267, %s268
    %p282 = scmp.eq.s32.totalorder %s23, 3
    %p283 = por %p281, %p282
    %p285 = scmp.ne.s32.totalorder %s268, %s284
    %p286 = scmp.eq.s32.totalorder %s23, 0
    %p287 = por %p285, %p286
    %s288 = ssub.s32 %s24, %s36
    %s289 = ssub.s32 %s25, %s32
    %s290 = sor.u32 %s288, %s289
    %p291 = scmp.eq.s32.totalorder %s290, 0
    %s293 = sadd.s32 %s292, 1
    %s294 = scalar_select %p291, %s292, %s293
    %p297 = pneg %p291
    %p298 = scmp.eq.s32.totalorder %s17, 3
    %p299 = por %p297, %p298
    %p300 = scmp.ne.s32.totalorder %s292, %s295
    %p301 = scmp.eq.s32.totalorder %s17, 0
    %p302 = por %p300, %p301
    %p303 = scmp.ne.s32.totalorder %s292, %s295
    %p304 = scmp.eq.s32.totalorder %s22, 3
    %p305 = por %p303, %p304
    %p306 = scmp.ne.s32.totalorder %s295, %s296
    %p307 = scmp.eq.s32.totalorder %s22, 0
    %p308 = por %p306, %p307
    %p309 = scmp.ne.s32.totalorder %s295, %s296
    %p310 = scmp.eq.s32.totalorder %s23, 3
    %p311 = por %p309, %p310
    %p313 = scmp.ne.s32.totalorder %s296, %s312
    %p314 = scmp.eq.s32.totalorder %s23, 0
    %p315 = por %p313, %p314
    %p316 = scmp.le.s32.totalorder 1, %s17
    %p317 = scmp.lt.s32.totalorder %s17, 5
    %p318 = pnand %p316, %p317
    %p319 = pneg %p318
    // Predicated region
    $region9: #{generator_block_forward.6} parent=5 // pred_check
      _
    $region10: #{generator_block_forward.6} parent=5 // pred_check_branch
      %321 = sbr.rel (%p318) target = $region12
    $region11: #{generator_block_forward.6} parent=5 // pred_region
      %s322 = ssub.s32 %s17, 1
      // Predicated region
      $region13: #{generator_block_forward.6} parent=11 // pred_check
        %p323 = pneg %p76
      $region14: #{generator_block_forward.6} parent=11 // pred_check_branch
        %325 = sbr.rel (%p323) target = $region16
      $region15: #{generator_block_forward.6} parent=11 // pred_region
        _
      $region16: #{generator_block_forward.6} parent=11 // pred_fallthru
        _
      // Predicated region
      $region17: #{generator_block_forward.6} parent=11 // pred_check
        %p326 = pneg %p177
      $region18: #{generator_block_forward.6} parent=11 // pred_check_branch
        %328 = sbr.rel (%p326) target = $region20
      $region19: #{generator_block_forward.6} parent=11 // pred_region
        _
      $region20: #{generator_block_forward.6} parent=11 // pred_fallthru
        _
      // Predicated region
      $region21: #{generator_block_forward.6} parent=11 // pred_check
        %p329 = pneg %p198
      $region22: #{generator_block_forward.6} parent=11 // pred_check_branch
        %331 = sbr.rel (%p329) target = $region24
      $region23: #{generator_block_forward.6} parent=11 // pred_region
        _
      $region24: #{generator_block_forward.6} parent=11 // pred_fallthru
        _
    $region12: #{generator_block_forward.6} parent=5 // pred_fallthru
      _
    %p332 = scmp.lt.s32.totalorder %s17, 4
    // Predicated region
    $region25: #{generator_block_forward.6} parent=5 // pred_check
      %p333 = pneg %p332
    $region26: #{generator_block_forward.6} parent=5 // pred_check_branch
      %335 = sbr.rel (%p333) target = $region28
    $region27: #{generator_block_forward.6} parent=5 // pred_region
      // Predicated region
      $region29: #{generator_block_forward.6} parent=27 // pred_check
        %p336 = pneg %p49
      $region30: #{generator_block_forward.6} parent=27 // pred_check_branch
        %338 = sbr.rel (%p336) target = $region32
      $region31: #{generator_block_forward.6} parent=27 // pred_region
        %p339 = scmp.lt.s32.totalorder %s24, 1
        %s340 = scalar_select %p339, %s24, 1
        %s341 = smul.addr %s340, 10
        %s342 = smul.addr %s341, 8
        %s343 = scalar_lea.vmem %s0, %s342
      $region32: #{generator_block_forward.6} parent=27 // pred_fallthru
        _
      // Predicated region
      $region33: #{generator_block_forward.6} parent=27 // pred_check
        %p344 = pneg %p96
      $region34: #{generator_block_forward.6} parent=27 // pred_check_branch
        %346 = sbr.rel (%p344) target = $region36
      $region35: #{generator_block_forward.6} parent=27 // pred_region
        %p347 = scmp.lt.s32.totalorder %s24, 1
        %s348 = scalar_select %p347, %s24, 1
        %s349 = smul.addr %s348, 8
        %s350 = scalar_lea.vmem %s2, %s349
      $region36: #{generator_block_forward.6} parent=27 // pred_fallthru
        _
      // Predicated region
      $region37: #{generator_block_forward.6} parent=27 // pred_check
        %p351 = pneg %p122
      $region38: #{generator_block_forward.6} parent=27 // pred_check_branch
        %353 = sbr.rel (%p351) target = $region40
      $region39: #{generator_block_forward.6} parent=27 // pred_region
        %p354 = scmp.lt.s32.totalorder %s24, 1
        %s355 = scalar_select %p354, %s24, 1
        %s356 = smul.addr %s355, 8
        %s357 = scalar_lea.vmem %s3, %s356
      $region40: #{generator_block_forward.6} parent=27 // pred_fallthru
        _
      // Predicated region
      $region41: #{generator_block_forward.6} parent=27 // pred_check
        %p358 = pneg %p150
      $region42: #{generator_block_forward.6} parent=27 // pred_check_branch
        %360 = sbr.rel (%p358) target = $region44
      $region43: #{generator_block_forward.6} parent=27 // pred_region
        %s361 = smul.u32 4, %s25
        %p362 = scmp.lt.s32.totalorder %s24, 1
        %s363 = scalar_select %p362, %s24, 1
        %p364 = scmp.lt.s32.totalorder %s361, 7
        %s365 = scalar_select %p364, %s361, 7
        %s366 = smul.addr %s363, 8
        %s367 = sadd.s32 %s365, %s366
        %s368 = scalar_lea.vmem %s4, %s367
        %s369 = smul.u32 4, %s25
      $region44: #{generator_block_forward.6} parent=27 // pred_fallthru
        _
      // Predicated region
      $region45: #{generator_block_forward.6} parent=27 // pred_check
        %p370 = pneg %p218
      $region46: #{generator_block_forward.6} parent=27 // pred_check_branch
        %372 = sbr.rel (%p370) target = $region48
      $region47: #{generator_block_forward.6} parent=27 // pred_region
        %p373 = scmp.lt.s32.totalorder %s24, 1
        %s374 = scalar_select %p373, %s24, 1
        %s375 = smul.addr %s374, 8
        %s376 = scalar_lea.vmem %s7, %s375
      $region48: #{generator_block_forward.6} parent=27 // pred_fallthru
        _
      // Predicated region
      $region49: #{generator_block_forward.6} parent=27 // pred_check
        %p377 = pneg %p246
      $region50: #{generator_block_forward.6} parent=27 // pred_check_branch
        %379 = sbr.rel (%p377) target = $region52
      $region51: #{generator_block_forward.6} parent=27 // pred_region
        %s380 = smul.u32 4, %s25
        %p381 = scmp.lt.s32.totalorder %s24, 1
        %s382 = scalar_select %p381, %s24, 1
        %p383 = scmp.lt.s32.totalorder %s380, 7
        %s384 = scalar_select %p383, %s380, 7
        %s385 = smul.addr %s382, 8
        %s386 = sadd.s32 %s384, %s385
        %s387 = scalar_lea.vmem %s8, %s386
        %s388 = smul.u32 4, %s25
      $region52: #{generator_block_forward.6} parent=27 // pred_fallthru
        _
    $region28: #{generator_block_forward.6} parent=5 // pred_fallthru
      _
    %p389 = scmp.le.s32.totalorder 1, %s17
    %p390 = scmp.lt.s32.totalorder %s17, 5
    %p391 = pnand %p389, %p390
    %p392 = pneg %p391
    // Predicated region
    $region53: #{generator_block_forward.6} parent=5 // pred_check
      _
    $region54: #{generator_block_forward.6} parent=5 // pred_check_branch
      %394 = sbr.rel (%p391) target = $region56
    $region55: #{generator_block_forward.6} parent=5 // pred_region
      %s395 = ssub.s32 %s17, 1
      %p396 = scmp.lt.s32.totalorder %s26, 1
      %s397 = scalar_select %p396, %s26, 1
      %s398 = smul.addr %s397, 10
      %s399 = smul.addr %s398, 8
      %s400 = scalar_lea.vmem %s0, %s399
      %p401 = pneg %p55
      %p402 = pneg %p52
      %p403 = pneg %p76
      %p404 = pneg %p73
      %p405 = scmp.lt.s32.totalorder %s26, 1
      %s406 = scalar_select %p405, %s26, 1
      %s407 = smul.addr %s406, 8
      %s408 = scalar_lea.vmem %s2, %s407
      %p409 = pneg %p102
      %p410 = pneg %p99
      %p411 = scmp.lt.s32.totalorder %s26, 1
      %s412 = scalar_select %p411, %s26, 1
      %s413 = smul.addr %s412, 8
      %s414 = scalar_lea.vmem %s3, %s413
      %p415 = pneg %p128
      %p416 = pneg %p125
      %s417 = smul.u32 4, %s27
      %p418 = scmp.lt.s32.totalorder %s26, 1
      %s419 = scalar_select %p418, %s26, 1
      %p420 = scmp.lt.s32.totalorder %s417, 7
      %s421 = scalar_select %p420, %s417, 7
      %s422 = smul.addr %s419, 8
      %s423 = sadd.s32 %s421, %s422
      %s424 = scalar_lea.vmem %s4, %s423
      %p425 = pneg %p156
      %p426 = pneg %p153
      %p427 = pneg %p177
      %p428 = pneg %p174
      %p429 = pneg %p198
      %p430 = pneg %p195
      %p431 = scmp.lt.s32.totalorder %s26, 1
      %s432 = scalar_select %p431, %s26, 1
      %s433 = smul.addr %s432, 8
      %s434 = scalar_lea.vmem %s7, %s433
      %p435 = pneg %p224
      %p436 = pneg %p221
      %s437 = smul.u32 4, %s27
      %p438 = scmp.lt.s32.totalorder %s26, 1
      %s439 = scalar_select %p438, %s26, 1
      %p440 = scmp.lt.s32.totalorder %s437, 7
      %s441 = scalar_select %p440, %s437, 7
      %s442 = smul.addr %s439, 8
      %s443 = sadd.s32 %s441, %s442
      %s444 = scalar_lea.vmem %s8, %s443
      %p445 = pneg %p252
      %p446 = pneg %p249
      %p447 = pneg %p280
      %p448 = pneg %p277
      %s449 = smul.u32 4, %s27
      %p450 = scmp.lt.s32.totalorder %s26, 1
      %s451 = scalar_select %p450, %s26, 1
      %p452 = scmp.lt.s32.totalorder %s449, 7
      %s453 = scalar_select %p452, %s449, 7
      %s454 = smul.addr %s451, 8
      %s455 = sadd.s32 %s453, %s454
      %s456 = smul.addr %s455, 8
      %s457 = scalar_lea.vmem %s9, %s456
      %p458 = pneg %p308
      %p459 = pneg %p305
      %s460 = smul.u32 4, %s27
      %p461 = scmp.lt.s32.totalorder %s26, 1
      %s462 = scalar_select %p461, %s26, 1
      %p463 = scmp.lt.s32.totalorder %s460, 7
      %s464 = scalar_select %p463, %s460, 7
      %s465 = smul.addr %s462, 8
      %s466 = sadd.s32 %s464, %s465
      %s467 = scalar_lea.vmem %s10, %s466
      %p468 = scmp.lt.s32.totalorder %s26, 1
      %s469 = scalar_select %p468, %s26, 1
      %s470 = smul.addr %s469, 10
      %s471 = smul.addr %s470, 8
      %s472 = scalar_lea.vmem %s0, %s471
      %p473 = scmp.lt.s32.totalorder %s26, 1
      %s474 = scalar_select %p473, %s26, 1
      %s475 = smul.addr %s474, 8
      %s476 = scalar_lea.vmem %s2, %s475
      %p477 = scmp.lt.s32.totalorder %s26, 1
      %s478 = scalar_select %p477, %s26, 1
      %s479 = smul.addr %s478, 8
      %s480 = scalar_lea.vmem %s3, %s479
      %s481 = smul.u32 4, %s27
      %p482 = scmp.lt.s32.totalorder %s26, 1
      %s483 = scalar_select %p482, %s26, 1
      %p484 = scmp.lt.s32.totalorder %s481, 7
      %s485 = scalar_select %p484, %s481, 7
      %s486 = smul.addr %s483, 8
      %s487 = sadd.s32 %s485, %s486
      %s488 = scalar_lea.vmem %s4, %s487
      %s489 = smul.u32 4, %s27
      %p490 = scmp.lt.s32.totalorder %s26, 1
      %s491 = scalar_select %p490, %s26, 1
      %s492 = smul.addr %s491, 8
      %s493 = scalar_lea.vmem %s7, %s492
      %s494 = smul.u32 4, %s27
      %p495 = scmp.lt.s32.totalorder %s26, 1
      %s496 = scalar_select %p495, %s26, 1
      %p497 = scmp.lt.s32.totalorder %s494, 7
      %s498 = scalar_select %p497, %s494, 7
      %s499 = smul.addr %s496, 8
      %s500 = sadd.s32 %s498, %s499
      %s501 = scalar_lea.vmem %s8, %s500
      %s502 = smul.u32 4, %s27
      %s503 = smul.u32 4, %s27
      %p504 = scmp.lt.s32.totalorder %s26, 1
      %s505 = scalar_select %p504, %s26, 1
      %p506 = scmp.lt.s32.totalorder %s503, 7
      %s507 = scalar_select %p506, %s503, 7
      %s508 = smul.addr %s505, 8
      %s509 = sadd.s32 %s507, %s508
      %s510 = smul.addr %s509, 8
      %s511 = scalar_lea.vmem %s9, %s510
      %s512 = smul.u32 4, %s27
      %s513 = smul.u32 4, %s27
      %p514 = scmp.lt.s32.totalorder %s26, 1
      %s515 = scalar_select %p514, %s26, 1
      %p516 = scmp.lt.s32.totalorder %s513, 7
      %s517 = scalar_select %p516, %s513, 7
      %s518 = smul.addr %s515, 8
      %s519 = sadd.s32 %s517, %s518
      %s520 = scalar_lea.vmem %s10, %s519
      %s521 = smul.u32 4, %s27
      %s522 = smul.u32 %s27, 512
      %s523 = sshra.s32 %s522, 7
      %s524 = sand.u32 %s522, 127
      %s525 = smul.addr %s523, 8
      %s526 = scalar_lea.vmem %s472, %s525
      %v527 = vld [vmem:[%s526] sm:$0xff]
      %v528 = vld [vmem:[%s526 + $0x8] sm:$0xff]
      %v529 = vld [vmem:[%s526 + $0x10] sm:$0xff]
      %v530 = vld [vmem:[%s526 + $0x18] sm:$0xff]
      %v531 = vld [vmem:[%s526 + $0x20] sm:$0xff]
      %v532 = vld [vmem:[%s526 + $0x28] sm:$0xff]
      %v533 = vld [vmem:[%s476] sm:$0xff]
      %535 = vset.pattern.permute.xlu0 0
      %536 = vperm.xlu0 %535, %v533
      %v537 = vpop.permute.xlu0 %536
      %v539 = vmul.f32 %v527, %v537
      %v540 = vmul.f32 %v528, %v537
      %v541 = vmul.f32 %v529, %v537
      %v542 = vmul.f32 %v530, %v537
      %v543 = vmul.f32 %v531, %v537
      %v544 = vmul.f32 %v532, %v537
      %550 = vrot.lane.b32.xlu0 %v539, 127
      %v551 = vpop.permute.xlu0 %550
      %552 = vrot.lane.b32.xlu0 %v540, 127
      %v553 = vpop.permute.xlu0 %552
      %554 = vrot.lane.b32.xlu0 %v541, 127
      %v555 = vpop.permute.xlu0 %554
      %556 = vrot.lane.b32.xlu0 %v542, 127
      %v557 = vpop.permute.xlu0 %556
      %558 = vrot.lane.b32.xlu0 %v543, 127
      %v559 = vpop.permute.xlu0 %558
      %vm560 = vcmask 1039360
      %v561 = vsel %vm560, %v551, %v553
      %v562 = vsel %vm560, %v553, %v555
      %v563 = vsel %vm560, %v555, %v557
      %v564 = vsel %vm560, %v557, %v559
      %569 = vrot.lane.b32.xlu0 %v539, 126
      %v570 = vpop.permute.xlu0 %569
      %571 = vrot.lane.b32.xlu0 %v540, 126
      %v572 = vpop.permute.xlu0 %571
      %573 = vrot.lane.b32.xlu0 %v541, 126
      %v574 = vpop.permute.xlu0 %573
      %575 = vrot.lane.b32.xlu0 %v542, 126
      %v576 = vpop.permute.xlu0 %575
      %577 = vrot.lane.b32.xlu0 %v543, 126
      %v578 = vpop.permute.xlu0 %577
      %vm579 = vcmask 1031168
      %v580 = vsel %vm579, %v570, %v572
      %v581 = vsel %vm579, %v572, %v574
      %v582 = vsel %vm579, %v574, %v576
      %v583 = vsel %vm579, %v576, %v578
      %588 = vrot.lane.b32.xlu0 %v539, 118
      %v589 = vpop.permute.xlu0 %588
      %590 = vrot.lane.b32.xlu0 %v540, 118
      %v591 = vpop.permute.xlu0 %590
      %592 = vrot.lane.b32.xlu0 %v541, 118
      %v593 = vpop.permute.xlu0 %592
      %594 = vrot.lane.b32.xlu0 %v542, 118
      %v595 = vpop.permute.xlu0 %594
      %596 = vrot.lane.b32.xlu0 %v543, 118
      %v597 = vpop.permute.xlu0 %596
      %vm598 = vcmask 965632
      %v599 = vsel %vm598, %v589, %v591
      %v600 = vsel %vm598, %v591, %v593
      %v601 = vsel %vm598, %v593, %v595
      %v602 = vsel %vm598, %v595, %v597
      %607 = vrot.lane.b32.xlu0 %v539, 117
      %v608 = vpop.permute.xlu0 %607
      %609 = vrot.lane.b32.xlu0 %v540, 117
      %v610 = vpop.permute.xlu0 %609
      %611 = vrot.lane.b32.xlu0 %v541, 117
      %v612 = vpop.permute.xlu0 %611
      %613 = vrot.lane.b32.xlu0 %v542, 117
      %v614 = vpop.permute.xlu0 %613
      %615 = vrot.lane.b32.xlu0 %v543, 117
      %v616 = vpop.permute.xlu0 %615
      %vm617 = vcmask 957440
      %v618 = vsel %vm617, %v608, %v610
      %v619 = vsel %vm617, %v610, %v612
      %v620 = vsel %vm617, %v612, %v614
      %v621 = vsel %vm617, %v614, %v616
      %626 = vrot.lane.b32.xlu0 %v539, 116
      %v627 = vpop.permute.xlu0 %626
      %628 = vrot.lane.b32.xlu0 %v540, 116
      %v629 = vpop.permute.xlu0 %628
      %630 = vrot.lane.b32.xlu0 %v541, 116
      %v631 = vpop.permute.xlu0 %630
      %632 = vrot.lane.b32.xlu0 %v542, 116
      %v633 = vpop.permute.xlu0 %632
      %634 = vrot.lane.b32.xlu0 %v543, 116
      %v635 = vpop.permute.xlu0 %634
      %vm636 = vcmask 949248
      %v637 = vsel %vm636, %v627, %v629
      %v638 = vsel %vm636, %v629, %v631
      %v639 = vsel %vm636, %v631, %v633
      %v640 = vsel %vm636, %v633, %v635
      %645 = vrot.lane.b32.xlu0 %v539, 108
      %v646 = vpop.permute.xlu0 %645
      %647 = vrot.lane.b32.xlu0 %v540, 108
      %v648 = vpop.permute.xlu0 %647
      %649 = vrot.lane.b32.xlu0 %v541, 108
      %v650 = vpop.permute.xlu0 %649
      %651 = vrot.lane.b32.xlu0 %v542, 108
      %v652 = vpop.permute.xlu0 %651
      %653 = vrot.lane.b32.xlu0 %v543, 108
      %v654 = vpop.permute.xlu0 %653
      %vm655 = vcmask 883712
      %v656 = vsel %vm655, %v646, %v648
      %v657 = vsel %vm655, %v648, %v650
      %v658 = vsel %vm655, %v650, %v652
      %v659 = vsel %vm655, %v652, %v654
      %664 = vrot.lane.b32.xlu0 %v539, 107
      %v665 = vpop.permute.xlu0 %664
      %666 = vrot.lane.b32.xlu0 %v540, 107
      %v667 = vpop.permute.xlu0 %666
      %668 = vrot.lane.b32.xlu0 %v541, 107
      %v669 = vpop.permute.xlu0 %668
      %670 = vrot.lane.b32.xlu0 %v542, 107
      %v671 = vpop.permute.xlu0 %670
      %672 = vrot.lane.b32.xlu0 %v543, 107
      %v673 = vpop.permute.xlu0 %672
      %vm674 = vcmask 875520
      %v675 = vsel %vm674, %v665, %v667
      %v676 = vsel %vm674, %v667, %v669
      %v677 = vsel %vm674, %v669, %v671
      %v678 = vsel %vm674, %v671, %v673
      %683 = vrot.lane.b32.xlu0 %v539, 106
      %v684 = vpop.permute.xlu0 %683
      %685 = vrot.lane.b32.xlu0 %v540, 106
      %v686 = vpop.permute.xlu0 %685
      %687 = vrot.lane.b32.xlu0 %v541, 106
      %v688 = vpop.permute.xlu0 %687
      %689 = vrot.lane.b32.xlu0 %v542, 106
      %v690 = vpop.permute.xlu0 %689
      %691 = vrot.lane.b32.xlu0 %v543, 106
      %v692 = vpop.permute.xlu0 %691
      %vm693 = vcmask 867328
      %v694 = vsel %vm693, %v684, %v686
      %v695 = vsel %vm693, %v686, %v688
      %v696 = vsel %vm693, %v688, %v690
      %v697 = vsel %vm693, %v690, %v692
      %702 = vrot.lane.b32.xlu0 %v539, 28
      %v703 = vpop.permute.xlu0 %702
      %704 = vrot.lane.b32.xlu0 %v540, 28
      %v705 = vpop.permute.xlu0 %704
      %706 = vrot.lane.b32.xlu0 %v541, 28
      %v707 = vpop.permute.xlu0 %706
      %708 = vrot.lane.b32.xlu0 %v542, 28
      %v709 = vpop.permute.xlu0 %708
      %710 = vrot.lane.b32.xlu0 %v543, 28
      %v711 = vpop.permute.xlu0 %710
      %vm712 = vcmask 228352
      %v713 = vsel %vm712, %v703, %v705
      %v714 = vsel %vm712, %v705, %v707
      %v715 = vsel %vm712, %v707, %v709
      %v716 = vsel %vm712, %v709, %v711
      %721 = vrot.lane.b32.xlu0 %v539, 27
      %v722 = vpop.permute.xlu0 %721
      %723 = vrot.lane.b32.xlu0 %v540, 27
      %v724 = vpop.permute.xlu0 %723
      %725 = vrot.lane.b32.xlu0 %v541, 27
      %v726 = vpop.permute.xlu0 %725
      %727 = vrot.lane.b32.xlu0 %v542, 27
      %v728 = vpop.permute.xlu0 %727
      %729 = vrot.lane.b32.xlu0 %v543, 27
      %v730 = vpop.permute.xlu0 %729
      %vm731 = vcmask 220160
      %v732 = vsel %vm731, %v722, %v724
      %v733 = vsel %vm731, %v724, %v726
      %v734 = vsel %vm731, %v726, %v728
      %v735 = vsel %vm731, %v728, %v730
      %740 = vrot.lane.b32.xlu0 %v539, 26
      %v741 = vpop.permute.xlu0 %740
      %742 = vrot.lane.b32.xlu0 %v540, 26
      %v743 = vpop.permute.xlu0 %742
      %744 = vrot.lane.b32.xlu0 %v541, 26
      %v745 = vpop.permute.xlu0 %744
      %746 = vrot.lane.b32.xlu0 %v542, 26
      %v747 = vpop.permute.xlu0 %746
      %748 = vrot.lane.b32.xlu0 %v543, 26
      %v749 = vpop.permute.xlu0 %748
      %vm750 = vcmask 211968
      %v751 = vsel %vm750, %v741, %v743
      %v752 = vsel %vm750, %v743, %v745
      %v753 = vsel %vm750, %v745, %v747
      %v754 = vsel %vm750, %v747, %v749
      %759 = vrot.lane.b32.xlu0 %v539, 18
      %v760 = vpop.permute.xlu0 %759
      %761 = vrot.lane.b32.xlu0 %v540, 18
      %v762 = vpop.permute.xlu0 %761
      %763 = vrot.lane.b32.xlu0 %v541, 18
      %v764 = vpop.permute.xlu0 %763
      %765 = vrot.lane.b32.xlu0 %v542, 18
      %v766 = vpop.permute.xlu0 %765
      %767 = vrot.lane.b32.xlu0 %v543, 18
      %v768 = vpop.permute.xlu0 %767
      %vm769 = vcmask 146432
      %v770 = vsel %vm769, %v760, %v762
      %v771 = vsel %vm769, %v762, %v764
      %v772 = vsel %vm769, %v764, %v766
      %v773 = vsel %vm769, %v766, %v768
      %778 = vrot.lane.b32.xlu0 %v539, 17
      %v779 = vpop.permute.xlu0 %778
      %780 = vrot.lane.b32.xlu0 %v540, 17
      %v781 = vpop.permute.xlu0 %780
      %782 = vrot.lane.b32.xlu0 %v541, 17
      %v783 = vpop.permute.xlu0 %782
      %784 = vrot.lane.b32.xlu0 %v542, 17
      %v785 = vpop.permute.xlu0 %784
      %786 = vrot.lane.b32.xlu0 %v543, 17
      %v787 = vpop.permute.xlu0 %786
      %vm788 = vcmask 138240
      %v789 = vsel %vm788, %v779, %v781
      %v790 = vsel %vm788, %v781, %v783
      %v791 = vsel %vm788, %v783, %v785
      %v792 = vsel %vm788, %v785, %v787
      %797 = vrot.lane.b32.xlu0 %v539, 16
      %v798 = vpop.permute.xlu0 %797
      %799 = vrot.lane.b32.xlu0 %v540, 16
      %v800 = vpop.permute.xlu0 %799
      %801 = vrot.lane.b32.xlu0 %v541, 16
      %v802 = vpop.permute.xlu0 %801
      %803 = vrot.lane.b32.xlu0 %v542, 16
      %v804 = vpop.permute.xlu0 %803
      %805 = vrot.lane.b32.xlu0 %v543, 16
      %v806 = vpop.permute.xlu0 %805
      %vm807 = vcmask 130048
      %v808 = vsel %vm807, %v798, %v800
      %v809 = vsel %vm807, %v800, %v802
      %v810 = vsel %vm807, %v802, %v804
      %v811 = vsel %vm807, %v804, %v806
      %816 = vrot.lane.b32.xlu0 %v539, 8
      %v817 = vpop.permute.xlu0 %816
      %818 = vrot.lane.b32.xlu0 %v540, 8
      %v819 = vpop.permute.xlu0 %818
      %820 = vrot.lane.b32.xlu0 %v541, 8
      %v821 = vpop.permute.xlu0 %820
      %822 = vrot.lane.b32.xlu0 %v542, 8
      %v823 = vpop.permute.xlu0 %822
      %824 = vrot.lane.b32.xlu0 %v543, 8
      %v825 = vpop.permute.xlu0 %824
      %vm826 = vcmask 64512
      %v827 = vsel %vm826, %v817, %v819
      %v828 = vsel %vm826, %v819, %v821
      %v829 = vsel %vm826, %v821, %v823
      %v830 = vsel %vm826, %v823, %v825
      %836 = vrot.lane.b32.xlu0 %v540, 49
      %v837 = vpop.permute.xlu0 %836
      %838 = vrot.lane.b32.xlu0 %v541, 49
      %v839 = vpop.permute.xlu0 %838
      %840 = vrot.lane.b32.xlu0 %v542, 49
      %v841 = vpop.permute.xlu0 %840
      %842 = vrot.lane.b32.xlu0 %v543, 49
      %v843 = vpop.permute.xlu0 %842
      %844 = vrot.lane.b32.xlu0 %v544, 49
      %v845 = vpop.permute.xlu0 %844
      %vm846 = vcmask 400384
      %v847 = vsel %vm846, %v837, %v839
      %v848 = vsel %vm846, %v839, %v841
      %v849 = vsel %vm846, %v841, %v843
      %v850 = vsel %vm846, %v843, %v845
      %851 = vrot.lane.b32.xlu0 %v540, 48
      %v852 = vpop.permute.xlu0 %851
      %853 = vrot.lane.b32.xlu0 %v541, 48
      %v854 = vpop.permute.xlu0 %853
      %855 = vrot.lane.b32.xlu0 %v542, 48
      %v856 = vpop.permute.xlu0 %855
      %857 = vrot.lane.b32.xlu0 %v543, 48
      %v858 = vpop.permute.xlu0 %857
      %859 = vrot.lane.b32.xlu0 %v544, 48
      %v860 = vpop.permute.xlu0 %859
      %vm861 = vcmask 392192
      %v862 = vsel %vm861, %v852, %v854
      %v863 = vsel %vm861, %v854, %v856
      %v864 = vsel %vm861, %v856, %v858
      %v865 = vsel %vm861, %v858, %v860
      %866 = vrot.lane.b32.xlu0 %v540, 47
      %v867 = vpop.permute.xlu0 %866
      %868 = vrot.lane.b32.xlu0 %v541, 47
      %v869 = vpop.permute.xlu0 %868
      %870 = vrot.lane.b32.xlu0 %v542, 47
      %v871 = vpop.permute.xlu0 %870
      %872 = vrot.lane.b32.xlu0 %v543, 47
      %v873 = vpop.permute.xlu0 %872
      %874 = vrot.lane.b32.xlu0 %v544, 47
      %v875 = vpop.permute.xlu0 %874
      %vm876 = vcmask 384000
      %v877 = vsel %vm876, %v867, %v869
      %v878 = vsel %vm876, %v869, %v871
      %v879 = vsel %vm876, %v871, %v873
      %v880 = vsel %vm876, %v873, %v875
      %881 = vrot.lane.b32.xlu0 %v540, 39
      %v882 = vpop.permute.xlu0 %881
      %883 = vrot.lane.b32.xlu0 %v541, 39
      %v884 = vpop.permute.xlu0 %883
      %885 = vrot.lane.b32.xlu0 %v542, 39
      %v886 = vpop.permute.xlu0 %885
      %887 = vrot.lane.b32.xlu0 %v543, 39
      %v888 = vpop.permute.xlu0 %887
      %889 = vrot.lane.b32.xlu0 %v544, 39
      %v890 = vpop.permute.xlu0 %889
      %vm891 = vcmask 318464
      %v892 = vsel %vm891, %v882, %v884
      %v893 = vsel %vm891, %v884, %v886
      %v894 = vsel %vm891, %v886, %v888
      %v895 = vsel %vm891, %v888, %v890
      %896 = vrot.lane.b32.xlu0 %v540, 38
      %v897 = vpop.permute.xlu0 %896
      %898 = vrot.lane.b32.xlu0 %v541, 38
      %v899 = vpop.permute.xlu0 %898
      %900 = vrot.lane.b32.xlu0 %v542, 38
      %v901 = vpop.permute.xlu0 %900
      %902 = vrot.lane.b32.xlu0 %v543, 38
      %v903 = vpop.permute.xlu0 %902
      %904 = vrot.lane.b32.xlu0 %v544, 38
      %v905 = vpop.permute.xlu0 %904
      %vm906 = vcmask 310272
      %v907 = vsel %vm906, %v897, %v899
      %v908 = vsel %vm906, %v899, %v901
      %v909 = vsel %vm906, %v901, %v903
      %v910 = vsel %vm906, %v903, %v905
      %911 = vrot.lane.b32.xlu0 %v540, 37
      %v912 = vpop.permute.xlu0 %911
      %913 = vrot.lane.b32.xlu0 %v541, 37
      %v914 = vpop.permute.xlu0 %913
      %915 = vrot.lane.b32.xlu0 %v542, 37
      %v916 = vpop.permute.xlu0 %915
      %917 = vrot.lane.b32.xlu0 %v543, 37
      %v918 = vpop.permute.xlu0 %917
      %919 = vrot.lane.b32.xlu0 %v544, 37
      %v920 = vpop.permute.xlu0 %919
      %vm921 = vcmask 302080
      %v922 = vsel %vm921, %v912, %v914
      %v923 = vsel %vm921, %v914, %v916
      %v924 = vsel %vm921, %v916, %v918
      %v925 = vsel %vm921, %v918, %v920
      %926 = vrot.lane.b32.xlu0 %v540, 29
      %v927 = vpop.permute.xlu0 %926
      %928 = vrot.lane.b32.xlu0 %v541, 29
      %v929 = vpop.permute.xlu0 %928
      %930 = vrot.lane.b32.xlu0 %v542, 29
      %v931 = vpop.permute.xlu0 %930
      %932 = vrot.lane.b32.xlu0 %v543, 29
      %v933 = vpop.permute.xlu0 %932
      %934 = vrot.lane.b32.xlu0 %v544, 29
      %v935 = vpop.permute.xlu0 %934
      %vm936 = vcmask 236544
      %v937 = vsel %vm936, %v927, %v929
      %v938 = vsel %vm936, %v929, %v931
      %v939 = vsel %vm936, %v931, %v933
      %v940 = vsel %vm936, %v933, %v935
      %941 = vrot.lane.b32.xlu0 %v544, 28
      %v942 = vpop.permute.xlu0 %941
      %v943 = vsel %vm712, %v711, %v942
      %944 = vrot.lane.b32.xlu0 %v544, 27
      %v945 = vpop.permute.xlu0 %944
      %v946 = vsel %vm731, %v730, %v945
      %947 = vrot.lane.b32.xlu0 %v539, 7
      %v948 = vpop.permute.xlu0 %947
      %949 = vrot.lane.b32.xlu0 %v540, 7
      %v950 = vpop.permute.xlu0 %949
      %951 = vrot.lane.b32.xlu0 %v541, 7
      %v952 = vpop.permute.xlu0 %951
      %953 = vrot.lane.b32.xlu0 %v542, 7
      %v954 = vpop.permute.xlu0 %953
      %955 = vrot.lane.b32.xlu0 %v543, 7
      %v956 = vpop.permute.xlu0 %955
      %957 = vrot.lane.b32.xlu0 %v561, 7
      %v958 = vpop.permute.xlu0 %957
      %959 = vrot.lane.b32.xlu0 %v562, 7
      %v960 = vpop.permute.xlu0 %959
      %961 = vrot.lane.b32.xlu0 %v563, 7
      %v962 = vpop.permute.xlu0 %961
      %963 = vrot.lane.b32.xlu0 %v564, 7
      %v964 = vpop.permute.xlu0 %963
      %965 = vrot.lane.b32.xlu0 %v559, 7
      %v966 = vpop.permute.xlu0 %965
      %967 = vrot.lane.b32.xlu0 %v837, 7
      %v968 = vpop.permute.xlu0 %967
      %969 = vrot.lane.b32.xlu0 %v847, 7
      %v970 = vpop.permute.xlu0 %969
      %971 = vrot.lane.b32.xlu0 %v848, 7
      %v972 = vpop.permute.xlu0 %971
      %973 = vrot.lane.b32.xlu0 %v849, 7
      %v974 = vpop.permute.xlu0 %973
      %975 = vrot.lane.b32.xlu0 %v850, 7
      %v976 = vpop.permute.xlu0 %975
      %977 = vrot.lane.b32.xlu0 %v852, 7
      %v978 = vpop.permute.xlu0 %977
      %979 = vrot.lane.b32.xlu0 %v862, 7
      %v980 = vpop.permute.xlu0 %979
      %981 = vrot.lane.b32.xlu0 %v863, 7
      %v982 = vpop.permute.xlu0 %981
      %983 = vrot.lane.b32.xlu0 %v864, 7
      %v984 = vpop.permute.xlu0 %983
      %985 = vrot.lane.b32.xlu0 %v865, 7
      %v986 = vpop.permute.xlu0 %985
      %987 = vrot.lane.b32.xlu0 %v867, 7
      %v988 = vpop.permute.xlu0 %987
      %989 = vrot.lane.b32.xlu0 %v877, 7
      %v990 = vpop.permute.xlu0 %989
      %991 = vrot.lane.b32.xlu0 %v878, 7
      %v992 = vpop.permute.xlu0 %991
      %993 = vrot.lane.b32.xlu0 %v879, 7
      %v994 = vpop.permute.xlu0 %993
      %995 = vrot.lane.b32.xlu0 %v880, 7
      %v996 = vpop.permute.xlu0 %995
      %997 = vrot.lane.b32.xlu0 %v882, 7
      %v998 = vpop.permute.xlu0 %997
      %999 = vrot.lane.b32.xlu0 %v892, 7
      %v1000 = vpop.permute.xlu0 %999
      %1001 = vrot.lane.b32.xlu0 %v893, 7
      %v1002 = vpop.permute.xlu0 %1001
      %1003 = vrot.lane.b32.xlu0 %v894, 7
      %v1004 = vpop.permute.xlu0 %1003
      %1005 = vrot.lane.b32.xlu0 %v895, 7
      %v1006 = vpop.permute.xlu0 %1005
      %1007 = vrot.lane.b32.xlu0 %v897, 7
      %v1008 = vpop.permute.xlu0 %1007
      %1009 = vrot.lane.b32.xlu0 %v907, 7
      %v1010 = vpop.permute.xlu0 %1009
      %1011 = vrot.lane.b32.xlu0 %v908, 7
      %v1012 = vpop.permute.xlu0 %1011
      %1013 = vrot.lane.b32.xlu0 %v909, 7
      %v1014 = vpop.permute.xlu0 %1013
      %1015 = vrot.lane.b32.xlu0 %v910, 7
      %v1016 = vpop.permute.xlu0 %1015
      %1017 = vrot.lane.b32.xlu0 %v912, 7
      %v1018 = vpop.permute.xlu0 %1017
      %1019 = vrot.lane.b32.xlu0 %v922, 7
      %v1020 = vpop.permute.xlu0 %1019
      %1021 = vrot.lane.b32.xlu0 %v923, 7
      %v1022 = vpop.permute.xlu0 %1021
      %1023 = vrot.lane.b32.xlu0 %v924, 7
      %v1024 = vpop.permute.xlu0 %1023
      %1025 = vrot.lane.b32.xlu0 %v925, 7
      %v1026 = vpop.permute.xlu0 %1025
      %1027 = vrot.lane.b32.xlu0 %v927, 7
      %v1028 = vpop.permute.xlu0 %1027
      %1029 = vrot.lane.b32.xlu0 %v937, 7
      %v1030 = vpop.permute.xlu0 %1029
      %1031 = vrot.lane.b32.xlu0 %v938, 7
      %v1032 = vpop.permute.xlu0 %1031
      %1033 = vrot.lane.b32.xlu0 %v939, 7
      %v1034 = vpop.permute.xlu0 %1033
      %1035 = vrot.lane.b32.xlu0 %v940, 7
      %v1036 = vpop.permute.xlu0 %1035
      %1037 = vrot.lane.b32.xlu0 %v705, 7
      %v1038 = vpop.permute.xlu0 %1037
      %1039 = vrot.lane.b32.xlu0 %v714, 7
      %v1040 = vpop.permute.xlu0 %1039
      %1041 = vrot.lane.b32.xlu0 %v715, 7
      %v1042 = vpop.permute.xlu0 %1041
      %1043 = vrot.lane.b32.xlu0 %v716, 7
      %v1044 = vpop.permute.xlu0 %1043
      %1045 = vrot.lane.b32.xlu0 %v943, 7
      %v1046 = vpop.permute.xlu0 %1045
      %1047 = vrot.lane.b32.xlu0 %v724, 7
      %v1048 = vpop.permute.xlu0 %1047
      %1049 = vrot.lane.b32.xlu0 %v733, 7
      %v1050 = vpop.permute.xlu0 %1049
      %1051 = vrot.lane.b32.xlu0 %v734, 7
      %v1052 = vpop.permute.xlu0 %1051
      %1053 = vrot.lane.b32.xlu0 %v735, 7
      %v1054 = vpop.permute.xlu0 %1053
      %1055 = vrot.lane.b32.xlu0 %v946, 7
      %v1056 = vpop.permute.xlu0 %1055
      %vm1057 = vcmask 56320
      %v1058 = vsel %vm1057, %v948, %v950
      %v1059 = vsel %vm1057, %v950, %v952
      %v1060 = vsel %vm1057, %v952, %v954
      %v1061 = vsel %vm1057, %v954, %v956
      %v1062 = vsel %vm1057, %v958, %v960
      %v1063 = vsel %vm1057, %v960, %v962
      %v1064 = vsel %vm1057, %v962, %v964
      %v1065 = vsel %vm1057, %v964, %v966
      %v1066 = vsel %vm1057, %v968, %v970
      %v1067 = vsel %vm1057, %v970, %v972
      %v1068 = vsel %vm1057, %v972, %v974
      %v1069 = vsel %vm1057, %v974, %v976
      %v1070 = vsel %vm1057, %v978, %v980
      %v1071 = vsel %vm1057, %v980, %v982
      %v1072 = vsel %vm1057, %v982, %v984
      %v1073 = vsel %vm1057, %v984, %v986
      %v1074 = vsel %vm1057, %v988, %v990
      %v1075 = vsel %vm1057, %v990, %v992
      %v1076 = vsel %vm1057, %v992, %v994
      %v1077 = vsel %vm1057, %v994, %v996
      %v1078 = vsel %vm1057, %v998, %v1000
      %v1079 = vsel %vm1057, %v1000, %v1002
      %v1080 = vsel %vm1057, %v1002, %v1004
      %v1081 = vsel %vm1057, %v1004, %v1006
      %v1082 = vsel %vm1057, %v1008, %v1010
      %v1083 = vsel %vm1057, %v1010, %v1012
      %v1084 = vsel %vm1057, %v1012, %v1014
      %v1085 = vsel %vm1057, %v1014, %v1016
      %v1086 = vsel %vm1057, %v1018, %v1020
      %v1087 = vsel %vm1057, %v1020, %v1022
      %v1088 = vsel %vm1057, %v1022, %v1024
      %v1089 = vsel %vm1057, %v1024, %v1026
      %v1090 = vsel %vm1057, %v1028, %v1030
      %v1091 = vsel %vm1057, %v1030, %v1032
      %v1092 = vsel %vm1057, %v1032, %v1034
      %v1093 = vsel %vm1057, %v1034, %v1036
      %v1094 = vsel %vm1057, %v1038, %v1040
      %v1095 = vsel %vm1057, %v1040, %v1042
      %v1096 = vsel %vm1057, %v1042, %v1044
      %v1097 = vsel %vm1057, %v1044, %v1046
      %v1098 = vsel %vm1057, %v1048, %v1050
      %v1099 = vsel %vm1057, %v1050, %v1052
      %v1100 = vsel %vm1057, %v1052, %v1054
      %v1101 = vsel %vm1057, %v1054, %v1056
      %v1146 = vld [vmem:[%s1] sm:$0xff]
      %v1147 = vld [vmem:[%s1 + $0x8] sm:$0xff]
      %vm1148 = vcmask 719872
      %v1150 = vsel %vm1148, %v1147, 0
      %1152 = vmatprep.subr.mxu0 %v540
      %1153 = vmatpush1.msra.mxu0 %v539
      %1154 = vmatprep.subr.mxu0 %v562
      %1155 = vmatpush1.msra.mxu0 %v561
      %1156 = vmatprep.subr.mxu0 %v581
      %1157 = vmatpush1.msra.mxu0 %v580
      %1158 = vmatprep.subr.mxu0 %v600
      %1159 = vmatpush1.msra.mxu0 %v599
      %1160 = vmatprep.subr.mxu0 %v619
      %1161 = vmatpush1.msra.mxu0 %v618
      %1162 = vmatprep.subr.mxu0 %v638
      %1163 = vmatpush1.msra.mxu0 %v637
      %1164 = vmatprep.subr.mxu0 %v657
      %1165 = vmatpush1.msra.mxu0 %v656
      %1166 = vmatprep.subr.mxu0 %v676
      %1167 = vmatpush1.msra.mxu0 %v675
      %1168 = vmatprep.subr.mxu0 %v695
      %1169 = vmatpush1.msra.mxu0 %v694
      %1170 = vmatprep.subr.mxu0 %v714
      %1171 = vmatpush1.msra.mxu0 %v713
      %1172 = vmatprep.subr.mxu0 %v733
      %1173 = vmatpush1.msra.mxu0 %v732
      %1174 = vmatprep.subr.mxu0 %v752
      %1175 = vmatpush1.msra.mxu0 %v751
      %1176 = vmatprep.subr.mxu0 %v771
      %1177 = vmatpush1.msra.mxu0 %v770
      %1178 = vmatprep.subr.mxu0 %v790
      %1179 = vmatpush1.msra.mxu0 %v789
      %1180 = vmatprep.subr.mxu0 %v809
      %1181 = vmatpush1.msra.mxu0 %v808
      %1182 = vmatprep.subr.mxu0 %v828
      %1183 = vmatpush1.msra.mxu0 %v827
      %1184 = vmatprep.subr.mxu0 %v1059
      %1185 = vmatpush1.msra.mxu0 %v1058
      %1186 = vmatprep.subr.mxu0 %v1063
      %1187 = vmatpush1.msra.mxu0 %v1062
      %1188 = vmatprep.subr.mxu0 %v1067
      %1189 = vmatpush1.msra.mxu0 %v1066
      %1190 = vmatprep.subr.mxu0 %v1071
      %1191 = vmatpush1.msra.mxu0 %v1070
      %1192 = vmatprep.subr.mxu0 %v1075
      %1193 = vmatpush1.msra.mxu0 %v1074
      %1194 = vmatprep.subr.mxu0 %v1079
      %1195 = vmatpush1.msra.mxu0 %v1078
      %1196 = vmatprep.subr.mxu0 %v1083
      %1197 = vmatpush1.msra.mxu0 %v1082
      %1198 = vmatprep.subr.mxu0 %v1087
      %1199 = vmatpush1.msra.mxu0 %v1086
      %1200 = vmatprep.subr.mxu0 %v1091
      %1201 = vmatpush1.msra.mxu0 %v1090
      %1202 = vmatprep.subr.mxu0 %v1095
      %1203 = vmatpush1.msra.mxu0 %v1094
      %1204 = vmatprep.subr.mxu0 %v1099
      %1205 = vmatpush1.msra.mxu0 %v1098
      %1206 = vmatprep.subr.mxu0 0.0
      %1207 = vmatpush1.msra.mxu0 0.0
      %1208 = vmatprep.subr.mxu0 0.0
      %1209 = vmatpush1.msra.mxu0 0.0
      %1210 = vmatprep.subr.mxu0 0.0
      %1211 = vmatpush1.msra.mxu0 0.0
      %1212 = vmatprep.subr.mxu0 0.0
      %1213 = vmatpush1.msra.mxu0 0.0
      %1214 = vmatprep.subr.mxu0 0.0
      %1215 = vmatpush1.msra.mxu0 0.0
      %1216 = vmatprep.mubr.f32.mxu0 %v1150
      %1217 = vmatmul.mubr.f32.gmra.mrb[0].mxu0 %v1146
      %v1218 = vpop.f32.mrb[0].mxu0
      %v1219 = vadd.f32 0.0, %v1218
      %v1220 = vpop.f32.mrb[0].mxu0
      %v1221 = vadd.f32 0.0, %v1220
      %1222 = vdwg.mxu0
      %1223 = vmatprep.subr.mxu0 %v542
      %1224 = vmatpush1.msra.mxu0 %v541
      %1225 = vmatprep.subr.mxu0 %v564
      %1226 = vmatpush1.msra.mxu0 %v563
      %1227 = vmatprep.subr.mxu0 %v583
      %1228 = vmatpush1.msra.mxu0 %v582
      %1229 = vmatprep.subr.mxu0 %v602
      %1230 = vmatpush1.msra.mxu0 %v601
      %1231 = vmatprep.subr.mxu0 %v621
      %1232 = vmatpush1.msra.mxu0 %v620
      %1233 = vmatprep.subr.mxu0 %v640
      %1234 = vmatpush1.msra.mxu0 %v639
      %1235 = vmatprep.subr.mxu0 %v659
      %1236 = vmatpush1.msra.mxu0 %v658
      %1237 = vmatprep.subr.mxu0 %v678
      %1238 = vmatpush1.msra.mxu0 %v677
      %1239 = vmatprep.subr.mxu0 %v697
      %1240 = vmatpush1.msra.mxu0 %v696
      %1241 = vmatprep.subr.mxu0 %v716
      %1242 = vmatpush1.msra.mxu0 %v715
      %1243 = vmatprep.subr.mxu0 %v735
      %1244 = vmatpush1.msra.mxu0 %v734
      %1245 = vmatprep.subr.mxu0 %v754
      %1246 = vmatpush1.msra.mxu0 %v753
      %1247 = vmatprep.subr.mxu0 %v773
      %1248 = vmatpush1.msra.mxu0 %v772
      %1249 = vmatprep.subr.mxu0 %v792
      %1250 = vmatpush1.msra.mxu0 %v791
      %1251 = vmatprep.subr.mxu0 %v811
      %1252 = vmatpush1.msra.mxu0 %v810
      %1253 = vmatprep.subr.mxu0 %v830
      %1254 = vmatpush1.msra.mxu0 %v829
      %1255 = vmatprep.subr.mxu0 %v1061
      %1256 = vmatpush1.msra.mxu0 %v1060
      %1257 = vmatprep.subr.mxu0 %v1065
      %1258 = vmatpush1.msra.mxu0 %v1064
      %1259 = vmatprep.subr.mxu0 %v1069
      %1260 = vmatpush1.msra.mxu0 %v1068
      %1261 = vmatprep.subr.mxu0 %v1073
      %1262 = vmatpush1.msra.mxu0 %v1072
      %1263 = vmatprep.subr.mxu0 %v1077
      %1264 = vmatpush1.msra.mxu0 %v1076
      %1265 = vmatprep.subr.mxu0 %v1081
      %1266 = vmatpush1.msra.mxu0 %v1080
      %1267 = vmatprep.subr.mxu0 %v1085
      %1268 = vmatpush1.msra.mxu0 %v1084
      %1269 = vmatprep.subr.mxu0 %v1089
      %1270 = vmatpush1.msra.mxu0 %v1088
      %1271 = vmatprep.subr.mxu0 %v1093
      %1272 = vmatpush1.msra.mxu0 %v1092
      %1273 = vmatprep.subr.mxu0 %v1097
      %1274 = vmatpush1.msra.mxu0 %v1096
      %1275 = vmatprep.subr.mxu0 %v1101
      %1276 = vmatpush1.msra.mxu0 %v1100
      %1277 = vmatprep.subr.mxu0 0.0
      %1278 = vmatpush1.msra.mxu0 0.0
      %1279 = vmatprep.subr.mxu0 0.0
      %1280 = vmatpush1.msra.mxu0 0.0
      %1281 = vmatprep.subr.mxu0 0.0
      %1282 = vmatpush1.msra.mxu0 0.0
      %1283 = vmatprep.subr.mxu0 0.0
      %1284 = vmatpush1.msra.mxu0 0.0
      %1285 = vmatprep.subr.mxu0 0.0
      %1286 = vmatpush1.msra.mxu0 0.0
      %1287 = vmatprep.mubr.f32.mxu0 %v1150
      %1288 = vmatmul.mubr.f32.gmra.mrb[0].mxu0 %v1146
      %v1289 = vpop.f32.mrb[0].mxu0
      %v1290 = vadd.f32 0.0, %v1289
      %v1291 = vpop.f32.mrb[0].mxu0
      %v1292 = vadd.f32 0.0, %v1291
      %1293 = vdwg.mxu0
      %v1294 = vld [vmem:[%s480] sm:$0xff]
      %1296 = vset.pattern.permute.xlu0 0
      %1297 = vperm.xlu0 %1296, %v1294
      %v1298 = vpop.permute.xlu0 %1297
      %v1300 = vmul.f32 %v1219, %v1298
      %v1301 = vmul.f32 %v1221, %v1298
      %v1302 = vmul.f32 %v1290, %v1298
      %v1303 = vmul.f32 %v1292, %v1298
      %v1304 = vld [vmem:[%s488] sm:$0xf]
      %v1305 = vld [vmem:[%s5] sm:$0xff]
      %v1307 = vlaneseq
      %v1308 = vshrl.u32 %v1307, 7
      %v1309 = vsub.s32 0, %v1308
      %v1310 = vrot.slane %v1304, %v1309
      %v1311 = vlaneseq
      %v1312 = vshrl.u32 %v1311, 7
      %v1313 = vsub.s32 1, %v1312
      %v1314 = vrot.slane %v1304, %v1313
      %v1315 = vlaneseq
      %v1316 = vshrl.u32 %v1315, 7
      %v1317 = vsub.s32 2, %v1316
      %v1318 = vrot.slane %v1304, %v1317
      %v1319 = vlaneseq
      %v1320 = vshrl.u32 %v1319, 7
      %v1321 = vsub.s32 3, %v1320
      %v1322 = vrot.slane %v1304, %v1321
      %1328 = vset.pattern.permute.xlu0 0
      %1329 = vperm.xlu0 %1328, %v1305
      %v1330 = vpop.permute.xlu0 %1329
      %v1332 = vmul.f32 %v1310, %v1330
      %v1333 = vmul.f32 %v1314, %v1330
      %v1334 = vmul.f32 %v1318, %v1330
      %v1335 = vmul.f32 %v1322, %v1330
      %v1336 = vadd.f32 %v1300, %v1332
      %v1337 = vadd.f32 %v1301, %v1333
      %v1338 = vadd.f32 %v1302, %v1334
      %v1339 = vadd.f32 %v1303, %v1335
      %v1340 = vld [vmem:[%s6] sm:$0xff]
      %1342 = vset.pattern.permute.xlu0 0
      %1343 = vperm.xlu0 %1342, %v1340
      %v1344 = vpop.permute.xlu0 %1343
      %v1346 = vadd.f32 %v1336, %v1344
      %v1347 = vadd.f32 %v1337, %v1344
      %v1348 = vadd.f32 %v1338, %v1344
      %v1349 = vadd.f32 %v1339, %v1344
      %vm1350 = vcmp.gt.f32.partialorder %v1346, 0.0
      %vm1351 = vcmp.gt.f32.partialorder %v1347, 0.0
      %vm1352 = vcmp.gt.f32.partialorder %v1348, 0.0
      %vm1353 = vcmp.gt.f32.partialorder %v1349, 0.0
      %v1354 = vmul.f32 %v1346, 0.2
      %v1355 = vmul.f32 %v1347, 0.2
      %v1356 = vmul.f32 %v1348, 0.2
      %v1357 = vmul.f32 %v1349, 0.2
      %v1358 = vsel %vm1350, %v1346, %v1354
      %v1359 = vsel %vm1351, %v1347, %v1355
      %v1360 = vsel %vm1352, %v1348, %v1356
      %v1361 = vsel %vm1353, %v1349, %v1357
      %1362 = vst [vmem:[%s511] sm:$0xff] %v1358
      %1363 = vst [vmem:[%s511 + $0x8] sm:$0xff] %v1359
      %1364 = vst [vmem:[%s511 + $0x10] sm:$0xff] %v1360
      %1365 = vst [vmem:[%s511 + $0x18] sm:$0xff] %v1361
      %v1366 = vld [vmem:[%s493] sm:$0xff]
      %1368 = vset.pattern.permute.xlu0 0
      %1369 = vperm.xlu0 %1368, %v1366
      %v1370 = vpop.permute.xlu0 %1369
      %v1372 = vmul.f32 %v1358, %v1370
      %v1373 = vmul.f32 %v1359, %v1370
      %v1374 = vmul.f32 %v1360, %v1370
      %v1375 = vmul.f32 %v1361, %v1370
      %v1376 = vrot.slane %v1372, 4
      %v1377 = vadd.f32 %v1372, %v1376
      %v1378 = vrot.slane %v1377, 2
      %v1379 = vadd.f32 %v1377, %v1378
      %v1380 = vrot.slane %v1379, 1
      %v1381 = vadd.f32 %v1379, %v1380
      %v1382 = vrot.slane %v1373, 4
      %v1383 = vadd.f32 %v1373, %v1382
      %v1384 = vrot.slane %v1383, 2
      %v1385 = vadd.f32 %v1383, %v1384
      %v1386 = vrot.slane %v1385, 1
      %v1387 = vadd.f32 %v1385, %v1386
      %v1388 = vrot.slane %v1374, 4
      %v1389 = vadd.f32 %v1374, %v1388
      %v1390 = vrot.slane %v1389, 2
      %v1391 = vadd.f32 %v1389, %v1390
      %v1392 = vrot.slane %v1391, 1
      %v1393 = vadd.f32 %v1391, %v1392
      %v1394 = vrot.slane %v1375, 4
      %v1395 = vadd.f32 %v1375, %v1394
      %v1396 = vrot.slane %v1395, 2
      %v1397 = vadd.f32 %v1395, %v1396
      %v1398 = vrot.slane %v1397, 1
      %v1399 = vadd.f32 %v1397, %v1398
      %v1400 = vld [vmem:[%s501] sm:$0xf]
      %v1402 = vlaneseq
      %v1403 = vshrl.u32 %v1402, 7
      %v1404 = vsub.s32 0, %v1403
      %v1405 = vrot.slane %v1400, %v1404
      %v1406 = vlaneseq
      %v1407 = vshrl.u32 %v1406, 7
      %v1408 = vsub.s32 1, %v1407
      %v1409 = vrot.slane %v1400, %v1408
      %v1410 = vlaneseq
      %v1411 = vshrl.u32 %v1410, 7
      %v1412 = vsub.s32 2, %v1411
      %v1413 = vrot.slane %v1400, %v1412
      %v1414 = vlaneseq
      %v1415 = vshrl.u32 %v1414, 7
      %v1416 = vsub.s32 3, %v1415
      %v1417 = vrot.slane %v1400, %v1416
      %v1422 = vadd.f32 %v1381, %v1405
      %v1423 = vadd.f32 %v1387, %v1409
      %v1424 = vadd.f32 %v1393, %v1413
      %v1425 = vadd.f32 %v1399, %v1417
      %v1430 = vcombine.low %v1422, %v1423
      %v1431 = vcombine.low %v1424, %v1425
      %v1433 = vunpack.c.l.s4 1966171168
      %v1434 = vunpack.c.0.s8 %v1433
      %v1435 = vlaneseq
      %v1436 = vshrl.u32 %v1435, 7
      %v1437 = vsub.s32 %v1434, %v1436
      %v1438 = vrot.slane %v1430, %v1437
      %v1440 = vunpack.c.l.s4 1966171168
      %v1441 = vunpack.c.0.s8 %v1440
      %v1442 = vlaneseq
      %v1443 = vshrl.u32 %v1442, 7
      %v1444 = vsub.s32 %v1441, %v1443
      %v1445 = vrot.slane %v1431, %v1444
      %v1446 = vcombine.low %v1438, %v1445
      %v1448 = vunpack.c.l.s4 1966171168
      %v1449 = vunpack.c.0.s8 %v1448
      %v1450 = vlaneseq
      %v1451 = vshrl.u32 %v1450, 7
      %v1452 = vsub.s32 %v1449, %v1451
      %v1453 = vrot.slane %v1446, %v1452
      %v1455 = vlaneseq
      %vm1456 = vcmp.ge.s32.totalorder %v1455, 0
      %vm1457 = vcmp.lt.s32.totalorder %v1455, 512
      %vm1458 = vmand %vm1456, %vm1457
      %1459 = vst.msk [vmem:[%s520] sm:$0xf] %vm1458, %v1453
      %s1460 = smul.u32 4, %s27
      %p1461 = scmp.lt.s32.totalorder %s26, 1
      %s1462 = scalar_select %p1461, %s26, 1
      %p1463 = scmp.lt.s32.totalorder %s1460, 7
      %s1464 = scalar_select %p1463, %s1460, 7
      %s1465 = smul.addr %s1462, 8
      %s1466 = sadd.s32 %s1464, %s1465
      %s1467 = smul.addr %s1466, 8
      %s1468 = scalar_lea.vmem %s9, %s1467
      %s1469 = smul.u32 4, %s27
      %p1470 = scmp.lt.s32.totalorder %s26, 1
      %s1471 = scalar_select %p1470, %s26, 1
      %p1472 = scmp.lt.s32.totalorder %s1469, 7
      %s1473 = scalar_select %p1472, %s1469, 7
      %s1474 = smul.addr %s1471, 8
      %s1475 = sadd.s32 %s1473, %s1474
      %s1476 = scalar_lea.vmem %s10, %s1475
      // Predicated region
      $region57: #{generator_block_forward.6} parent=55 // pred_check
        %p1477 = pneg %p277
      $region58: #{generator_block_forward.6} parent=55 // pred_check_branch
        %1479 = sbr.rel (%p1477) target = $region60
      $region59: #{generator_block_forward.6} parent=55 // pred_region
        %s1480 = smul.u32 4, %s27
      $region60: #{generator_block_forward.6} parent=55 // pred_fallthru
        _
      // Predicated region
      $region61: #{generator_block_forward.6} parent=55 // pred_check
        %p1481 = pneg %p305
      $region62: #{generator_block_forward.6} parent=55 // pred_check_branch
        %1483 = sbr.rel (%p1481) target = $region64
      $region63: #{generator_block_forward.6} parent=55 // pred_region
        %s1484 = smul.u32 4, %s27
      $region64: #{generator_block_forward.6} parent=55 // pred_fallthru
        _
    $region56: #{generator_block_forward.6} parent=5 // pred_fallthru
      _
    %p1485 = scmp.le.s32.totalorder 2, %s17
    // Predicated region
    $region65: #{generator_block_forward.6} parent=5 // pred_check
      %p1486 = pneg %p1485
    $region66: #{generator_block_forward.6} parent=5 // pred_check_branch
      %1488 = sbr.rel (%p1486) target = $region68
    $region67: #{generator_block_forward.6} parent=5 // pred_region
      %s1489 = ssub.s32 %s17, 2
      // Predicated region
      $region69: #{generator_block_forward.6} parent=67 // pred_check
        %p1490 = pneg %p283
      $region70: #{generator_block_forward.6} parent=67 // pred_check_branch
        %1492 = sbr.rel (%p1490) target = $region72
      $region71: #{generator_block_forward.6} parent=67 // pred_region
        %s1493 = smul.u32 4, %s29
        %p1494 = scmp.lt.s32.totalorder %s28, 1
        %s1495 = scalar_select %p1494, %s28, 1
        %p1496 = scmp.lt.s32.totalorder %s1493, 7
        %s1497 = scalar_select %p1496, %s1493, 7
        %s1498 = smul.addr %s1495, 8
        %s1499 = sadd.s32 %s1497, %s1498
        %s1500 = smul.addr %s1499, 8
        %s1501 = scalar_lea.vmem %s9, %s1500
      $region72: #{generator_block_forward.6} parent=67 // pred_fallthru
        _
      // Predicated region
      $region73: #{generator_block_forward.6} parent=67 // pred_check
        %p1502 = pneg %p311
      $region74: #{generator_block_forward.6} parent=67 // pred_check_branch
        %1504 = sbr.rel (%p1502) target = $region76
      $region75: #{generator_block_forward.6} parent=67 // pred_region
        %s1505 = smul.u32 4, %s29
        %p1506 = scmp.lt.s32.totalorder %s28, 1
        %s1507 = scalar_select %p1506, %s28, 1
        %p1508 = scmp.lt.s32.totalorder %s1505, 7
        %s1509 = scalar_select %p1508, %s1505, 7
        %s1510 = smul.addr %s1507, 8
        %s1511 = sadd.s32 %s1509, %s1510
        %s1512 = scalar_lea.vmem %s10, %s1511
      $region76: #{generator_block_forward.6} parent=67 // pred_fallthru
        _
    $region68: #{generator_block_forward.6} parent=5 // pred_fallthru
      _
  $region6: #{generator_block_forward.6} parent=0 // loop_footer
    %s21 = sadd.s32 1, %s17
  $region7: #{generator_block_forward.6} parent=0 // loop_footer_branch
    %16 = sbr.rel target = $region3
  $region8: #{generator_block_forward.6} parent=0 // loop_exit
    _

// kernel: generator_block_forward.7
$region0: #{generator_block_forward.7}
  #allocation0 [shape = 'u32[]', space=smem, size = 0x4, offset = 0x4, fixed_abs, tag = 'smem constant byte address 0x4 - core index']
  #allocation1 [shape = 'u32[144,128]{1,0:T(1,128)}', space=vmem, size = 0x12000, scoped, tag = 'internal scratch']
  %s0 = inlined_call_operand.vmem [shape: f32[2,18,328], index: 0, kind: input, shape index: {}]
  %s1 = inlined_call_operand.vmem [shape: f32[2,16,288], index: 1, kind: output, shape index: {}]
  %s2 = sld [smem:[#allocation0]]
  $region37: #{generator_block_forward.7} parent=0
    _
  %s4 = ssub.s32 1, %s2
  %s5 = scalar_select 0, %s4, %s2
  loop: start=0, step=1, limit=4
  $region2: #{generator_block_forward.7} parent=0 // loop_pre_header
    _
  $region3: #{generator_block_forward.7} parent=0 // loop_header
    %s7 = sphi 0, %s11
    %p8 = scmp.ge.s32.totalorder %s7, 4
    %s17 = sphi 0, %s19
    %s20 = sphi 0, %s17
    %s21 = sphi 0, %s20
    %s37 = sphi 0, %s21
    %s43 = sphi 0, %s45
    %s46 = sphi 0, %s43
    %s47 = sphi 0, %s46
    %s63 = sphi 0, %s47
  $region4: #{generator_block_forward.7} parent=0 // loop_header_branch
    %10 = sbr.rel (%p8) target = $region8
  $region5: #{generator_block_forward.7} parent=0 // loop_body
    %s12 = ssub.s32 %s7, 1
    %s13 = ssub.s32 %s7, 2
    %s14 = sadd.s32 %s7, 1
    %s15 = ssub.s32 %s7, %s14
    %p16 = scmp.eq.s32.totalorder %s15, 0
    %s18 = sadd.s32 %s17, 1
    %s19 = scalar_select %p16, %s17, %s18
    %p22 = pneg %p16
    %p23 = scmp.eq.s32.totalorder %s7, 1
    %p24 = por %p22, %p23
    %p25 = scmp.ne.s32.totalorder %s17, %s20
    %p26 = scmp.eq.s32.totalorder %s7, 0
    %p27 = por %p25, %p26
    %p28 = scmp.ne.s32.totalorder %s17, %s20
    %p29 = scmp.eq.s32.totalorder %s12, 1
    %p30 = por %p28, %p29
    %p31 = scmp.ne.s32.totalorder %s20, %s21
    %p32 = scmp.eq.s32.totalorder %s12, 0
    %p33 = por %p31, %p32
    %p34 = scmp.ne.s32.totalorder %s20, %s21
    %p35 = scmp.eq.s32.totalorder %s13, 1
    %p36 = por %p34, %p35
    %p38 = scmp.ne.s32.totalorder %s21, %s37
    %p39 = scmp.eq.s32.totalorder %s13, 0
    %p40 = por %p38, %p39
    %s41 = ssub.s32 %s7, %s14
    %p42 = scmp.eq.s32.totalorder %s41, 0
    %s44 = sadd.s32 %s43, 1
    %s45 = scalar_select %p42, %s43, %s44
    %p48 = pneg %p42
    %p49 = scmp.eq.s32.totalorder %s7, 1
    %p50 = por %p48, %p49
    %p51 = scmp.ne.s32.totalorder %s43, %s46
    %p52 = scmp.eq.s32.totalorder %s7, 0
    %p53 = por %p51, %p52
    %p54 = scmp.ne.s32.totalorder %s43, %s46
    %p55 = scmp.eq.s32.totalorder %s12, 1
    %p56 = por %p54, %p55
    %p57 = scmp.ne.s32.totalorder %s46, %s47
    %p58 = scmp.eq.s32.totalorder %s12, 0
    %p59 = por %p57, %p58
    %p60 = scmp.ne.s32.totalorder %s46, %s47
    %p61 = scmp.eq.s32.totalorder %s13, 1
    %p62 = por %p60, %p61
    %p64 = scmp.ne.s32.totalorder %s47, %s63
    %p65 = scmp.eq.s32.totalorder %s13, 0
    %p66 = por %p64, %p65
    %p67 = scmp.le.s32.totalorder 1, %s7
    %p68 = scmp.lt.s32.totalorder %s7, 3
    %p69 = pnand %p67, %p68
    %p70 = pneg %p69
    // Predicated region
    $region9: #{generator_block_forward.7} parent=5 // pred_check
      _
    $region10: #{generator_block_forward.7} parent=5 // pred_check_branch
      %72 = sbr.rel (%p69) target = $region12
    $region11: #{generator_block_forward.7} parent=5 // pred_region
      %s73 = ssub.s32 %s7, 1
    $region12: #{generator_block_forward.7} parent=5 // pred_fallthru
      _
    %p74 = scmp.lt.s32.totalorder %s7, 2
    // Predicated region
    $region13: #{generator_block_forward.7} parent=5 // pred_check
      %p75 = pneg %p74
    $region14: #{generator_block_forward.7} parent=5 // pred_check_branch
      %77 = sbr.rel (%p75) target = $region16
    $region15: #{generator_block_forward.7} parent=5 // pred_region
      // Predicated region
      $region17: #{generator_block_forward.7} parent=15 // pred_check
        %p78 = pneg %p27
      $region18: #{generator_block_forward.7} parent=15 // pred_check_branch
        %80 = sbr.rel (%p78) target = $region20
      $region19: #{generator_block_forward.7} parent=15 // pred_region
        %p81 = scmp.lt.s32.totalorder %s7, 1
        %s82 = scalar_select %p81, %s7, 1
        %s83 = smul.addr %s82, 9
        %s84 = smul.addr %s83, 8
        %s85 = scalar_lea.vmem %s0, %s84
      $region20: #{generator_block_forward.7} parent=15 // pred_fallthru
        _
    $region16: #{generator_block_forward.7} parent=5 // pred_fallthru
      _
    %p86 = scmp.le.s32.totalorder 1, %s7
    %p87 = scmp.lt.s32.totalorder %s7, 3
    %p88 = pnand %p86, %p87
    %p89 = pneg %p88
    // Predicated region
    $region21: #{generator_block_forward.7} parent=5 // pred_check
      _
    $region22: #{generator_block_forward.7} parent=5 // pred_check_branch
      %91 = sbr.rel (%p88) target = $region24
    $region23: #{generator_block_forward.7} parent=5 // pred_region
      %s92 = ssub.s32 %s7, 1
      %p93 = scmp.lt.s32.totalorder %s12, 1
      %s94 = scalar_select %p93, %s12, 1
      %s95 = smul.addr %s94, 9
      %s96 = smul.addr %s95, 8
      %s97 = scalar_lea.vmem %s0, %s96
      %p98 = pneg %p33
      %p99 = pneg %p30
      %p100 = pneg %p59
      %p101 = pneg %p56
      %p102 = scmp.lt.s32.totalorder %s12, 1
      %s103 = scalar_select %p102, %s12, 1
      %s104 = smul.addr %s103, 6
      %s105 = smul.addr %s104, 8
      %s106 = scalar_lea.vmem %s1, %s105
      %p107 = scmp.lt.s32.totalorder %s12, 1
      %s108 = scalar_select %p107, %s12, 1
      %s109 = smul.addr %s108, 9
      %s110 = smul.addr %s109, 8
      %s111 = scalar_lea.vmem %s0, %s110
      %p112 = scmp.lt.s32.totalorder %s12, 1
      %s113 = scalar_select %p112, %s12, 1
      %s114 = smul.addr %s113, 6
      %s115 = smul.addr %s114, 8
      %s116 = scalar_lea.vmem %s1, %s115
      %v117 = vld [vmem:[%s111] sm:$0xff]
      %v118 = vld [vmem:[%s111 + $0x8] sm:$0xff]
      %v119 = vld [vmem:[%s111 + $0x10] sm:$0xff]
      %v120 = vld [vmem:[%s111 + $0x18] sm:$0xff]
      %v121 = vld [vmem:[%s111 + $0x20] sm:$0xff]
      %v122 = vld [vmem:[%s111 + $0x28] sm:$0xff]
      %v123 = vld [vmem:[%s111 + $0x30] sm:$0x3]
      %v124 = vld [vmem:[%s111 + $0x38] sm:$0x3]
      %v125 = vld [vmem:[%s111 + $0x40] sm:$0x3]
      %v126 = vmul.f32 %v117, 2.0
      %v127 = vmul.f32 %v118, 2.0
      %v128 = vmul.f32 %v119, 2.0
      %v129 = vmul.f32 %v120, 2.0
      %v130 = vmul.f32 %v121, 2.0
      %v131 = vmul.f32 %v122, 2.0
      %v132 = vmul.f32 %v123, 2.0
      %v133 = vmul.f32 %v124, 2.0
      %v134 = vmul.f32 %v125, 2.0
      %144 = vrot.lane.b32.xlu0 %v126, 127
      %v145 = vpop.permute.xlu0 %144
      %146 = vrot.lane.b32.xlu0 %v127, 127
      %v147 = vpop.permute.xlu0 %146
      %148 = vrot.lane.b32.xlu0 %v128, 127
      %v149 = vpop.permute.xlu0 %148
      %150 = vrot.lane.b32.xlu0 %v129, 127
      %v151 = vpop.permute.xlu0 %150
      %152 = vrot.lane.b32.xlu0 %v130, 127
      %v153 = vpop.permute.xlu0 %152
      %154 = vrot.lane.b32.xlu0 %v131, 127
      %v155 = vpop.permute.xlu0 %154
      %156 = vrot.lane.b32.xlu0 %v132, 127
      %v157 = vpop.permute.xlu0 %156
      %158 = vrot.lane.b32.xlu0 %v133, 127
      %v159 = vpop.permute.xlu0 %158
      %160 = vrot.lane.b32.xlu0 %v134, 127
      %v161 = vpop.permute.xlu0 %160
      %vm162 = vcmask 1039360
      %v163 = vsel %vm162, %v145, %v147
      %v164 = vsel %vm162, %v147, %v149
      %v165 = vsel %vm162, %v151, %v153
      %v166 = vsel %vm162, %v153, %v155
      %v167 = vsel %vm162, %v157, %v159
      %v168 = vsel %vm162, %v159, %v161
      %v178 = vadd.f32 %v117, %v163
      %v179 = vadd.f32 %v118, %v164
      %v180 = vadd.f32 %v119, %v149
      %v181 = vadd.f32 %v120, %v165
      %v182 = vadd.f32 %v121, %v166
      %v183 = vadd.f32 %v122, %v155
      %v184 = vadd.f32 %v123, %v167
      %v185 = vadd.f32 %v124, %v168
      %v186 = vadd.f32 %v125, %v161
      %196 = vrot.lane.b32.xlu0 %v117, 126
      %v197 = vpop.permute.xlu0 %196
      %198 = vrot.lane.b32.xlu0 %v118, 126
      %v199 = vpop.permute.xlu0 %198
      %200 = vrot.lane.b32.xlu0 %v119, 126
      %v201 = vpop.permute.xlu0 %200
      %202 = vrot.lane.b32.xlu0 %v120, 126
      %v203 = vpop.permute.xlu0 %202
      %204 = vrot.lane.b32.xlu0 %v121, 126
      %v205 = vpop.permute.xlu0 %204
      %206 = vrot.lane.b32.xlu0 %v122, 126
      %v207 = vpop.permute.xlu0 %206
      %208 = vrot.lane.b32.xlu0 %v123, 126
      %v209 = vpop.permute.xlu0 %208
      %210 = vrot.lane.b32.xlu0 %v124, 126
      %v211 = vpop.permute.xlu0 %210
      %212 = vrot.lane.b32.xlu0 %v125, 126
      %v213 = vpop.permute.xlu0 %212
      %vm214 = vcmask 1031168
      %v215 = vsel %vm214, %v197, %v199
      %v216 = vsel %vm214, %v199, %v201
      %v217 = vsel %vm214, %v203, %v205
      %v218 = vsel %vm214, %v205, %v207
      %v219 = vsel %vm214, %v209, %v211
      %v220 = vsel %vm214, %v211, %v213
      %v230 = vadd.f32 %v178, %v215
      %v231 = vadd.f32 %v179, %v216
      %v232 = vadd.f32 %v180, %v201
      %v233 = vadd.f32 %v181, %v217
      %v234 = vadd.f32 %v182, %v218
      %v235 = vadd.f32 %v183, %v207
      %v236 = vadd.f32 %v184, %v219
      %v237 = vadd.f32 %v185, %v220
      %v238 = vadd.f32 %v186, %v213
      %v239 = vmul.f32 %v230, 2.0
      %v240 = vmul.f32 %v231, 2.0
      %v241 = vmul.f32 %v232, 2.0
      %v242 = vmul.f32 %v233, 2.0
      %v243 = vmul.f32 %v234, 2.0
      %v244 = vmul.f32 %v235, 2.0
      %v245 = vmul.f32 %v236, 2.0
      %v246 = vmul.f32 %v237, 2.0
      %v247 = vmul.f32 %v238, 2.0
      %257 = vrot.lane.b32.xlu0 %v239, 110
      %v258 = vpop.permute.xlu0 %257
      %259 = vrot.lane.b32.xlu0 %v240, 110
      %v260 = vpop.permute.xlu0 %259
      %261 = vrot.lane.b32.xlu0 %v241, 110
      %v262 = vpop.permute.xlu0 %261
      %263 = vrot.lane.b32.xlu0 %v242, 110
      %v264 = vpop.permute.xlu0 %263
      %265 = vrot.lane.b32.xlu0 %v243, 110
      %v266 = vpop.permute.xlu0 %265
      %267 = vrot.lane.b32.xlu0 %v244, 110
      %v268 = vpop.permute.xlu0 %267
      %269 = vrot.lane.b32.xlu0 %v245, 110
      %v270 = vpop.permute.xlu0 %269
      %271 = vrot.lane.b32.xlu0 %v246, 110
      %v272 = vpop.permute.xlu0 %271
      %273 = vrot.lane.b32.xlu0 %v247, 110
      %v274 = vpop.permute.xlu0 %273
      %vm275 = vcmask 900096
      %v276 = vsel %vm275, %v258, %v260
      %v277 = vsel %vm275, %v260, %v262
      %v278 = vsel %vm275, %v264, %v266
      %v279 = vsel %vm275, %v266, %v268
      %v280 = vsel %vm275, %v270, %v272
      %v281 = vsel %vm275, %v272, %v274
      %v291 = vadd.f32 %v230, %v276
      %v292 = vadd.f32 %v231, %v277
      %v293 = vadd.f32 %v232, %v262
      %v294 = vadd.f32 %v233, %v278
      %v295 = vadd.f32 %v234, %v279
      %v296 = vadd.f32 %v235, %v268
      %v297 = vadd.f32 %v236, %v280
      %v298 = vadd.f32 %v237, %v281
      %v299 = vadd.f32 %v238, %v274
      %309 = vrot.lane.b32.xlu0 %v230, 92
      %v310 = vpop.permute.xlu0 %309
      %311 = vrot.lane.b32.xlu0 %v231, 92
      %v312 = vpop.permute.xlu0 %311
      %313 = vrot.lane.b32.xlu0 %v232, 92
      %v314 = vpop.permute.xlu0 %313
      %315 = vrot.lane.b32.xlu0 %v233, 92
      %v316 = vpop.permute.xlu0 %315
      %317 = vrot.lane.b32.xlu0 %v234, 92
      %v318 = vpop.permute.xlu0 %317
      %319 = vrot.lane.b32.xlu0 %v235, 92
      %v320 = vpop.permute.xlu0 %319
      %321 = vrot.lane.b32.xlu0 %v236, 92
      %v322 = vpop.permute.xlu0 %321
      %323 = vrot.lane.b32.xlu0 %v237, 92
      %v324 = vpop.permute.xlu0 %323
      %325 = vrot.lane.b32.xlu0 %v238, 92
      %v326 = vpop.permute.xlu0 %325
      %vm327 = vcmask 752640
      %v328 = vsel %vm327, %v310, %v312
      %v329 = vsel %vm327, %v312, %v314
      %v330 = vsel %vm327, %v316, %v318
      %v331 = vsel %vm327, %v318, %v320
      %v332 = vsel %vm327, %v322, %v324
      %v333 = vsel %vm327, %v324, %v326
      %v343 = vadd.f32 %v291, %v328
      %v344 = vadd.f32 %v292, %v329
      %v345 = vadd.f32 %v293, %v314
      %v346 = vadd.f32 %v294, %v330
      %v347 = vadd.f32 %v295, %v331
      %v348 = vadd.f32 %v296, %v320
      %v349 = vadd.f32 %v297, %v332
      %v350 = vadd.f32 %v298, %v333
      %v351 = vadd.f32 %v299, %v326
      %v352 = vmul.f32 %v343, 2.0
      %v353 = vmul.f32 %v344, 2.0
      %v354 = vmul.f32 %v345, 2.0
      %v355 = vmul.f32 %v346, 2.0
      %v356 = vmul.f32 %v347, 2.0
      %v357 = vmul.f32 %v348, 2.0
      %v358 = vmul.f32 %v349, 2.0
      %v359 = vmul.f32 %v350, 2.0
      %v360 = vmul.f32 %v351, 2.0
      %vm370 = vcmask 1046528
      %v371 = vrot.slane %v352, 1
      %v372 = vrot.slane %v355, 1
      %v373 = vsel %vm370, %v371, %v372
      %v374 = vrot.slane %v353, 1
      %v375 = vrot.slane %v356, 1
      %v376 = vsel %vm370, %v374, %v375
      %v377 = vrot.slane %v354, 1
      %v378 = vrot.slane %v357, 1
      %v379 = vsel %vm370, %v377, %v378
      %v380 = vrot.slane %v358, 1
      %v381 = vsel %vm370, %v372, %v380
      %v382 = vrot.slane %v359, 1
      %v383 = vsel %vm370, %v375, %v382
      %v384 = vrot.slane %v360, 1
      %v385 = vsel %vm370, %v378, %v384
      %v392 = vadd.f32 %v343, %v373
      %v393 = vadd.f32 %v344, %v376
      %v394 = vadd.f32 %v345, %v379
      %v395 = vadd.f32 %v346, %v381
      %v396 = vadd.f32 %v347, %v383
      %v397 = vadd.f32 %v348, %v385
      %vm407 = vcmask 1045504
      %v408 = vrot.slane %v343, 2
      %v409 = vrot.slane %v346, 2
      %v410 = vsel %vm407, %v408, %v409
      %v411 = vrot.slane %v344, 2
      %v412 = vrot.slane %v347, 2
      %v413 = vsel %vm407, %v411, %v412
      %v414 = vrot.slane %v345, 2
      %v415 = vrot.slane %v348, 2
      %v416 = vsel %vm407, %v414, %v415
      %v417 = vrot.slane %v349, 2
      %v418 = vsel %vm407, %v409, %v417
      %v419 = vrot.slane %v350, 2
      %v420 = vsel %vm407, %v412, %v419
      %v421 = vrot.slane %v351, 2
      %v422 = vsel %vm407, %v415, %v421
      %v429 = vadd.f32 %v392, %v410
      %v430 = vadd.f32 %v393, %v413
      %v431 = vadd.f32 %v394, %v416
      %v432 = vadd.f32 %v395, %v418
      %v433 = vadd.f32 %v396, %v420
      %v434 = vadd.f32 %v397, %v422
      %v435 = vmul.f32 %v429, 0.015625
      %v436 = vmul.f32 %v430, 0.015625
      %v437 = vmul.f32 %v431, 0.015625
      %v438 = vmul.f32 %v432, 0.015625
      %v439 = vmul.f32 %v433, 0.015625
      %v440 = vmul.f32 %v434, 0.015625
      %441 = vst [vmem:[%s116] sm:$0xff] %v435
      %442 = vst [vmem:[%s116 + $0x8] sm:$0xff] %v436
      %vm443 = vcmask 261120
      %444 = vst.msk [vmem:[%s116 + $0x10] sm:$0xff] %vm443, %v437
      %445 = vst [vmem:[%s116 + $0x18] sm:$0xff] %v438
      %446 = vst [vmem:[%s116 + $0x20] sm:$0xff] %v439
      %447 = vst.msk [vmem:[%s116 + $0x28] sm:$0xff] %vm443, %v440
      %p448 = scmp.lt.s32.totalorder %s12, 1
      %s449 = scalar_select %p448, %s12, 1
      %s450 = smul.addr %s449, 6
      %s451 = smul.addr %s450, 8
      %s452 = scalar_lea.vmem %s1, %s451
      // Predicated region
      $region25: #{generator_block_forward.7} parent=23 // pred_check
        %p453 = pneg %p56
      $region26: #{generator_block_forward.7} parent=23 // pred_check_branch
        %455 = sbr.rel (%p453) target = $region28
      $region27: #{generator_block_forward.7} parent=23 // pred_region
        _
      $region28: #{generator_block_forward.7} parent=23 // pred_fallthru
        _
    $region24: #{generator_block_forward.7} parent=5 // pred_fallthru
      _
    %p456 = scmp.le.s32.totalorder 2, %s7
    // Predicated region
    $region29: #{generator_block_forward.7} parent=5 // pred_check
      %p457 = pneg %p456
    $region30: #{generator_block_forward.7} parent=5 // pred_check_branch
      %459 = sbr.rel (%p457) target = $region32
    $region31: #{generator_block_forward.7} parent=5 // pred_region
      %s460 = ssub.s32 %s7, 2
      // Predicated region
      $region33: #{generator_block_forward.7} parent=31 // pred_check
        %p461 = pneg %p62
      $region34: #{generator_block_forward.7} parent=31 // pred_check_branch
        %463 = sbr.rel (%p461) target = $region36
      $region35: #{generator_block_forward.7} parent=31 // pred_region
        %p464 = scmp.lt.s32.totalorder %s13, 1
        %s465 = scalar_select %p464, %s13, 1
        %s466 = smul.addr %s465, 6
        %s467 = smul.addr %s466, 8
        %s468 = scalar_lea.vmem %s1, %s467
      $region36: #{generator_block_forward.7} parent=31 // pred_fallthru
        _
    $region32: #{generator_block_forward.7} parent=5 // pred_fallthru
      _
  $region6: #{generator_block_forward.7} parent=0 // loop_footer
    %s11 = sadd.s32 1, %s7
  $region7: #{generator_block_forward.7} parent=0 // loop_footer_branch
    %6 = sbr.rel target = $region3
  $region8: #{generator_block_forward.7} parent=0 // loop_exit
    _

</llo_original>
